<compile_context>
chip_gen: v6e
topology: v6e:2x2x1
jax: 0.10.0
libtpu: 0.0.40
codegen_flags: <defaults>
</compile_context>

<pallas_src>
import jax
import jax.numpy as jnp
from jax.experimental import pallas as pl
from jax.experimental.pallas import tpu as pltpu

EPS = 1e-5


def _round_up(x, m):
    return (x + m - 1) // m * m


def _plan_rows(M, bytes_per_row, cap=1024, budget=8 << 20):
    """Row-tile size: multiple of 8, VMEM-budgeted, and (when there are enough
    rows) small enough to expose >= 2 parallel grid steps (dual-TC chips)."""
    tm = max(8, budget // max(bytes_per_row, 1))
    tm = min(tm, cap)
    if M >= 16:
        tm = min(tm, _round_up(-(-M // 2), 8))
    tm = _round_up(min(tm, max(M, 1)), 8)
    grid_m = -(-M // tm)
    return tm, grid_m * tm, grid_m


# --------------------------------------------------------------------------
# Pallas kernels
# --------------------------------------------------------------------------
def matmul_fused(a, b, *, activation=None, compute_stats=False,
                 out_dtype=jnp.bfloat16):
    """y = act(a @ b) with bf16 operands on the MXU and f32 accumulation.

    If `compute_stats`, also returns per-column sum and sum-of-squares of the
    (pre-activation, f32) product, accumulated from per-tile partials so the
    row grid stays fully 'parallel' (no revisited output blocks).
    """
    M, K = a.shape
    Kb, N = b.shape
    assert K == Kb
    a = a.astype(jnp.bfloat16)
    b = b.astype(jnp.bfloat16)

    # dbl-buffered bf16 A row + bf16 y row + f32 accumulator row
    bytes_per_row = 4 * K + 2 * N + 4 * N
    tm, Mp, grid_m = _plan_rows(M, bytes_per_row)
    if Mp != M:
        a = jnp.pad(a, ((0, Mp - M), (0, 0)))   # zero rows -> zero stats contribution

    def kernel(a_ref, b_ref, *out_refs):
        acc = jnp.dot(a_ref[...], b_ref[...],
                      preferred_element_type=jnp.float32)
        if compute_stats:
            y_ref, sum_ref, sq_ref = out_refs
            s = jnp.sum(acc, axis=0, keepdims=True)          # (1, N) f32
            q = jnp.sum(acc * acc, axis=0, keepdims=True)    # (1, N) f32
            sum_ref[...] = jnp.broadcast_to(s, (8, N))
            sq_ref[...] = jnp.broadcast_to(q, (8, N))
        else:
            (y_ref,) = out_refs
        y = acc
        if activation == "tanh":
            y = jnp.tanh(y)
        y_ref[...] = y.astype(y_ref.dtype)

    y_shape = jax.ShapeDtypeStruct((Mp, N), out_dtype)
    y_spec = pl.BlockSpec((tm, N), lambda i: (i, 0))
    in_specs = [pl.BlockSpec((tm, K), lambda i: (i, 0)),
                pl.BlockSpec((K, N), lambda i: (0, 0))]
    cparams = pltpu.CompilerParams(dimension_semantics=("parallel",))

    if compute_stats:
        st_shape = jax.ShapeDtypeStruct((grid_m * 8, N), jnp.float32)
        st_spec = pl.BlockSpec((8, N), lambda i: (i, 0))
        y, s8, q8 = pl.pallas_call(
            kernel,
            out_shape=(y_shape, st_shape, st_shape),
            grid=(grid_m,),
            in_specs=in_specs,
            out_specs=(y_spec, st_spec, st_spec),
            compiler_params=cparams,
        )(a, b)
        col_sum = jnp.sum(s8.reshape(grid_m, 8, N)[:, 0, :], axis=0)
        col_sq = jnp.sum(q8.reshape(grid_m, 8, N)[:, 0, :], axis=0)
        return y[:M], col_sum, col_sq

    y = pl.pallas_call(
        kernel,
        out_shape=y_shape,
        grid=(grid_m,),
        in_specs=in_specs,
        out_specs=y_spec,
        compiler_params=cparams,
    )(a, b)
    return y[:M]


def scale_shift_relu(x, scale, shift):
    """relu(x * scale + shift) with per-column f32 scale/shift; bf16 in/out."""
    M, C = x.shape
    tm, Mp, grid_m = _plan_rows(M, 8 * C)
    x = x.astype(jnp.bfloat16)
    if Mp != M:
        x = jnp.pad(x, ((0, Mp - M), (0, 0)))
    scale2 = scale.reshape(1, C).astype(jnp.float32)
    shift2 = shift.reshape(1, C).astype(jnp.float32)

    def kernel(x_ref, s_ref, b_ref, o_ref):
        y = x_ref[...].astype(jnp.float32) * s_ref[...] + b_ref[...]
        o_ref[...] = jnp.maximum(y, 0.0).astype(o_ref.dtype)

    y = pl.pallas_call(
        kernel,
        out_shape=jax.ShapeDtypeStruct((Mp, C), jnp.bfloat16),
        grid=(grid_m,),
        in_specs=[pl.BlockSpec((tm, C), lambda i: (i, 0)),
                  pl.BlockSpec((1, C), lambda i: (0, 0)),
                  pl.BlockSpec((1, C), lambda i: (0, 0))],
        out_specs=pl.BlockSpec((tm, C), lambda i: (i, 0)),
        compiler_params=pltpu.CompilerParams(
            dimension_semantics=("parallel",)),
    )(x, scale2, shift2)
    return y[:M]


# --------------------------------------------------------------------------
# ConvTranspose2d(k=4, s=2, p=1) via sub-pixel (phase) decomposition
# --------------------------------------------------------------------------
def conv_transpose_s2_patches(x_nhwc):
    """Build (N*H*W, 9*Cin) tap-stacked patches for a stride-2/k4/pad1 deconv."""
    N, H, W, Cin = x_nhwc.shape
    xp = jnp.pad(x_nhwc, ((0, 0), (1, 1), (1, 1), (0, 0)))
    # TODO(synk): fold these 9 shifted tap windows into the matmul grid
    # (manual DMA of shifted windows from the padded activation) so the
    # (M, 9*Cin) patch matrix never round-trips HBM.
    taps = [xp[:, th:th + H, tw:tw + W, :]
            for th in range(3) for tw in range(3)]
    return jnp.concatenate(taps, axis=-1).reshape(N * H * W, 9 * Cin)


def conv_transpose_s2_weight(w):
    """w: (Cin, Cout, 4, 4) -> B: (9*Cin, 4*Cout) combined-phase weight matrix.

    Output phase (a, b) of pixel (i, j) reads padded input at (i+a+dh, j+b+dw),
    d in {0,1}^2, with kernel index (3-a-2*dh, 3-b-2*dw).
    """
    Cin, Cout = w.shape[0], w.shape[1]
    B = jnp.zeros((9 * Cin, 4 * Cout), w.dtype)
    for a in range(2):
        for bb in range(2):
            p = a * 2 + bb
            for dh in range(2):
                for dw in range(2):
                    t = (a + dh) * 3 + (bb + dw)
                    B = B.at[t * Cin:(t + 1) * Cin,
                             p * Cout:(p + 1) * Cout].set(
                        w[:, :, 3 - a - 2 * dh, 3 - bb - 2 * dw])
    return B


def interleave_phases(y_mat, N, H, W, Cout):
    """(N*H*W, 4*Cout) phase-grouped columns -> (N, 2H, 2W, Cout) NHWC."""
    y = y_mat.reshape(N, H, W, 2, 2, Cout)
    y = jnp.transpose(y, (0, 1, 3, 2, 4, 5))
    return y.reshape(N, 2 * H, 2 * W, Cout)


# --------------------------------------------------------------------------
# Generator layers
# --------------------------------------------------------------------------
def first_layer(z, w, gamma, beta):
    """ConvTranspose2d(k=4, s=1, p=0) on a 1x1 input + BN + ReLU."""
    N, nz = z.shape
    Cout = w.shape[1]
    # columns ordered (kh, kw, co) so the result reshapes directly to NHWC
    wmat = jnp.transpose(w, (0, 2, 3, 1)).reshape(nz, 16 * Cout)
    y, col_sum, col_sq = matmul_fused(z, wmat, compute_stats=True)
    count = N * 16
    ch_sum = col_sum.reshape(16, Cout).sum(axis=0)
    ch_sq = col_sq.reshape(16, Cout).sum(axis=0)
    mean = ch_sum / count
    var = ch_sq / count - mean * mean
    scale = gamma * jax.lax.rsqrt(var + EPS)
    shift = beta - mean * scale
    y = scale_shift_relu(y, jnp.tile(scale, 16), jnp.tile(shift, 16))
    return y.reshape(N, 4, 4, Cout)


def deconv_bn_relu_layer(x_nhwc, w, gamma, beta):
    """ConvTranspose2d(k=4, s=2, p=1) + BN (batch stats) + ReLU."""
    N, H, W, Cin = x_nhwc.shape
    Cout = w.shape[1]
    P = conv_transpose_s2_patches(x_nhwc)
    B = conv_transpose_s2_weight(w)
    y, col_sum, col_sq = matmul_fused(P, B, compute_stats=True)
    count = N * (2 * H) * (2 * W)
    ch_sum = col_sum.reshape(4, Cout).sum(axis=0)
    ch_sq = col_sq.reshape(4, Cout).sum(axis=0)
    mean = ch_sum / count
    var = ch_sq / count - mean * mean
    scale = gamma * jax.lax.rsqrt(var + EPS)
    shift = beta - mean * scale
    y = scale_shift_relu(y, jnp.tile(scale, 4), jnp.tile(shift, 4))
    return interleave_phases(y, N, H, W, Cout)


def last_layer(x_nhwc, w):
    """ConvTranspose2d(k=4, s=2, p=1) with fused Tanh (no BN)."""
    N, H, W, Cin = x_nhwc.shape
    Cout = w.shape[1]
    P = conv_transpose_s2_patches(x_nhwc)
    B = conv_transpose_s2_weight(w)
    # TODO(synk): emit this Cout=3 layer in a transposed (4*Cout, M) lane-dense
    # layout to avoid masked partial stores on the 12-wide output.
    y = matmul_fused(P, B, activation="tanh", out_dtype=jnp.float32)
    return interleave_phases(y, N, H, W, Cout)


@jax.jit
def generator_forward(z_nchw, params):
    N = z_nchw.shape[0]
    z = z_nchw.reshape(N, -1).astype(jnp.float32)        # (N, nz, 1, 1) -> (N, nz)
    x = first_layer(z, params["w1"], params["g1"], params["b1"])
    for name in ("2", "3", "4"):
        x = deconv_bn_relu_layer(x, params["w" + name],
                                 params["g" + name], params["b" + name])
    out_nhwc = last_layer(x, params["w5"])
    return jnp.transpose(out_nhwc, (0, 3, 1, 2))          # back to NCHW (f32)


def init_params(key, nz, n_channels, n_fmaps):
    F = n_fmaps
    chans = [nz, 8 * F, 4 * F, 2 * F, F, n_channels]
    keys = jax.random.split(key, 13)
    params, ki = {}, 0
    for i in range(5):
        cin, cout = chans[i], chans[i + 1]
        params[f"w{i + 1}"] = 0.05 * jax.random.normal(
            keys[ki], (cin, cout, 4, 4), jnp.float32)
        ki += 1
    for i in range(4):
        cout = chans[i + 1]
        params[f"g{i + 1}"] = 1.0 + 0.1 * jax.random.normal(
            keys[ki], (cout,), jnp.float32)
        ki += 1
        params[f"b{i + 1}"] = 0.1 * jax.random.normal(
            keys[ki], (cout,), jnp.float32)
        ki += 1
    return params


# --------------------------------------------------------------------------
# Pure-JAX f32 reference (PyTorch semantics) for correctness checking
# --------------------------------------------------------------------------
def reference_forward(z, params):
    def ct(x, w, s, p):
        w_t = jnp.transpose(w[:, :, ::-1, ::-1], (1, 0, 2, 3))  # (Cout,Cin,k,k)
        return jax.lax.conv_general_dilated(
            x, w_t, window_strides=(1, 1),
            padding=[(3 - p, 3 - p)] * 2, lhs_dilation=(s, s),
            dimension_numbers=("NCHW", "OIHW", "NCHW"),
            precision=jax.lax.Precision.HIGHEST)

    def bn_relu(x, g, b):
        mean = jnp.mean(x, axis=(0, 2, 3), keepdims=True)
        var = jnp.mean((x - mean) ** 2, axis=(0, 2, 3), keepdims=True)
        xn = (x - mean) * jax.lax.rsqrt(var + EPS)
        return jnp.maximum(xn * g.reshape(1, -1, 1, 1) + b.reshape(1, -1, 1, 1), 0.0)

    x = bn_relu(ct(z, params["w1"], 1, 0), params["g1"], params["b1"])
    x = bn_relu(ct(x, params["w2"], 2, 1), params["g2"], params["b2"])
    x = bn_relu(ct(x, params["w3"], 2, 1), params["g3"], params["b3"])
    x = bn_relu(ct(x, params["w4"], 2, 1), params["g4"], params["b4"])
    return jnp.tanh(ct(x, params["w5"], 2, 1))


if __name__ == "__main__":
    nz, n_channels, n_fmaps, batch = 16, 3, 8, 2   # small shapes
    key = jax.random.PRNGKey(0)
    kp, kz = jax.random.split(key)
    params = init_params(kp, nz, n_channels, n_fmaps)
    z = jax.random.normal(kz, (batch, nz, 1, 1), jnp.float32)  # NCHW like PyTorch

    out = generator_forward(z, params)
    out = jax.block_until_ready(out)
    assert out.shape == (batch, n_channels, 64, 64), out.shape
    assert bool(jnp.all(jnp.isfinite(out))), "non-finite output"

    ref = reference_forward(z, params)
    err = float(jnp.max(jnp.abs(out - ref)))
    # bf16 MXU operands / bf16 inter-layer activations vs. the f32 HIGHEST
    # reference: expected small numerics gap, hence a loose-ish bound.
    if err > 1.2e-1:
        raise AssertionError(f"mismatch vs reference, max abs err = {err}")

    print("KERNEL_OK")
</pallas_src>

<mosaic_0001>
module attributes {stable_mosaic.version = 11 : i64} {
  func.func @kernel(%arg0: i32, %arg1: memref<8x16xbf16, #tpu.memory_space<vmem>>, %arg2: memref<16x1024xbf16, #tpu.memory_space<vmem>>, %arg3: memref<8x1024xbf16, #tpu.memory_space<vmem>>, %arg4: memref<8x1024xf32, #tpu.memory_space<vmem>>, %arg5: memref<8x1024xf32, #tpu.memory_space<vmem>>) attributes {dimension_semantics = [#tpu.dimension_semantics<parallel>], iteration_bounds = array<i64: 1>, scalar_prefetch = 0 : i64, scratch_operands = 0 : i64, tpu.core_type = #tpu.core_type<tc>, window_params = [{transform_indices = @transform_0, window_bounds = array<i64: 8, 16>}, {pipeline_mode = #tpu.pipeline_mode<synchronous>, transform_indices = @transform_1, window_bounds = array<i64: 16, 1024>}, {transform_indices = @transform_2, window_bounds = array<i64: 8, 1024>}, {transform_indices = @transform_3, window_bounds = array<i64: 8, 1024>}, {transform_indices = @transform_4, window_bounds = array<i64: 8, 1024>}]} {
    %c0 = arith.constant 0 : index
    %c0_0 = arith.constant 0 : index
    %0 = vector.load %arg1[%c0, %c0_0] : memref<8x16xbf16, #tpu.memory_space<vmem>>, vector<8x16xbf16>
    %c0_1 = arith.constant 0 : index
    %c0_2 = arith.constant 0 : index
    %1 = vector.load %arg2[%c0_1, %c0_2] : memref<16x1024xbf16, #tpu.memory_space<vmem>>, vector<16x1024xbf16>
    %cst = arith.constant dense<0.000000e+00> : vector<8x1024xf32>
    %2 = tpu.matmul %0, %1, %cst {dimension_numbers = #tpu.dot_dimension_numbers<[1], [0], [0], [1], [0, 0, 1, 1], [], []>} : vector<8x16xbf16>, vector<16x1024xbf16>, vector<8x1024xf32> -> vector<8x1024xf32>
    %cst_3 = arith.constant dense<0.000000e+00> : vector<1024xf32>
    %3 = vector.multi_reduction <add>, %2, %cst_3 [0] : vector<8x1024xf32> to vector<1024xf32>
    %4 = vector.shape_cast %3 : vector<1024xf32> to vector<1x1024xf32>
    %5 = arith.mulf %2, %2 : vector<8x1024xf32>
    %cst_4 = arith.constant dense<0.000000e+00> : vector<1024xf32>
    %6 = vector.multi_reduction <add>, %5, %cst_4 [0] : vector<8x1024xf32> to vector<1024xf32>
    %7 = vector.shape_cast %6 : vector<1024xf32> to vector<1x1024xf32>
    %8 = vector.shape_cast %4 : vector<1x1024xf32> to vector<1x1024xf32>
    %9 = vector.broadcast %8 : vector<1x1024xf32> to vector<8x1024xf32>
    %c0_5 = arith.constant 0 : index
    %c0_6 = arith.constant 0 : index
    %10 = vector.load %arg4[%c0_5, %c0_6] : memref<8x1024xf32, #tpu.memory_space<vmem>>, vector<8x1024xf32>
    tpu.vector_store %arg4[%c0_5, %c0_6], %9 {strides = array<i32>} : memref<8x1024xf32, #tpu.memory_space<vmem>>, vector<8x1024xf32>,
    %11 = vector.shape_cast %7 : vector<1x1024xf32> to vector<1x1024xf32>
    %12 = vector.broadcast %11 : vector<1x1024xf32> to vector<8x1024xf32>
    %c0_7 = arith.constant 0 : index
    %c0_8 = arith.constant 0 : index
    %13 = vector.load %arg5[%c0_7, %c0_8] : memref<8x1024xf32, #tpu.memory_space<vmem>>, vector<8x1024xf32>
    tpu.vector_store %arg5[%c0_7, %c0_8], %12 {strides = array<i32>} : memref<8x1024xf32, #tpu.memory_space<vmem>>, vector<8x1024xf32>,
    %14 = arith.truncf %2 : vector<8x1024xf32> to vector<8x1024xbf16>
    %c0_9 = arith.constant 0 : index
    %c0_10 = arith.constant 0 : index
    %15 = vector.load %arg3[%c0_9, %c0_10] : memref<8x1024xbf16, #tpu.memory_space<vmem>>, vector<8x1024xbf16>
    tpu.vector_store %arg3[%c0_9, %c0_10], %14 {strides = array<i32>} : memref<8x1024xbf16, #tpu.memory_space<vmem>>, vector<8x1024xbf16>,
    return
  }
  func.func @transform_0(%arg0: i32) -> (i32, i32) {
    %c0_i32 = arith.constant 0 : i32
    %c0_i32_0 = arith.constant 0 : i32
    return %arg0, %c0_i32 : i32, i32
  }
  func.func @transform_1(%arg0: i32) -> (i32, i32) {
    %c0_i32 = arith.constant 0 : i32
    %c0_i32_0 = arith.constant 0 : i32
    %c0_i32_1 = arith.constant 0 : i32
    return %c0_i32, %c0_i32_0 : i32, i32
  }
  func.func @transform_2(%arg0: i32) -> (i32, i32) {
    %c0_i32 = arith.constant 0 : i32
    %c0_i32_0 = arith.constant 0 : i32
    return %arg0, %c0_i32 : i32, i32
  }
  func.func @transform_3(%arg0: i32) -> (i32, i32) {
    %c0_i32 = arith.constant 0 : i32
    %c0_i32_0 = arith.constant 0 : i32
    return %arg0, %c0_i32 : i32, i32
  }
  func.func @transform_4(%arg0: i32) -> (i32, i32) {
    %c0_i32 = arith.constant 0 : i32
    %c0_i32_0 = arith.constant 0 : i32
    return %arg0, %c0_i32 : i32, i32
  }
}

module attributes {stable_mosaic.version = 11 : i64} {
  func.func @kernel(%arg0: i32, %arg1: memref<8x1024xbf16, #tpu.memory_space<vmem>>, %arg2: memref<1x1024xf32, #tpu.memory_space<vmem>>, %arg3: memref<1x1024xf32, #tpu.memory_space<vmem>>, %arg4: memref<8x1024xbf16, #tpu.memory_space<vmem>>) attributes {dimension_semantics = [#tpu.dimension_semantics<parallel>], iteration_bounds = array<i64: 1>, scalar_prefetch = 0 : i64, scratch_operands = 0 : i64, tpu.core_type = #tpu.core_type<tc>, window_params = [{transform_indices = @transform_0, window_bounds = array<i64: 8, 1024>}, {pipeline_mode = #tpu.pipeline_mode<synchronous>, transform_indices = @transform_1, window_bounds = array<i64: 1, 1024>}, {pipeline_mode = #tpu.pipeline_mode<synchronous>, transform_indices = @transform_2, window_bounds = array<i64: 1, 1024>}, {transform_indices = @transform_3, window_bounds = array<i64: 8, 1024>}]} {
    %c0 = arith.constant 0 : index
    %c0_0 = arith.constant 0 : index
    %0 = vector.load %arg1[%c0, %c0_0] : memref<8x1024xbf16, #tpu.memory_space<vmem>>, vector<8x1024xbf16>
    %1 = arith.extf %0 : vector<8x1024xbf16> to vector<8x1024xf32>
    %c0_1 = arith.constant 0 : index
    %c0_2 = arith.constant 0 : index
    %2 = vector.load %arg2[%c0_1, %c0_2] : memref<1x1024xf32, #tpu.memory_space<vmem>>, vector<1x1024xf32>
    %3 = vector.broadcast %2 : vector<1x1024xf32> to vector<8x1024xf32>
    %4 = arith.mulf %1, %3 : vector<8x1024xf32>
    %c0_3 = arith.constant 0 : index
    %c0_4 = arith.constant 0 : index
    %5 = vector.load %arg3[%c0_3, %c0_4] : memref<1x1024xf32, #tpu.memory_space<vmem>>, vector<1x1024xf32>
    %6 = vector.broadcast %5 : vector<1x1024xf32> to vector<8x1024xf32>
    %7 = arith.addf %4, %6 : vector<8x1024xf32>
    %cst = arith.constant 0.000000e+00 : f32
    %8 = vector.broadcast %cst : f32 to vector<8x1024xf32>
    %9 = arith.maximumf %7, %8 : vector<8x1024xf32>
    %10 = arith.truncf %9 : vector<8x1024xf32> to vector<8x1024xbf16>
    %c0_5 = arith.constant 0 : index
    %c0_6 = arith.constant 0 : index
    %11 = vector.load %arg4[%c0_5, %c0_6] : memref<8x1024xbf16, #tpu.memory_space<vmem>>, vector<8x1024xbf16>
    tpu.vector_store %arg4[%c0_5, %c0_6], %10 {strides = array<i32>} : memref<8x1024xbf16, #tpu.memory_space<vmem>>, vector<8x1024xbf16>,
    return
  }
  func.func @transform_0(%arg0: i32) -> (i32, i32) {
    %c0_i32 = arith.constant 0 : i32
    %c0_i32_0 = arith.constant 0 : i32
    return %arg0, %c0_i32 : i32, i32
  }
  func.func @transform_1(%arg0: i32) -> (i32, i32) {
    %c0_i32 = arith.constant 0 : i32
    %c0_i32_0 = arith.constant 0 : i32
    %c0_i32_1 = arith.constant 0 : i32
    return %c0_i32, %c0_i32_0 : i32, i32
  }
  func.func @transform_2(%arg0: i32) -> (i32, i32) {
    %c0_i32 = arith.constant 0 : i32
    %c0_i32_0 = arith.constant 0 : i32
    %c0_i32_1 = arith.constant 0 : i32
    return %c0_i32, %c0_i32_0 : i32, i32
  }
  func.func @transform_3(%arg0: i32) -> (i32, i32) {
    %c0_i32 = arith.constant 0 : i32
    %c0_i32_0 = arith.constant 0 : i32
    return %arg0, %c0_i32 : i32, i32
  }
}

module attributes {stable_mosaic.version = 11 : i64} {
  func.func @kernel(%arg0: i32, %arg1: memref<16x576xbf16, #tpu.memory_space<vmem>>, %arg2: memref<576x128xbf16, #tpu.memory_space<vmem>>, %arg3: memref<16x128xbf16, #tpu.memory_space<vmem>>, %arg4: memref<8x128xf32, #tpu.memory_space<vmem>>, %arg5: memref<8x128xf32, #tpu.memory_space<vmem>>) attributes {dimension_semantics = [#tpu.dimension_semantics<parallel>], iteration_bounds = array<i64: 2>, scalar_prefetch = 0 : i64, scratch_operands = 0 : i64, tpu.core_type = #tpu.core_type<tc>, window_params = [{transform_indices = @transform_0, window_bounds = array<i64: 16, 576>}, {pipeline_mode = #tpu.pipeline_mode<synchronous>, transform_indices = @transform_1, window_bounds = array<i64: 576, 128>}, {transform_indices = @transform_2, window_bounds = array<i64: 16, 128>}, {transform_indices = @transform_3, window_bounds = array<i64: 8, 128>}, {transform_indices = @transform_4, window_bounds = array<i64: 8, 128>}]} {
    %c0 = arith.constant 0 : index
    %c0_0 = arith.constant 0 : index
    %0 = vector.load %arg1[%c0, %c0_0] : memref<16x576xbf16, #tpu.memory_space<vmem>>, vector<16x576xbf16>
    %c0_1 = arith.constant 0 : index
    %c0_2 = arith.constant 0 : index
    %1 = vector.load %arg2[%c0_1, %c0_2] : memref<576x128xbf16, #tpu.memory_space<vmem>>, vector<576x128xbf16>
    %cst = arith.constant dense<0.000000e+00> : vector<16x128xf32>
    %2 = tpu.matmul %0, %1, %cst {dimension_numbers = #tpu.dot_dimension_numbers<[1], [0], [0], [1], [0, 0, 1, 1], [], []>} : vector<16x576xbf16>, vector<576x128xbf16>, vector<16x128xf32> -> vector<16x128xf32>
    %cst_3 = arith.constant dense<0.000000e+00> : vector<128xf32>
    %3 = vector.multi_reduction <add>, %2, %cst_3 [0] : vector<16x128xf32> to vector<128xf32>
    %4 = vector.shape_cast %3 : vector<128xf32> to vector<1x128xf32>
    %5 = arith.mulf %2, %2 : vector<16x128xf32>
    %cst_4 = arith.constant dense<0.000000e+00> : vector<128xf32>
    %6 = vector.multi_reduction <add>, %5, %cst_4 [0] : vector<16x128xf32> to vector<128xf32>
    %7 = vector.shape_cast %6 : vector<128xf32> to vector<1x128xf32>
    %8 = vector.shape_cast %4 : vector<1x128xf32> to vector<1x128xf32>
    %9 = vector.broadcast %8 : vector<1x128xf32> to vector<8x128xf32>
    %c0_5 = arith.constant 0 : index
    %c0_6 = arith.constant 0 : index
    %10 = vector.load %arg4[%c0_5, %c0_6] : memref<8x128xf32, #tpu.memory_space<vmem>>, vector<8x128xf32>
    tpu.vector_store %arg4[%c0_5, %c0_6], %9 {strides = array<i32>} : memref<8x128xf32, #tpu.memory_space<vmem>>, vector<8x128xf32>,
    %11 = vector.shape_cast %7 : vector<1x128xf32> to vector<1x128xf32>
    %12 = vector.broadcast %11 : vector<1x128xf32> to vector<8x128xf32>
    %c0_7 = arith.constant 0 : index
    %c0_8 = arith.constant 0 : index
    %13 = vector.load %arg5[%c0_7, %c0_8] : memref<8x128xf32, #tpu.memory_space<vmem>>, vector<8x128xf32>
    tpu.vector_store %arg5[%c0_7, %c0_8], %12 {strides = array<i32>} : memref<8x128xf32, #tpu.memory_space<vmem>>, vector<8x128xf32>,
    %14 = arith.truncf %2 : vector<16x128xf32> to vector<16x128xbf16>
    %c0_9 = arith.constant 0 : index
    %c0_10 = arith.constant 0 : index
    %15 = vector.load %arg3[%c0_9, %c0_10] : memref<16x128xbf16, #tpu.memory_space<vmem>>, vector<16x128xbf16>
    tpu.vector_store %arg3[%c0_9, %c0_10], %14 {strides = array<i32>} : memref<16x128xbf16, #tpu.memory_space<vmem>>, vector<16x128xbf16>,
    return
  }
  func.func @transform_0(%arg0: i32) -> (i32, i32) {
    %c0_i32 = arith.constant 0 : i32
    %c0_i32_0 = arith.constant 0 : i32
    return %arg0, %c0_i32 : i32, i32
  }
  func.func @transform_1(%arg0: i32) -> (i32, i32) {
    %c0_i32 = arith.constant 0 : i32
    %c0_i32_0 = arith.constant 0 : i32
    %c0_i32_1 = arith.constant 0 : i32
    return %c0_i32, %c0_i32_0 : i32, i32
  }
  func.func @transform_2(%arg0: i32) -> (i32, i32) {
    %c0_i32 = arith.constant 0 : i32
    %c0_i32_0 = arith.constant 0 : i32
    return %arg0, %c0_i32 : i32, i32
  }
  func.func @transform_3(%arg0: i32) -> (i32, i32) {
    %c0_i32 = arith.constant 0 : i32
    %c0_i32_0 = arith.constant 0 : i32
    return %arg0, %c0_i32 : i32, i32
  }
  func.func @transform_4(%arg0: i32) -> (i32, i32) {
    %c0_i32 = arith.constant 0 : i32
    %c0_i32_0 = arith.constant 0 : i32
    return %arg0, %c0_i32 : i32, i32
  }
}

module attributes {stable_mosaic.version = 11 : i64} {
  func.func @kernel(%arg0: i32, %arg1: memref<16x128xbf16, #tpu.memory_space<vmem>>, %arg2: memref<1x128xf32, #tpu.memory_space<vmem>>, %arg3: memref<1x128xf32, #tpu.memory_space<vmem>>, %arg4: memref<16x128xbf16, #tpu.memory_space<vmem>>) attributes {dimension_semantics = [#tpu.dimension_semantics<parallel>], iteration_bounds = array<i64: 2>, scalar_prefetch = 0 : i64, scratch_operands = 0 : i64, tpu.core_type = #tpu.core_type<tc>, window_params = [{transform_indices = @transform_0, window_bounds = array<i64: 16, 128>}, {pipeline_mode = #tpu.pipeline_mode<synchronous>, transform_indices = @transform_1, window_bounds = array<i64: 1, 128>}, {pipeline_mode = #tpu.pipeline_mode<synchronous>, transform_indices = @transform_2, window_bounds = array<i64: 1, 128>}, {transform_indices = @transform_3, window_bounds = array<i64: 16, 128>}]} {
    %c0 = arith.constant 0 : index
    %c0_0 = arith.constant 0 : index
    %0 = vector.load %arg1[%c0, %c0_0] : memref<16x128xbf16, #tpu.memory_space<vmem>>, vector<16x128xbf16>
    %1 = arith.extf %0 : vector<16x128xbf16> to vector<16x128xf32>
    %c0_1 = arith.constant 0 : index
    %c0_2 = arith.constant 0 : index
    %2 = vector.load %arg2[%c0_1, %c0_2] : memref<1x128xf32, #tpu.memory_space<vmem>>, vector<1x128xf32>
    %3 = vector.broadcast %2 : vector<1x128xf32> to vector<16x128xf32>
    %4 = arith.mulf %1, %3 : vector<16x128xf32>
    %c0_3 = arith.constant 0 : index
    %c0_4 = arith.constant 0 : index
    %5 = vector.load %arg3[%c0_3, %c0_4] : memref<1x128xf32, #tpu.memory_space<vmem>>, vector<1x128xf32>
    %6 = vector.broadcast %5 : vector<1x128xf32> to vector<16x128xf32>
    %7 = arith.addf %4, %6 : vector<16x128xf32>
    %cst = arith.constant 0.000000e+00 : f32
    %8 = vector.broadcast %cst : f32 to vector<16x128xf32>
    %9 = arith.maximumf %7, %8 : vector<16x128xf32>
    %10 = arith.truncf %9 : vector<16x128xf32> to vector<16x128xbf16>
    %c0_5 = arith.constant 0 : index
    %c0_6 = arith.constant 0 : index
    %11 = vector.load %arg4[%c0_5, %c0_6] : memref<16x128xbf16, #tpu.memory_space<vmem>>, vector<16x128xbf16>
    tpu.vector_store %arg4[%c0_5, %c0_6], %10 {strides = array<i32>} : memref<16x128xbf16, #tpu.memory_space<vmem>>, vector<16x128xbf16>,
    return
  }
  func.func @transform_0(%arg0: i32) -> (i32, i32) {
    %c0_i32 = arith.constant 0 : i32
    %c0_i32_0 = arith.constant 0 : i32
    return %arg0, %c0_i32 : i32, i32
  }
  func.func @transform_1(%arg0: i32) -> (i32, i32) {
    %c0_i32 = arith.constant 0 : i32
    %c0_i32_0 = arith.constant 0 : i32
    %c0_i32_1 = arith.constant 0 : i32
    return %c0_i32, %c0_i32_0 : i32, i32
  }
  func.func @transform_2(%arg0: i32) -> (i32, i32) {
    %c0_i32 = arith.constant 0 : i32
    %c0_i32_0 = arith.constant 0 : i32
    %c0_i32_1 = arith.constant 0 : i32
    return %c0_i32, %c0_i32_0 : i32, i32
  }
  func.func @transform_3(%arg0: i32) -> (i32, i32) {
    %c0_i32 = arith.constant 0 : i32
    %c0_i32_0 = arith.constant 0 : i32
    return %arg0, %c0_i32 : i32, i32
  }
}

module attributes {stable_mosaic.version = 11 : i64} {
  func.func @kernel(%arg0: i32, %arg1: memref<64x288xbf16, #tpu.memory_space<vmem>>, %arg2: memref<288x64xbf16, #tpu.memory_space<vmem>>, %arg3: memref<64x64xbf16, #tpu.memory_space<vmem>>, %arg4: memref<8x64xf32, #tpu.memory_space<vmem>>, %arg5: memref<8x64xf32, #tpu.memory_space<vmem>>) attributes {dimension_semantics = [#tpu.dimension_semantics<parallel>], iteration_bounds = array<i64: 2>, scalar_prefetch = 0 : i64, scratch_operands = 0 : i64, tpu.core_type = #tpu.core_type<tc>, window_params = [{transform_indices = @transform_0, window_bounds = array<i64: 64, 288>}, {pipeline_mode = #tpu.pipeline_mode<synchronous>, transform_indices = @transform_1, window_bounds = array<i64: 288, 64>}, {transform_indices = @transform_2, window_bounds = array<i64: 64, 64>}, {transform_indices = @transform_3, window_bounds = array<i64: 8, 64>}, {transform_indices = @transform_4, window_bounds = array<i64: 8, 64>}]} {
    %c0 = arith.constant 0 : index
    %c0_0 = arith.constant 0 : index
    %0 = vector.load %arg1[%c0, %c0_0] : memref<64x288xbf16, #tpu.memory_space<vmem>>, vector<64x288xbf16>
    %c0_1 = arith.constant 0 : index
    %c0_2 = arith.constant 0 : index
    %1 = vector.load %arg2[%c0_1, %c0_2] : memref<288x64xbf16, #tpu.memory_space<vmem>>, vector<288x64xbf16>
    %cst = arith.constant dense<0.000000e+00> : vector<64x64xf32>
    %2 = tpu.matmul %0, %1, %cst {dimension_numbers = #tpu.dot_dimension_numbers<[1], [0], [0], [1], [0, 0, 1, 1], [], []>} : vector<64x288xbf16>, vector<288x64xbf16>, vector<64x64xf32> -> vector<64x64xf32>
    %cst_3 = arith.constant dense<0.000000e+00> : vector<64xf32>
    %3 = vector.multi_reduction <add>, %2, %cst_3 [0] : vector<64x64xf32> to vector<64xf32>
    %4 = vector.shape_cast %3 : vector<64xf32> to vector<1x64xf32>
    %5 = arith.mulf %2, %2 : vector<64x64xf32>
    %cst_4 = arith.constant dense<0.000000e+00> : vector<64xf32>
    %6 = vector.multi_reduction <add>, %5, %cst_4 [0] : vector<64x64xf32> to vector<64xf32>
    %7 = vector.shape_cast %6 : vector<64xf32> to vector<1x64xf32>
    %8 = vector.shape_cast %4 : vector<1x64xf32> to vector<1x64xf32>
    %9 = vector.broadcast %8 : vector<1x64xf32> to vector<8x64xf32>
    %c0_5 = arith.constant 0 : index
    %c0_6 = arith.constant 0 : index
    %10 = vector.load %arg4[%c0_5, %c0_6] : memref<8x64xf32, #tpu.memory_space<vmem>>, vector<8x64xf32>
    tpu.vector_store %arg4[%c0_5, %c0_6], %9 {strides = array<i32>} : memref<8x64xf32, #tpu.memory_space<vmem>>, vector<8x64xf32>,
    %11 = vector.shape_cast %7 : vector<1x64xf32> to vector<1x64xf32>
    %12 = vector.broadcast %11 : vector<1x64xf32> to vector<8x64xf32>
    %c0_7 = arith.constant 0 : index
    %c0_8 = arith.constant 0 : index
    %13 = vector.load %arg5[%c0_7, %c0_8] : memref<8x64xf32, #tpu.memory_space<vmem>>, vector<8x64xf32>
    tpu.vector_store %arg5[%c0_7, %c0_8], %12 {strides = array<i32>} : memref<8x64xf32, #tpu.memory_space<vmem>>, vector<8x64xf32>,
    %14 = arith.truncf %2 : vector<64x64xf32> to vector<64x64xbf16>
    %c0_9 = arith.constant 0 : index
    %c0_10 = arith.constant 0 : index
    %15 = vector.load %arg3[%c0_9, %c0_10] : memref<64x64xbf16, #tpu.memory_space<vmem>>, vector<64x64xbf16>
    tpu.vector_store %arg3[%c0_9, %c0_10], %14 {strides = array<i32>} : memref<64x64xbf16, #tpu.memory_space<vmem>>, vector<64x64xbf16>,
    return
  }
  func.func @transform_0(%arg0: i32) -> (i32, i32) {
    %c0_i32 = arith.constant 0 : i32
    %c0_i32_0 = arith.constant 0 : i32
    return %arg0, %c0_i32 : i32, i32
  }
  func.func @transform_1(%arg0: i32) -> (i32, i32) {
    %c0_i32 = arith.constant 0 : i32
    %c0_i32_0 = arith.constant 0 : i32
    %c0_i32_1 = arith.constant 0 : i32
    return %c0_i32, %c0_i32_0 : i32, i32
  }
  func.func @transform_2(%arg0: i32) -> (i32, i32) {
    %c0_i32 = arith.constant 0 : i32
    %c0_i32_0 = arith.constant 0 : i32
    return %arg0, %c0_i32 : i32, i32
  }
  func.func @transform_3(%arg0: i32) -> (i32, i32) {
    %c0_i32 = arith.constant 0 : i32
    %c0_i32_0 = arith.constant 0 : i32
    return %arg0, %c0_i32 : i32, i32
  }
  func.func @transform_4(%arg0: i32) -> (i32, i32) {
    %c0_i32 = arith.constant 0 : i32
    %c0_i32_0 = arith.constant 0 : i32
    return %arg0, %c0_i32 : i32, i32
  }
}

module attributes {stable_mosaic.version = 11 : i64} {
  func.func @kernel(%arg0: i32, %arg1: memref<64x64xbf16, #tpu.memory_space<vmem>>, %arg2: memref<1x64xf32, #tpu.memory_space<vmem>>, %arg3: memref<1x64xf32, #tpu.memory_space<vmem>>, %arg4: memref<64x64xbf16, #tpu.memory_space<vmem>>) attributes {dimension_semantics = [#tpu.dimension_semantics<parallel>], iteration_bounds = array<i64: 2>, scalar_prefetch = 0 : i64, scratch_operands = 0 : i64, tpu.core_type = #tpu.core_type<tc>, window_params = [{transform_indices = @transform_0, window_bounds = array<i64: 64, 64>}, {pipeline_mode = #tpu.pipeline_mode<synchronous>, transform_indices = @transform_1, window_bounds = array<i64: 1, 64>}, {pipeline_mode = #tpu.pipeline_mode<synchronous>, transform_indices = @transform_2, window_bounds = array<i64: 1, 64>}, {transform_indices = @transform_3, window_bounds = array<i64: 64, 64>}]} {
    %c0 = arith.constant 0 : index
    %c0_0 = arith.constant 0 : index
    %0 = vector.load %arg1[%c0, %c0_0] : memref<64x64xbf16, #tpu.memory_space<vmem>>, vector<64x64xbf16>
    %1 = arith.extf %0 : vector<64x64xbf16> to vector<64x64xf32>
    %c0_1 = arith.constant 0 : index
    %c0_2 = arith.constant 0 : index
    %2 = vector.load %arg2[%c0_1, %c0_2] : memref<1x64xf32, #tpu.memory_space<vmem>>, vector<1x64xf32>
    %3 = vector.broadcast %2 : vector<1x64xf32> to vector<64x64xf32>
    %4 = arith.mulf %1, %3 : vector<64x64xf32>
    %c0_3 = arith.constant 0 : index
    %c0_4 = arith.constant 0 : index
    %5 = vector.load %arg3[%c0_3, %c0_4] : memref<1x64xf32, #tpu.memory_space<vmem>>, vector<1x64xf32>
    %6 = vector.broadcast %5 : vector<1x64xf32> to vector<64x64xf32>
    %7 = arith.addf %4, %6 : vector<64x64xf32>
    %cst = arith.constant 0.000000e+00 : f32
    %8 = vector.broadcast %cst : f32 to vector<64x64xf32>
    %9 = arith.maximumf %7, %8 : vector<64x64xf32>
    %10 = arith.truncf %9 : vector<64x64xf32> to vector<64x64xbf16>
    %c0_5 = arith.constant 0 : index
    %c0_6 = arith.constant 0 : index
    %11 = vector.load %arg4[%c0_5, %c0_6] : memref<64x64xbf16, #tpu.memory_space<vmem>>, vector<64x64xbf16>
    tpu.vector_store %arg4[%c0_5, %c0_6], %10 {strides = array<i32>} : memref<64x64xbf16, #tpu.memory_space<vmem>>, vector<64x64xbf16>,
    return
  }
  func.func @transform_0(%arg0: i32) -> (i32, i32) {
    %c0_i32 = arith.constant 0 : i32
    %c0_i32_0 = arith.constant 0 : i32
    return %arg0, %c0_i32 : i32, i32
  }
  func.func @transform_1(%arg0: i32) -> (i32, i32) {
    %c0_i32 = arith.constant 0 : i32
    %c0_i32_0 = arith.constant 0 : i32
    %c0_i32_1 = arith.constant 0 : i32
    return %c0_i32, %c0_i32_0 : i32, i32
  }
  func.func @transform_2(%arg0: i32) -> (i32, i32) {
    %c0_i32 = arith.constant 0 : i32
    %c0_i32_0 = arith.constant 0 : i32
    %c0_i32_1 = arith.constant 0 : i32
    return %c0_i32, %c0_i32_0 : i32, i32
  }
  func.func @transform_3(%arg0: i32) -> (i32, i32) {
    %c0_i32 = arith.constant 0 : i32
    %c0_i32_0 = arith.constant 0 : i32
    return %arg0, %c0_i32 : i32, i32
  }
}

module attributes {stable_mosaic.version = 11 : i64} {
  func.func @kernel(%arg0: i32, %arg1: memref<256x144xbf16, #tpu.memory_space<vmem>>, %arg2: memref<144x32xbf16, #tpu.memory_space<vmem>>, %arg3: memref<256x32xbf16, #tpu.memory_space<vmem>>, %arg4: memref<8x32xf32, #tpu.memory_space<vmem>>, %arg5: memref<8x32xf32, #tpu.memory_space<vmem>>) attributes {dimension_semantics = [#tpu.dimension_semantics<parallel>], iteration_bounds = array<i64: 2>, scalar_prefetch = 0 : i64, scratch_operands = 0 : i64, tpu.core_type = #tpu.core_type<tc>, window_params = [{transform_indices = @transform_0, window_bounds = array<i64: 256, 144>}, {pipeline_mode = #tpu.pipeline_mode<synchronous>, transform_indices = @transform_1, window_bounds = array<i64: 144, 32>}, {transform_indices = @transform_2, window_bounds = array<i64: 256, 32>}, {transform_indices = @transform_3, window_bounds = array<i64: 8, 32>}, {transform_indices = @transform_4, window_bounds = array<i64: 8, 32>}]} {
    %c0 = arith.constant 0 : index
    %c0_0 = arith.constant 0 : index
    %0 = vector.load %arg1[%c0, %c0_0] : memref<256x144xbf16, #tpu.memory_space<vmem>>, vector<256x144xbf16>
    %c0_1 = arith.constant 0 : index
    %c0_2 = arith.constant 0 : index
    %1 = vector.load %arg2[%c0_1, %c0_2] : memref<144x32xbf16, #tpu.memory_space<vmem>>, vector<144x32xbf16>
    %cst = arith.constant dense<0.000000e+00> : vector<256x32xf32>
    %2 = tpu.matmul %0, %1, %cst {dimension_numbers = #tpu.dot_dimension_numbers<[1], [0], [0], [1], [0, 0, 1, 1], [], []>} : vector<256x144xbf16>, vector<144x32xbf16>, vector<256x32xf32> -> vector<256x32xf32>
    %cst_3 = arith.constant dense<0.000000e+00> : vector<32xf32>
    %3 = vector.multi_reduction <add>, %2, %cst_3 [0] : vector<256x32xf32> to vector<32xf32>
    %4 = vector.shape_cast %3 : vector<32xf32> to vector<1x32xf32>
    %5 = arith.mulf %2, %2 : vector<256x32xf32>
    %cst_4 = arith.constant dense<0.000000e+00> : vector<32xf32>
    %6 = vector.multi_reduction <add>, %5, %cst_4 [0] : vector<256x32xf32> to vector<32xf32>
    %7 = vector.shape_cast %6 : vector<32xf32> to vector<1x32xf32>
    %8 = vector.shape_cast %4 : vector<1x32xf32> to vector<1x32xf32>
    %9 = vector.broadcast %8 : vector<1x32xf32> to vector<8x32xf32>
    %c0_5 = arith.constant 0 : index
    %c0_6 = arith.constant 0 : index
    %10 = vector.load %arg4[%c0_5, %c0_6] : memref<8x32xf32, #tpu.memory_space<vmem>>, vector<8x32xf32>
    tpu.vector_store %arg4[%c0_5, %c0_6], %9 {strides = array<i32>} : memref<8x32xf32, #tpu.memory_space<vmem>>, vector<8x32xf32>,
    %11 = vector.shape_cast %7 : vector<1x32xf32> to vector<1x32xf32>
    %12 = vector.broadcast %11 : vector<1x32xf32> to vector<8x32xf32>
    %c0_7 = arith.constant 0 : index
    %c0_8 = arith.constant 0 : index
    %13 = vector.load %arg5[%c0_7, %c0_8] : memref<8x32xf32, #tpu.memory_space<vmem>>, vector<8x32xf32>
    tpu.vector_store %arg5[%c0_7, %c0_8], %12 {strides = array<i32>} : memref<8x32xf32, #tpu.memory_space<vmem>>, vector<8x32xf32>,
    %14 = arith.truncf %2 : vector<256x32xf32> to vector<256x32xbf16>
    %c0_9 = arith.constant 0 : index
    %c0_10 = arith.constant 0 : index
    %15 = vector.load %arg3[%c0_9, %c0_10] : memref<256x32xbf16, #tpu.memory_space<vmem>>, vector<256x32xbf16>
    tpu.vector_store %arg3[%c0_9, %c0_10], %14 {strides = array<i32>} : memref<256x32xbf16, #tpu.memory_space<vmem>>, vector<256x32xbf16>,
    return
  }
  func.func @transform_0(%arg0: i32) -> (i32, i32) {
    %c0_i32 = arith.constant 0 : i32
    %c0_i32_0 = arith.constant 0 : i32
    return %arg0, %c0_i32 : i32, i32
  }
  func.func @transform_1(%arg0: i32) -> (i32, i32) {
    %c0_i32 = arith.constant 0 : i32
    %c0_i32_0 = arith.constant 0 : i32
    %c0_i32_1 = arith.constant 0 : i32
    return %c0_i32, %c0_i32_0 : i32, i32
  }
  func.func @transform_2(%arg0: i32) -> (i32, i32) {
    %c0_i32 = arith.constant 0 : i32
    %c0_i32_0 = arith.constant 0 : i32
    return %arg0, %c0_i32 : i32, i32
  }
  func.func @transform_3(%arg0: i32) -> (i32, i32) {
    %c0_i32 = arith.constant 0 : i32
    %c0_i32_0 = arith.constant 0 : i32
    return %arg0, %c0_i32 : i32, i32
  }
  func.func @transform_4(%arg0: i32) -> (i32, i32) {
    %c0_i32 = arith.constant 0 : i32
    %c0_i32_0 = arith.constant 0 : i32
    return %arg0, %c0_i32 : i32, i32
  }
}

module attributes {stable_mosaic.version = 11 : i64} {
  func.func @kernel(%arg0: i32, %arg1: memref<256x32xbf16, #tpu.memory_space<vmem>>, %arg2: memref<1x32xf32, #tpu.memory_space<vmem>>, %arg3: memref<1x32xf32, #tpu.memory_space<vmem>>, %arg4: memref<256x32xbf16, #tpu.memory_space<vmem>>) attributes {dimension_semantics = [#tpu.dimension_semantics<parallel>], iteration_bounds = array<i64: 2>, scalar_prefetch = 0 : i64, scratch_operands = 0 : i64, tpu.core_type = #tpu.core_type<tc>, window_params = [{transform_indices = @transform_0, window_bounds = array<i64: 256, 32>}, {pipeline_mode = #tpu.pipeline_mode<synchronous>, transform_indices = @transform_1, window_bounds = array<i64: 1, 32>}, {pipeline_mode = #tpu.pipeline_mode<synchronous>, transform_indices = @transform_2, window_bounds = array<i64: 1, 32>}, {transform_indices = @transform_3, window_bounds = array<i64: 256, 32>}]} {
    %c0 = arith.constant 0 : index
    %c0_0 = arith.constant 0 : index
    %0 = vector.load %arg1[%c0, %c0_0] : memref<256x32xbf16, #tpu.memory_space<vmem>>, vector<256x32xbf16>
    %1 = arith.extf %0 : vector<256x32xbf16> to vector<256x32xf32>
    %c0_1 = arith.constant 0 : index
    %c0_2 = arith.constant 0 : index
    %2 = vector.load %arg2[%c0_1, %c0_2] : memref<1x32xf32, #tpu.memory_space<vmem>>, vector<1x32xf32>
    %3 = vector.broadcast %2 : vector<1x32xf32> to vector<256x32xf32>
    %4 = arith.mulf %1, %3 : vector<256x32xf32>
    %c0_3 = arith.constant 0 : index
    %c0_4 = arith.constant 0 : index
    %5 = vector.load %arg3[%c0_3, %c0_4] : memref<1x32xf32, #tpu.memory_space<vmem>>, vector<1x32xf32>
    %6 = vector.broadcast %5 : vector<1x32xf32> to vector<256x32xf32>
    %7 = arith.addf %4, %6 : vector<256x32xf32>
    %cst = arith.constant 0.000000e+00 : f32
    %8 = vector.broadcast %cst : f32 to vector<256x32xf32>
    %9 = arith.maximumf %7, %8 : vector<256x32xf32>
    %10 = arith.truncf %9 : vector<256x32xf32> to vector<256x32xbf16>
    %c0_5 = arith.constant 0 : index
    %c0_6 = arith.constant 0 : index
    %11 = vector.load %arg4[%c0_5, %c0_6] : memref<256x32xbf16, #tpu.memory_space<vmem>>, vector<256x32xbf16>
    tpu.vector_store %arg4[%c0_5, %c0_6], %10 {strides = array<i32>} : memref<256x32xbf16, #tpu.memory_space<vmem>>, vector<256x32xbf16>,
    return
  }
  func.func @transform_0(%arg0: i32) -> (i32, i32) {
    %c0_i32 = arith.constant 0 : i32
    %c0_i32_0 = arith.constant 0 : i32
    return %arg0, %c0_i32 : i32, i32
  }
  func.func @transform_1(%arg0: i32) -> (i32, i32) {
    %c0_i32 = arith.constant 0 : i32
    %c0_i32_0 = arith.constant 0 : i32
    %c0_i32_1 = arith.constant 0 : i32
    return %c0_i32, %c0_i32_0 : i32, i32
  }
  func.func @transform_2(%arg0: i32) -> (i32, i32) {
    %c0_i32 = arith.constant 0 : i32
    %c0_i32_0 = arith.constant 0 : i32
    %c0_i32_1 = arith.constant 0 : i32
    return %c0_i32, %c0_i32_0 : i32, i32
  }
  func.func @transform_3(%arg0: i32) -> (i32, i32) {
    %c0_i32 = arith.constant 0 : i32
    %c0_i32_0 = arith.constant 0 : i32
    return %arg0, %c0_i32 : i32, i32
  }
}

module attributes {stable_mosaic.version = 11 : i64} {
  func.func @kernel(%arg0: i32, %arg1: memref<1024x72xbf16, #tpu.memory_space<vmem>>, %arg2: memref<72x12xbf16, #tpu.memory_space<vmem>>, %arg3: memref<1024x12xf32, #tpu.memory_space<vmem>>) attributes {dimension_semantics = [#tpu.dimension_semantics<parallel>], iteration_bounds = array<i64: 2>, scalar_prefetch = 0 : i64, scratch_operands = 0 : i64, tpu.core_type = #tpu.core_type<tc>, window_params = [{transform_indices = @transform_0, window_bounds = array<i64: 1024, 72>}, {pipeline_mode = #tpu.pipeline_mode<synchronous>, transform_indices = @transform_1, window_bounds = array<i64: 72, 12>}, {transform_indices = @transform_2, window_bounds = array<i64: 1024, 12>}]} {
    %c0 = arith.constant 0 : index
    %c0_0 = arith.constant 0 : index
    %0 = vector.load %arg1[%c0, %c0_0] : memref<1024x72xbf16, #tpu.memory_space<vmem>>, vector<1024x72xbf16>
    %c0_1 = arith.constant 0 : index
    %c0_2 = arith.constant 0 : index
    %1 = vector.load %arg2[%c0_1, %c0_2] : memref<72x12xbf16, #tpu.memory_space<vmem>>, vector<72x12xbf16>
    %cst = arith.constant dense<0.000000e+00> : vector<1024x12xf32>
    %2 = tpu.matmul %0, %1, %cst {dimension_numbers = #tpu.dot_dimension_numbers<[1], [0], [0], [1], [0, 0, 1, 1], [], []>} : vector<1024x72xbf16>, vector<72x12xbf16>, vector<1024x12xf32> -> vector<1024x12xf32>
    %3 = math.tanh %2 : vector<1024x12xf32>
    %c0_3 = arith.constant 0 : index
    %c0_4 = arith.constant 0 : index
    %4 = vector.load %arg3[%c0_3, %c0_4] : memref<1024x12xf32, #tpu.memory_space<vmem>>, vector<1024x12xf32>
    tpu.vector_store %arg3[%c0_3, %c0_4], %3 {strides = array<i32>} : memref<1024x12xf32, #tpu.memory_space<vmem>>, vector<1024x12xf32>,
    return
  }
  func.func @transform_0(%arg0: i32) -> (i32, i32) {
    %c0_i32 = arith.constant 0 : i32
    %c0_i32_0 = arith.constant 0 : i32
    return %arg0, %c0_i32 : i32, i32
  }
  func.func @transform_1(%arg0: i32) -> (i32, i32) {
    %c0_i32 = arith.constant 0 : i32
    %c0_i32_0 = arith.constant 0 : i32
    %c0_i32_1 = arith.constant 0 : i32
    return %c0_i32, %c0_i32_0 : i32, i32
  }
  func.func @transform_2(%arg0: i32) -> (i32, i32) {
    %c0_i32 = arith.constant 0 : i32
    %c0_i32_0 = arith.constant 0 : i32
    return %arg0, %c0_i32 : i32, i32
  }
}

</mosaic_0001>

<llo_original>
// kernel: tile.47
$region0: #{tile.47}
  #allocation0 [shape = 's32[1]{0}', space=sflag, size = 0x4, scoped, tag = 'scoped memory for tile.47']
  %s0 = inlined_call_operand.vmem [shape: f32[64], index: 0, kind: input, shape index: {}]
  %s1 = inlined_call_operand.vmem [shape: f32[16,64], index: 1, kind: output, shape index: {}]
  // Predicated region
  $region2: #{tile.47} parent=0 // pred_check
    _
  $region3: #{tile.47} parent=0 // pred_check_branch
    %3 = sbr.rel (0) target = $region5
  $region4: #{tile.47} parent=0 // pred_region
    _
  $region5: #{tile.47} parent=0 // pred_fallthru
    _
  %v4 = vld [vmem:[%s0] ss:$0 sm:$0xff]
  %5 = vst [vmem:[%s1] sm:$0xff] %v4
  %s6 = scalar_lea.vmem %s1, 8
  %7 = vst [vmem:[%s6] sm:$0xff] %v4

// kernel: tile.49
$region0: #{tile.49}
  %s0 = inlined_call_operand.vmem [shape: f32[16,64], index: 0, kind: input, shape index: {}]
  %s1 = inlined_call_operand.vmem [shape: f32[1,1024], index: 1, kind: output, shape index: {}]
  $region1: #{tile.49} parent=0
    #allocation0 [shape = 'u8[32768]{0}', space=vmem, size = 0x8000, scoped, tag = 'scoped mem for output reshape']
    %v2 = vld [vmem:[%s0] ss:$2 sm:$0xff]
    %vm3 = vcmask 523264
    %4 = vst.msk [vmem:[#allocation0] ss:$8 sm:$0xf] %vm3, %v2
    %5 = vst.msk [vmem:[#allocation0] ss:$8 sm:$0xf0] %vm3, %v2
    %s6 = scalar_lea.vmem %s0, 1
    %v7 = vld [vmem:[%s6] ss:$2 sm:$0xff]
    %8 = vrot.lane.b32.xlu0 %v7, 64
    %v9 = vpop.permute.xlu0 %8
    %vm10 = vcmask 1048064
    %11 = vst.msk [vmem:[#allocation0] ss:$8 sm:$0xf] %vm10, %v9
    %12 = vst.msk [vmem:[#allocation0] ss:$8 sm:$0xf0] %vm10, %v9
    %s14 = sshll.u32 1, 1
    %s15 = ssub.s32 %s14, 1
    %v17 = vld [vmem:[#allocation0] sm:%s15]
    %s18 = sshll.u32 1, 1
    %s19 = ssub.s32 %s18, 1
    %20 = vst [vmem:[%s1] sm:%s19] %v17
    %s21 = scalar_lea.vmem [#allocation0], 8
    %v22 = vld [vmem:[%s21] sm:%s15]
    %s23 = sshll.u32 1, 1
    %s24 = ssub.s32 %s23, 1
    %s25 = scalar_lea.vmem %s1, 1
    %26 = vst [vmem:[%s25] sm:%s24] %v22
    %s27 = scalar_lea.vmem [#allocation0], 16
    %v28 = vld [vmem:[%s27] sm:%s15]
    %s29 = sshll.u32 1, 1
    %s30 = ssub.s32 %s29, 1
    %s31 = smul.addr 1, 2
    %s32 = scalar_lea.vmem %s1, %s31
    %33 = vst [vmem:[%s32] sm:%s30] %v28
    %s34 = scalar_lea.vmem [#allocation0], 24
    %v35 = vld [vmem:[%s34] sm:%s15]
    %s36 = sshll.u32 1, 1
    %s37 = ssub.s32 %s36, 1
    %s38 = smul.addr 1, 3
    %s39 = scalar_lea.vmem %s1, %s38
    %40 = vst [vmem:[%s39] sm:%s37] %v35
    %s41 = scalar_lea.vmem [#allocation0], 32
    %v42 = vld [vmem:[%s41] sm:%s15]
    %s43 = sshll.u32 1, 1
    %s44 = ssub.s32 %s43, 1
    %s45 = smul.addr 1, 4
    %s46 = scalar_lea.vmem %s1, %s45
    %47 = vst [vmem:[%s46] sm:%s44] %v42
    %s48 = scalar_lea.vmem [#allocation0], 40
    %v49 = vld [vmem:[%s48] sm:%s15]
    %s50 = sshll.u32 1, 1
    %s51 = ssub.s32 %s50, 1
    %s52 = smul.addr 1, 5
    %s53 = scalar_lea.vmem %s1, %s52
    %54 = vst [vmem:[%s53] sm:%s51] %v49
    %s55 = scalar_lea.vmem [#allocation0], 48
    %v56 = vld [vmem:[%s55] sm:%s15]
    %s57 = sshll.u32 1, 1
    %s58 = ssub.s32 %s57, 1
    %s59 = smul.addr 1, 6
    %s60 = scalar_lea.vmem %s1, %s59
    %61 = vst [vmem:[%s60] sm:%s58] %v56
    %s62 = scalar_lea.vmem [#allocation0], 56
    %v63 = vld [vmem:[%s62] sm:%s15]
    %s64 = sshll.u32 1, 1
    %s65 = ssub.s32 %s64, 1
    %s66 = smul.addr 1, 7
    %s67 = scalar_lea.vmem %s1, %s66
    %68 = vst [vmem:[%s67] sm:%s65] %v63

// kernel: generator_forward.9
$region0: #{generator_forward.9}
  #allocation0 [shape = 'u32[]', space=smem, size = 0x4, offset = 0x4, fixed_abs, tag = 'smem constant byte address 0x4 - core index']
  #allocation1 [shape = 'u32[144,128]{1,0:T(1,128)}', space=vmem, size = 0x12000, scoped, tag = 'internal scratch']
  %s0 = inlined_call_operand.vmem [shape: bf16[8,16], index: 0, kind: input, shape index: {}]
  %s1 = inlined_call_operand.vmem [shape: bf16[16,1024], index: 1, kind: input, shape index: {}]
  %s2 = inlined_call_operand.vmem [shape: bf16[8,1024], index: 2, kind: output, shape index: {0}]
  %s3 = inlined_call_operand.vmem [shape: f32[8,1024], index: 3, kind: output, shape index: {1}]
  %s4 = inlined_call_operand.vmem [shape: f32[8,1024], index: 4, kind: output, shape index: {2}]
  %5 = xla_tuple %s2, %s3, %s4
  %s6 = sld [smem:[#allocation0]]
  $region34: #{generator_forward.9} parent=0
    _
  %s8 = ssub.s32 1, %s6
  %s9 = scalar_select 0, %s8, %s6
  // Predicated region
  $region2: #{generator_forward.9} parent=0 // pred_check
    _
  $region3: #{generator_forward.9} parent=0 // pred_check_branch
    %11 = sbr.rel (0) target = $region5
  $region4: #{generator_forward.9} parent=0 // pred_region
    _
  $region5: #{generator_forward.9} parent=0 // pred_fallthru
    _
  // Predicated region
  $region6: #{generator_forward.9} parent=0 // pred_check
    _
  $region7: #{generator_forward.9} parent=0 // pred_check_branch
    %13 = sbr.rel (0) target = $region9
  $region8: #{generator_forward.9} parent=0 // pred_region
    _
  $region9: #{generator_forward.9} parent=0 // pred_fallthru
    _
  %v15 = vld [vmem:[%s0] sm:$0xf]
  %v16 = vld [vmem:[%s1] sm:$0xff]
  %v17 = vld [vmem:[%s1 + $0x8] sm:$0xff]
  %v18 = vld [vmem:[%s1 + $0x10] sm:$0xff]
  %v19 = vld [vmem:[%s1 + $0x18] sm:$0xff]
  %v20 = vld [vmem:[%s1 + $0x20] sm:$0xff]
  %v21 = vld [vmem:[%s1 + $0x28] sm:$0xff]
  %v22 = vld [vmem:[%s1 + $0x30] sm:$0xff]
  %v23 = vld [vmem:[%s1 + $0x38] sm:$0xff]
  %v32 = vunpack.c.l.b16 %v16
  %v33 = vunpack.c.h.b16 %v16
  %v34 = vunpack.c.l.b16 %v17
  %v35 = vunpack.c.h.b16 %v17
  %v36 = vunpack.c.l.b16 %v18
  %v37 = vunpack.c.h.b16 %v18
  %v38 = vunpack.c.l.b16 %v19
  %v39 = vunpack.c.h.b16 %v19
  %v40 = vunpack.c.l.b16 %v20
  %v41 = vunpack.c.h.b16 %v20
  %v42 = vunpack.c.l.b16 %v21
  %v43 = vunpack.c.h.b16 %v21
  %v44 = vunpack.c.l.b16 %v22
  %v45 = vunpack.c.h.b16 %v22
  %v46 = vunpack.c.l.b16 %v23
  %v47 = vunpack.c.h.b16 %v23
  %v48 = vpack.c.b16 %v40, %v32
  %v49 = vpack.c.b16 %v41, %v33
  %v50 = vpack.c.b16 %v42, %v34
  %v51 = vpack.c.b16 %v43, %v35
  %v52 = vpack.c.b16 %v44, %v36
  %v53 = vpack.c.b16 %v45, %v37
  %v54 = vpack.c.b16 %v46, %v38
  %v55 = vpack.c.b16 %v47, %v39
  %vm64 = vcmask 130048
  %v66 = vsel %vm64, %v15, 0
  %68 = vmatprep.subr.bf16.mxu0 0
  %69 = vmatpush1.bf16.msra.mxu0 0
  %70 = vmatprep.subr.bf16.mxu0 0
  %71 = vmatpush1.bf16.msra.mxu0 0
  %72 = vmatprep.subr.bf16.mxu0 0
  %73 = vmatpush1.bf16.msra.mxu0 0
  %74 = vmatprep.subr.bf16.mxu0 0
  %75 = vmatpush1.bf16.msra.mxu0 0
  %76 = vmatprep.subr.bf16.mxu0 0
  %77 = vmatpush1.bf16.msra.mxu0 0
  %78 = vmatprep.subr.bf16.mxu0 0
  %79 = vmatpush1.bf16.msra.mxu0 0
  %80 = vmatprep.subr.bf16.mxu0 0
  %81 = vmatpush1.bf16.msra.mxu0 0
  %82 = vmatprep.subr.bf16.mxu0 %v49
  %83 = vmatpush1.bf16.msra.mxu0 %v48
  %84 = vmatprep.subr.bf16.mxu0 0
  %85 = vmatpush2.bf16.msra.mxu0 0
  %86 = vmatprep.subr.bf16.mxu0 0
  %87 = vmatpush2.bf16.msra.mxu0 0
  %88 = vmatprep.subr.bf16.mxu0 0
  %89 = vmatpush2.bf16.msra.mxu0 0
  %90 = vmatprep.subr.bf16.mxu0 0
  %91 = vmatpush2.bf16.msra.mxu0 0
  %92 = vmatprep.subr.bf16.mxu0 0
  %93 = vmatpush2.bf16.msra.mxu0 0
  %94 = vmatprep.subr.bf16.mxu0 0
  %95 = vmatpush2.bf16.msra.mxu0 0
  %96 = vmatprep.subr.bf16.mxu0 0
  %97 = vmatpush2.bf16.msra.mxu0 0
  %98 = vmatprep.subr.bf16.mxu0 0
  %99 = vmatpush2.bf16.msra.mxu0 0
  %100 = vmatprep.mubr.bf16.mxu0 0
  %101 = vmatmul.mubr.bf16.gmra.mxu0 %v66
  %v102 = vpop.f32.mrf.mxu0
  %v103 = vadd.f32 0.0, %v102
  %v104 = vpop.f32.mrf.mxu0
  %v105 = vadd.f32 0.0, %v104
  %v106 = vpop.f32.mrf.mxu0
  %v107 = vpop.f32.mrf.mxu0
  %108 = vdwg.mxu0
  %109 = vmatprep.subr.bf16.mxu0 0
  %110 = vmatpush1.bf16.msra.mxu0 0
  %111 = vmatprep.subr.bf16.mxu0 0
  %112 = vmatpush1.bf16.msra.mxu0 0
  %113 = vmatprep.subr.bf16.mxu0 0
  %114 = vmatpush1.bf16.msra.mxu0 0
  %115 = vmatprep.subr.bf16.mxu0 0
  %116 = vmatpush1.bf16.msra.mxu0 0
  %117 = vmatprep.subr.bf16.mxu0 0
  %118 = vmatpush1.bf16.msra.mxu0 0
  %119 = vmatprep.subr.bf16.mxu0 0
  %120 = vmatpush1.bf16.msra.mxu0 0
  %121 = vmatprep.subr.bf16.mxu0 0
  %122 = vmatpush1.bf16.msra.mxu0 0
  %123 = vmatprep.subr.bf16.mxu0 %v51
  %124 = vmatpush1.bf16.msra.mxu0 %v50
  %125 = vmatprep.subr.bf16.mxu0 0
  %126 = vmatpush2.bf16.msra.mxu0 0
  %127 = vmatprep.subr.bf16.mxu0 0
  %128 = vmatpush2.bf16.msra.mxu0 0
  %129 = vmatprep.subr.bf16.mxu0 0
  %130 = vmatpush2.bf16.msra.mxu0 0
  %131 = vmatprep.subr.bf16.mxu0 0
  %132 = vmatpush2.bf16.msra.mxu0 0
  %133 = vmatprep.subr.bf16.mxu0 0
  %134 = vmatpush2.bf16.msra.mxu0 0
  %135 = vmatprep.subr.bf16.mxu0 0
  %136 = vmatpush2.bf16.msra.mxu0 0
  %137 = vmatprep.subr.bf16.mxu0 0
  %138 = vmatpush2.bf16.msra.mxu0 0
  %139 = vmatprep.subr.bf16.mxu0 0
  %140 = vmatpush2.bf16.msra.mxu0 0
  %141 = vmatprep.mubr.bf16.mxu0 0
  %142 = vmatmul.mubr.bf16.gmra.mxu0 %v66
  %v143 = vpop.f32.mrf.mxu0
  %v144 = vadd.f32 0.0, %v143
  %v145 = vpop.f32.mrf.mxu0
  %v146 = vadd.f32 0.0, %v145
  %v147 = vpop.f32.mrf.mxu0
  %v148 = vpop.f32.mrf.mxu0
  %149 = vdwg.mxu0
  %150 = vmatprep.subr.bf16.mxu0 0
  %151 = vmatpush1.bf16.msra.mxu0 0
  %152 = vmatprep.subr.bf16.mxu0 0
  %153 = vmatpush1.bf16.msra.mxu0 0
  %154 = vmatprep.subr.bf16.mxu0 0
  %155 = vmatpush1.bf16.msra.mxu0 0
  %156 = vmatprep.subr.bf16.mxu0 0
  %157 = vmatpush1.bf16.msra.mxu0 0
  %158 = vmatprep.subr.bf16.mxu0 0
  %159 = vmatpush1.bf16.msra.mxu0 0
  %160 = vmatprep.subr.bf16.mxu0 0
  %161 = vmatpush1.bf16.msra.mxu0 0
  %162 = vmatprep.subr.bf16.mxu0 0
  %163 = vmatpush1.bf16.msra.mxu0 0
  %164 = vmatprep.subr.bf16.mxu0 %v53
  %165 = vmatpush1.bf16.msra.mxu0 %v52
  %166 = vmatprep.subr.bf16.mxu0 0
  %167 = vmatpush2.bf16.msra.mxu0 0
  %168 = vmatprep.subr.bf16.mxu0 0
  %169 = vmatpush2.bf16.msra.mxu0 0
  %170 = vmatprep.subr.bf16.mxu0 0
  %171 = vmatpush2.bf16.msra.mxu0 0
  %172 = vmatprep.subr.bf16.mxu0 0
  %173 = vmatpush2.bf16.msra.mxu0 0
  %174 = vmatprep.subr.bf16.mxu0 0
  %175 = vmatpush2.bf16.msra.mxu0 0
  %176 = vmatprep.subr.bf16.mxu0 0
  %177 = vmatpush2.bf16.msra.mxu0 0
  %178 = vmatprep.subr.bf16.mxu0 0
  %179 = vmatpush2.bf16.msra.mxu0 0
  %180 = vmatprep.subr.bf16.mxu0 0
  %181 = vmatpush2.bf16.msra.mxu0 0
  %182 = vmatprep.mubr.bf16.mxu0 0
  %183 = vmatmul.mubr.bf16.gmra.mxu0 %v66
  %v184 = vpop.f32.mrf.mxu0
  %v185 = vadd.f32 0.0, %v184
  %v186 = vpop.f32.mrf.mxu0
  %v187 = vadd.f32 0.0, %v186
  %v188 = vpop.f32.mrf.mxu0
  %v189 = vpop.f32.mrf.mxu0
  %190 = vdwg.mxu0
  %191 = vmatprep.subr.bf16.mxu0 0
  %192 = vmatpush1.bf16.msra.mxu0 0
  %193 = vmatprep.subr.bf16.mxu0 0
  %194 = vmatpush1.bf16.msra.mxu0 0
  %195 = vmatprep.subr.bf16.mxu0 0
  %196 = vmatpush1.bf16.msra.mxu0 0
  %197 = vmatprep.subr.bf16.mxu0 0
  %198 = vmatpush1.bf16.msra.mxu0 0
  %199 = vmatprep.subr.bf16.mxu0 0
  %200 = vmatpush1.bf16.msra.mxu0 0
  %201 = vmatprep.subr.bf16.mxu0 0
  %202 = vmatpush1.bf16.msra.mxu0 0
  %203 = vmatprep.subr.bf16.mxu0 0
  %204 = vmatpush1.bf16.msra.mxu0 0
  %205 = vmatprep.subr.bf16.mxu0 %v55
  %206 = vmatpush1.bf16.msra.mxu0 %v54
  %207 = vmatprep.subr.bf16.mxu0 0
  %208 = vmatpush2.bf16.msra.mxu0 0
  %209 = vmatprep.subr.bf16.mxu0 0
  %210 = vmatpush2.bf16.msra.mxu0 0
  %211 = vmatprep.subr.bf16.mxu0 0
  %212 = vmatpush2.bf16.msra.mxu0 0
  %213 = vmatprep.subr.bf16.mxu0 0
  %214 = vmatpush2.bf16.msra.mxu0 0
  %215 = vmatprep.subr.bf16.mxu0 0
  %216 = vmatpush2.bf16.msra.mxu0 0
  %217 = vmatprep.subr.bf16.mxu0 0
  %218 = vmatpush2.bf16.msra.mxu0 0
  %219 = vmatprep.subr.bf16.mxu0 0
  %220 = vmatpush2.bf16.msra.mxu0 0
  %221 = vmatprep.subr.bf16.mxu0 0
  %222 = vmatpush2.bf16.msra.mxu0 0
  %223 = vmatprep.mubr.bf16.mxu0 0
  %224 = vmatmul.mubr.bf16.gmra.mxu0 %v66
  %v225 = vpop.f32.mrf.mxu0
  %v226 = vadd.f32 0.0, %v225
  %v227 = vpop.f32.mrf.mxu0
  %v228 = vadd.f32 0.0, %v227
  %v229 = vpop.f32.mrf.mxu0
  %v230 = vpop.f32.mrf.mxu0
  %231 = vdwg.mxu0
  %v232 = vrot.slane %v103, 4
  %v233 = vadd.f32 %v103, %v232
  %v234 = vrot.slane %v233, 2
  %v235 = vadd.f32 %v233, %v234
  %v236 = vrot.slane %v235, 1
  %v237 = vadd.f32 %v235, %v236
  %v238 = vrot.slane %v105, 4
  %v239 = vadd.f32 %v105, %v238
  %v240 = vrot.slane %v239, 2
  %v241 = vadd.f32 %v239, %v240
  %v242 = vrot.slane %v241, 1
  %v243 = vadd.f32 %v241, %v242
  %v244 = vrot.slane %v144, 4
  %v245 = vadd.f32 %v144, %v244
  %v246 = vrot.slane %v245, 2
  %v247 = vadd.f32 %v245, %v246
  %v248 = vrot.slane %v247, 1
  %v249 = vadd.f32 %v247, %v248
  %v250 = vrot.slane %v146, 4
  %v251 = vadd.f32 %v146, %v250
  %v252 = vrot.slane %v251, 2
  %v253 = vadd.f32 %v251, %v252
  %v254 = vrot.slane %v253, 1
  %v255 = vadd.f32 %v253, %v254
  %v256 = vrot.slane %v185, 4
  %v257 = vadd.f32 %v185, %v256
  %v258 = vrot.slane %v257, 2
  %v259 = vadd.f32 %v257, %v258
  %v260 = vrot.slane %v259, 1
  %v261 = vadd.f32 %v259, %v260
  %v262 = vrot.slane %v187, 4
  %v263 = vadd.f32 %v187, %v262
  %v264 = vrot.slane %v263, 2
  %v265 = vadd.f32 %v263, %v264
  %v266 = vrot.slane %v265, 1
  %v267 = vadd.f32 %v265, %v266
  %v268 = vrot.slane %v226, 4
  %v269 = vadd.f32 %v226, %v268
  %v270 = vrot.slane %v269, 2
  %v271 = vadd.f32 %v269, %v270
  %v272 = vrot.slane %v271, 1
  %v273 = vadd.f32 %v271, %v272
  %v274 = vrot.slane %v228, 4
  %v275 = vadd.f32 %v228, %v274
  %v276 = vrot.slane %v275, 2
  %v277 = vadd.f32 %v275, %v276
  %v278 = vrot.slane %v277, 1
  %v279 = vadd.f32 %v277, %v278
  %v280 = vmul.f32 %v103, %v103
  %v281 = vmul.f32 %v105, %v105
  %v282 = vmul.f32 %v144, %v144
  %v283 = vmul.f32 %v146, %v146
  %v284 = vmul.f32 %v185, %v185
  %v285 = vmul.f32 %v187, %v187
  %v286 = vmul.f32 %v226, %v226
  %v287 = vmul.f32 %v228, %v228
  %v288 = vrot.slane %v280, 4
  %v289 = vadd.f32 %v280, %v288
  %v290 = vrot.slane %v289, 2
  %v291 = vadd.f32 %v289, %v290
  %v292 = vrot.slane %v291, 1
  %v293 = vadd.f32 %v291, %v292
  %v294 = vrot.slane %v281, 4
  %v295 = vadd.f32 %v281, %v294
  %v296 = vrot.slane %v295, 2
  %v297 = vadd.f32 %v295, %v296
  %v298 = vrot.slane %v297, 1
  %v299 = vadd.f32 %v297, %v298
  %v300 = vrot.slane %v282, 4
  %v301 = vadd.f32 %v282, %v300
  %v302 = vrot.slane %v301, 2
  %v303 = vadd.f32 %v301, %v302
  %v304 = vrot.slane %v303, 1
  %v305 = vadd.f32 %v303, %v304
  %v306 = vrot.slane %v283, 4
  %v307 = vadd.f32 %v283, %v306
  %v308 = vrot.slane %v307, 2
  %v309 = vadd.f32 %v307, %v308
  %v310 = vrot.slane %v309, 1
  %v311 = vadd.f32 %v309, %v310
  %v312 = vrot.slane %v284, 4
  %v313 = vadd.f32 %v284, %v312
  %v314 = vrot.slane %v313, 2
  %v315 = vadd.f32 %v313, %v314
  %v316 = vrot.slane %v315, 1
  %v317 = vadd.f32 %v315, %v316
  %v318 = vrot.slane %v285, 4
  %v319 = vadd.f32 %v285, %v318
  %v320 = vrot.slane %v319, 2
  %v321 = vadd.f32 %v319, %v320
  %v322 = vrot.slane %v321, 1
  %v323 = vadd.f32 %v321, %v322
  %v324 = vrot.slane %v286, 4
  %v325 = vadd.f32 %v286, %v324
  %v326 = vrot.slane %v325, 2
  %v327 = vadd.f32 %v325, %v326
  %v328 = vrot.slane %v327, 1
  %v329 = vadd.f32 %v327, %v328
  %v330 = vrot.slane %v287, 4
  %v331 = vadd.f32 %v287, %v330
  %v332 = vrot.slane %v331, 2
  %v333 = vadd.f32 %v331, %v332
  %v334 = vrot.slane %v333, 1
  %v335 = vadd.f32 %v333, %v334
  %336 = vst [vmem:[%s3] sm:$0xff] %v237
  %337 = vst [vmem:[%s3 + $0x8] sm:$0xff] %v243
  %338 = vst [vmem:[%s3 + $0x10] sm:$0xff] %v249
  %339 = vst [vmem:[%s3 + $0x18] sm:$0xff] %v255
  %340 = vst [vmem:[%s3 + $0x20] sm:$0xff] %v261
  %341 = vst [vmem:[%s3 + $0x28] sm:$0xff] %v267
  %342 = vst [vmem:[%s3 + $0x30] sm:$0xff] %v273
  %343 = vst [vmem:[%s3 + $0x38] sm:$0xff] %v279
  %344 = vst [vmem:[%s4] sm:$0xff] %v293
  %345 = vst [vmem:[%s4 + $0x8] sm:$0xff] %v299
  %346 = vst [vmem:[%s4 + $0x10] sm:$0xff] %v305
  %347 = vst [vmem:[%s4 + $0x18] sm:$0xff] %v311
  %348 = vst [vmem:[%s4 + $0x20] sm:$0xff] %v317
  %349 = vst [vmem:[%s4 + $0x28] sm:$0xff] %v323
  %350 = vst [vmem:[%s4 + $0x30] sm:$0xff] %v329
  %351 = vst [vmem:[%s4 + $0x38] sm:$0xff] %v335
  %v352 = vpack.c.bf16 %v103, %v103
  %v353 = vpack.c.bf16 %v105, %v105
  %v354 = vpack.c.bf16 %v144, %v144
  %v355 = vpack.c.bf16 %v146, %v146
  %v356 = vpack.c.bf16 %v185, %v185
  %v357 = vpack.c.bf16 %v187, %v187
  %v358 = vpack.c.bf16 %v226, %v226
  %v359 = vpack.c.bf16 %v228, %v228
  %v368 = vunpack.c.l.b16 %v352
  %v369 = vunpack.c.l.b16 %v353
  %v370 = vunpack.c.l.b16 %v354
  %v371 = vunpack.c.l.b16 %v355
  %v372 = vunpack.c.l.b16 %v356
  %v373 = vunpack.c.l.b16 %v357
  %v374 = vunpack.c.l.b16 %v358
  %v375 = vunpack.c.l.b16 %v359
  %v376 = vpack.c.b16 %v369, %v368
  %v377 = vpack.c.b16 %v371, %v370
  %v378 = vpack.c.b16 %v373, %v372
  %v379 = vpack.c.b16 %v375, %v374
  %384 = vst [vmem:[%s2] sm:$0xff] %v376
  %385 = vst [vmem:[%s2 + $0x8] sm:$0xff] %v377
  %386 = vst [vmem:[%s2 + $0x10] sm:$0xff] %v378
  %387 = vst [vmem:[%s2 + $0x18] sm:$0xff] %v379
  // Predicated region
  $region10: #{generator_forward.9} parent=0 // pred_check
    _
  $region11: #{generator_forward.9} parent=0 // pred_check_branch
    %389 = sbr.rel (0) target = $region13
  $region12: #{generator_forward.9} parent=0 // pred_region
    _
  $region13: #{generator_forward.9} parent=0 // pred_fallthru
    _
  // Predicated region
  $region14: #{generator_forward.9} parent=0 // pred_check
    _
  $region15: #{generator_forward.9} parent=0 // pred_check_branch
    %391 = sbr.rel (0) target = $region17
  $region16: #{generator_forward.9} parent=0 // pred_region
    _
  $region17: #{generator_forward.9} parent=0 // pred_fallthru
    _
  // Predicated region
  $region18: #{generator_forward.9} parent=0 // pred_check
    _
  $region19: #{generator_forward.9} parent=0 // pred_check_branch
    %393 = sbr.rel (0) target = $region21
  $region20: #{generator_forward.9} parent=0 // pred_region
    _
  $region21: #{generator_forward.9} parent=0 // pred_fallthru
    _
  // Predicated region
  $region22: #{generator_forward.9} parent=0 // pred_check
    _
  $region23: #{generator_forward.9} parent=0 // pred_check_branch
    %395 = sbr.rel (0) target = $region25
  $region24: #{generator_forward.9} parent=0 // pred_region
    _
  $region25: #{generator_forward.9} parent=0 // pred_fallthru
    _
  // Predicated region
  $region26: #{generator_forward.9} parent=0 // pred_check
    _
  $region27: #{generator_forward.9} parent=0 // pred_check_branch
    %397 = sbr.rel (0) target = $region29
  $region28: #{generator_forward.9} parent=0 // pred_region
    _
  $region29: #{generator_forward.9} parent=0 // pred_fallthru
    _
  // Predicated region
  $region30: #{generator_forward.9} parent=0 // pred_check
    _
  $region31: #{generator_forward.9} parent=0 // pred_check_branch
    %399 = sbr.rel (0) target = $region33
  $region32: #{generator_forward.9} parent=0 // pred_region
    _
  $region33: #{generator_forward.9} parent=0 // pred_fallthru
    _

// kernel: generator_forward.10
$region0: #{generator_forward.10}
  #allocation0 [shape = 'u32[]', space=smem, size = 0x4, offset = 0x4, fixed_abs, tag = 'smem constant byte address 0x4 - core index']
  #allocation1 [shape = 'u32[144,128]{1,0:T(1,128)}', space=vmem, size = 0x12000, scoped, tag = 'internal scratch']
  %s0 = inlined_call_operand.vmem [shape: bf16[8,1024], index: 0, kind: input, shape index: {}]
  %s1 = inlined_call_operand.vmem [shape: f32[1,1024], index: 1, kind: input, shape index: {}]
  %s2 = inlined_call_operand.vmem [shape: f32[1,1024], index: 2, kind: input, shape index: {}]
  %s3 = inlined_call_operand.vmem [shape: bf16[8,1024], index: 3, kind: output, shape index: {}]
  %s4 = sld [smem:[#allocation0]]
  $region22: #{generator_forward.10} parent=0
    _
  %s6 = ssub.s32 1, %s4
  %s7 = scalar_select 0, %s6, %s4
  // Predicated region
  $region2: #{generator_forward.10} parent=0 // pred_check
    _
  $region3: #{generator_forward.10} parent=0 // pred_check_branch
    %9 = sbr.rel (0) target = $region5
  $region4: #{generator_forward.10} parent=0 // pred_region
    _
  $region5: #{generator_forward.10} parent=0 // pred_fallthru
    _
  // Predicated region
  $region6: #{generator_forward.10} parent=0 // pred_check
    _
  $region7: #{generator_forward.10} parent=0 // pred_check_branch
    %11 = sbr.rel (0) target = $region9
  $region8: #{generator_forward.10} parent=0 // pred_region
    _
  $region9: #{generator_forward.10} parent=0 // pred_fallthru
    _
  // Predicated region
  $region10: #{generator_forward.10} parent=0 // pred_check
    _
  $region11: #{generator_forward.10} parent=0 // pred_check_branch
    %13 = sbr.rel (0) target = $region13
  $region12: #{generator_forward.10} parent=0 // pred_region
    _
  $region13: #{generator_forward.10} parent=0 // pred_fallthru
    _
  %v14 = vld [vmem:[%s0] sm:$0xff]
  %v15 = vld [vmem:[%s0 + $0x8] sm:$0xff]
  %v16 = vld [vmem:[%s0 + $0x10] sm:$0xff]
  %v17 = vld [vmem:[%s0 + $0x18] sm:$0xff]
  %v18 = vunpack.c.l.bf16 %v14
  %v19 = vunpack.c.h.bf16 %v14
  %v20 = vunpack.c.l.bf16 %v15
  %v21 = vunpack.c.h.bf16 %v15
  %v22 = vunpack.c.l.bf16 %v16
  %v23 = vunpack.c.h.bf16 %v16
  %v24 = vunpack.c.l.bf16 %v17
  %v25 = vunpack.c.h.bf16 %v17
  %v26 = vld [vmem:[%s1] sm:$0xff]
  %v28 = vlaneseq
  %v29 = vshrl.u32 %v28, 7
  %v30 = vsub.s32 0, %v29
  %v31 = vrot.slane %v26, %v30
  %v32 = vlaneseq
  %v33 = vshrl.u32 %v32, 7
  %v34 = vsub.s32 1, %v33
  %v35 = vrot.slane %v26, %v34
  %v36 = vlaneseq
  %v37 = vshrl.u32 %v36, 7
  %v38 = vsub.s32 2, %v37
  %v39 = vrot.slane %v26, %v38
  %v40 = vlaneseq
  %v41 = vshrl.u32 %v40, 7
  %v42 = vsub.s32 3, %v41
  %v43 = vrot.slane %v26, %v42
  %v44 = vlaneseq
  %v45 = vshrl.u32 %v44, 7
  %v46 = vsub.s32 4, %v45
  %v47 = vrot.slane %v26, %v46
  %v48 = vlaneseq
  %v49 = vshrl.u32 %v48, 7
  %v50 = vsub.s32 5, %v49
  %v51 = vrot.slane %v26, %v50
  %v52 = vlaneseq
  %v53 = vshrl.u32 %v52, 7
  %v54 = vsub.s32 6, %v53
  %v55 = vrot.slane %v26, %v54
  %v56 = vlaneseq
  %v57 = vshrl.u32 %v56, 7
  %v58 = vsub.s32 7, %v57
  %v59 = vrot.slane %v26, %v58
  %v68 = vmul.f32 %v18, %v31
  %v69 = vmul.f32 %v19, %v35
  %v70 = vmul.f32 %v20, %v39
  %v71 = vmul.f32 %v21, %v43
  %v72 = vmul.f32 %v22, %v47
  %v73 = vmul.f32 %v23, %v51
  %v74 = vmul.f32 %v24, %v55
  %v75 = vmul.f32 %v25, %v59
  %v76 = vld [vmem:[%s2] sm:$0xff]
  %v78 = vlaneseq
  %v79 = vshrl.u32 %v78, 7
  %v80 = vsub.s32 0, %v79
  %v81 = vrot.slane %v76, %v80
  %v82 = vlaneseq
  %v83 = vshrl.u32 %v82, 7
  %v84 = vsub.s32 1, %v83
  %v85 = vrot.slane %v76, %v84
  %v86 = vlaneseq
  %v87 = vshrl.u32 %v86, 7
  %v88 = vsub.s32 2, %v87
  %v89 = vrot.slane %v76, %v88
  %v90 = vlaneseq
  %v91 = vshrl.u32 %v90, 7
  %v92 = vsub.s32 3, %v91
  %v93 = vrot.slane %v76, %v92
  %v94 = vlaneseq
  %v95 = vshrl.u32 %v94, 7
  %v96 = vsub.s32 4, %v95
  %v97 = vrot.slane %v76, %v96
  %v98 = vlaneseq
  %v99 = vshrl.u32 %v98, 7
  %v100 = vsub.s32 5, %v99
  %v101 = vrot.slane %v76, %v100
  %v102 = vlaneseq
  %v103 = vshrl.u32 %v102, 7
  %v104 = vsub.s32 6, %v103
  %v105 = vrot.slane %v76, %v104
  %v106 = vlaneseq
  %v107 = vshrl.u32 %v106, 7
  %v108 = vsub.s32 7, %v107
  %v109 = vrot.slane %v76, %v108
  %v118 = vadd.f32 %v68, %v81
  %v119 = vadd.f32 %v69, %v85
  %v120 = vadd.f32 %v70, %v89
  %v121 = vadd.f32 %v71, %v93
  %v122 = vadd.f32 %v72, %v97
  %v123 = vadd.f32 %v73, %v101
  %v124 = vadd.f32 %v74, %v105
  %v125 = vadd.f32 %v75, %v109
  %v126 = vmax.f32 %v118, 0.0
  %v127 = vmax.f32 %v119, 0.0
  %v128 = vmax.f32 %v120, 0.0
  %v129 = vmax.f32 %v121, 0.0
  %v130 = vmax.f32 %v122, 0.0
  %v131 = vmax.f32 %v123, 0.0
  %v132 = vmax.f32 %v124, 0.0
  %v133 = vmax.f32 %v125, 0.0
  %v134 = vpack.c.bf16 %v126, %v126
  %v135 = vpack.c.bf16 %v127, %v127
  %v136 = vpack.c.bf16 %v128, %v128
  %v137 = vpack.c.bf16 %v129, %v129
  %v138 = vpack.c.bf16 %v130, %v130
  %v139 = vpack.c.bf16 %v131, %v131
  %v140 = vpack.c.bf16 %v132, %v132
  %v141 = vpack.c.bf16 %v133, %v133
  %v150 = vunpack.c.l.b16 %v134
  %v151 = vunpack.c.l.b16 %v135
  %v152 = vunpack.c.l.b16 %v136
  %v153 = vunpack.c.l.b16 %v137
  %v154 = vunpack.c.l.b16 %v138
  %v155 = vunpack.c.l.b16 %v139
  %v156 = vunpack.c.l.b16 %v140
  %v157 = vunpack.c.l.b16 %v141
  %v158 = vpack.c.b16 %v151, %v150
  %v159 = vpack.c.b16 %v153, %v152
  %v160 = vpack.c.b16 %v155, %v154
  %v161 = vpack.c.b16 %v157, %v156
  %166 = vst [vmem:[%s3] sm:$0xff] %v158
  %167 = vst [vmem:[%s3 + $0x8] sm:$0xff] %v159
  %168 = vst [vmem:[%s3 + $0x10] sm:$0xff] %v160
  %169 = vst [vmem:[%s3 + $0x18] sm:$0xff] %v161
  // Predicated region
  $region14: #{generator_forward.10} parent=0 // pred_check
    _
  $region15: #{generator_forward.10} parent=0 // pred_check_branch
    %171 = sbr.rel (0) target = $region17
  $region16: #{generator_forward.10} parent=0 // pred_region
    _
  $region17: #{generator_forward.10} parent=0 // pred_fallthru
    _
  // Predicated region
  $region18: #{generator_forward.10} parent=0 // pred_check
    _
  $region19: #{generator_forward.10} parent=0 // pred_check_branch
    %173 = sbr.rel (0) target = $region21
  $region20: #{generator_forward.10} parent=0 // pred_region
    _
  $region21: #{generator_forward.10} parent=0 // pred_fallthru
    _

// kernel: tile.57
$region0: #{tile.57}
  #allocation0 [shape = 's32[1]{0}', space=sflag, size = 0x4, scoped, tag = 'scoped memory for tile.57']
  %s0 = inlined_call_operand.vmem [shape: f32[32], index: 0, kind: input, shape index: {}]
  %s1 = inlined_call_operand.vmem [shape: f32[4,32], index: 1, kind: output, shape index: {}]
  // Predicated region
  $region2: #{tile.57} parent=0 // pred_check
    _
  $region3: #{tile.57} parent=0 // pred_check_branch
    %3 = sbr.rel (0) target = $region5
  $region4: #{tile.57} parent=0 // pred_region
    _
  $region5: #{tile.57} parent=0 // pred_fallthru
    _
  %v4 = vld [vmem:[%s0] ss:$0 sm:$0xff]
  %5 = vst [vmem:[%s1] sm:$0xf] %v4

// kernel: tile.59
$region0: #{tile.59}
  %s0 = inlined_call_operand.vmem [shape: f32[4,32], index: 0, kind: input, shape index: {}]
  %s1 = inlined_call_operand.vmem [shape: f32[1,128], index: 1, kind: output, shape index: {}]
  $region1: #{tile.59} parent=0
    #allocation0 [shape = 'u8[4096]{0}', space=vmem, size = 0x1000, scoped, tag = 'scoped mem for output reshape']
    #allocation1 [shape = 'u8[4096]{0}', space=vmem, size = 0x1000, scoped, tag = 'scoped mem for input reshape']
    %s3 = sshll.u32 1, 4
    %s4 = ssub.s32 %s3, 1
    %v5 = vld [vmem:[%s0] sm:%s4]
    %6 = vst [vmem:[#allocation1] sm:%s4] %v5
    %v7 = vld [vmem:[#allocation1] sm:$0x1]
    %vm8 = vcmask 261120
    %9 = vst.msk [vmem:[#allocation0] sm:$0x1] %vm8, %v7
    %s10 = scalar_lea.vmem [#allocation1], 3
    %v11 = vld [vmem:[%s10] sm:$0x1]
    %12 = vrot.lane.b32.xlu0 %v11, 96
    %v13 = vpop.permute.xlu0 %12
    %vm14 = vcmask 1048320
    %15 = vst.msk [vmem:[#allocation0] sm:$0x1] %vm14, %v13
    %s16 = scalar_lea.vmem [#allocation1], 2
    %v17 = vld [vmem:[%s16] sm:$0x1]
    %18 = vrot.lane.b32.xlu0 %v17, 64
    %v19 = vpop.permute.xlu0 %18
    %vm20 = vcmask 785920
    %21 = vst.msk [vmem:[#allocation0] sm:$0x1] %vm20, %v19
    %s22 = scalar_lea.vmem [#allocation1], 1
    %v23 = vld [vmem:[%s22] sm:$0x1]
    %24 = vrot.lane.b32.xlu0 %v23, 32
    %v25 = vpop.permute.xlu0 %24
    %vm26 = vcmask 523520
    %27 = vst.msk [vmem:[#allocation0] sm:$0x1] %vm26, %v25
    %s29 = sshll.u32 1, 1
    %s30 = ssub.s32 %s29, 1
    %v32 = vld [vmem:[#allocation0] sm:%s30]
    %s33 = sshll.u32 1, 1
    %s34 = ssub.s32 %s33, 1
    %35 = vst [vmem:[%s1] sm:%s34] %v32

// kernel: generator_forward.12
$region0: #{generator_forward.12}
  #allocation0 [shape = 'u32[]', space=smem, size = 0x4, offset = 0x4, fixed_abs, tag = 'smem constant byte address 0x4 - core index']
  #allocation1 [shape = 'u32[144,128]{1,0:T(1,128)}', space=vmem, size = 0x12000, scoped, tag = 'internal scratch']
  %s0 = inlined_call_operand.vmem [shape: bf16[32,128], index: 0, kind: input, shape index: {}]
  %s1 = inlined_call_operand.vmem [shape: f32[1,128], index: 1, kind: input, shape index: {}]
  %s2 = inlined_call_operand.vmem [shape: f32[1,128], index: 2, kind: input, shape index: {}]
  %s3 = inlined_call_operand.vmem [shape: bf16[32,128], index: 3, kind: output, shape index: {}]
  %s4 = sld [smem:[#allocation0]]
  $region45: #{generator_forward.12} parent=0
    _
  %s6 = ssub.s32 1, %s4
  %s7 = scalar_select 0, %s6, %s4
  loop: start=0, step=1, limit=4
  $region2: #{generator_forward.12} parent=0 // loop_pre_header
    _
  $region3: #{generator_forward.12} parent=0 // loop_header
    %s9 = sphi 0, %s13
    %p10 = scmp.ge.s32.totalorder %s9, 4
    %s19 = sphi 0, %s21
    %s22 = sphi 0, %s19
    %s23 = sphi 0, %s22
    %s39 = sphi 0, %s23
    %s43 = sphi 0, %s43
    %s45 = sphi 0, %s43
    %s46 = sphi 0, %s45
    %s60 = sphi 0, %s46
    %s64 = sphi 0, %s64
    %s66 = sphi 0, %s64
    %s67 = sphi 0, %s66
    %s81 = sphi 0, %s67
    %s87 = sphi 0, %s89
    %s90 = sphi 0, %s87
    %s91 = sphi 0, %s90
    %s107 = sphi 0, %s91
  $region4: #{generator_forward.12} parent=0 // loop_header_branch
    %12 = sbr.rel (%p10) target = $region8
  $region5: #{generator_forward.12} parent=0 // loop_body
    %s14 = ssub.s32 %s9, 1
    %s15 = ssub.s32 %s9, 2
    %s16 = sadd.s32 %s9, 1
    %s17 = ssub.s32 %s9, %s16
    %p18 = scmp.eq.s32.totalorder %s17, 0
    %s20 = sadd.s32 %s19, 1
    %s21 = scalar_select %p18, %s19, %s20
    %p24 = pneg %p18
    %p25 = scmp.eq.s32.totalorder %s9, 1
    %p26 = por %p24, %p25
    %p27 = scmp.ne.s32.totalorder %s19, %s22
    %p28 = scmp.eq.s32.totalorder %s9, 0
    %p29 = por %p27, %p28
    %p30 = scmp.ne.s32.totalorder %s19, %s22
    %p31 = scmp.eq.s32.totalorder %s14, 1
    %p32 = por %p30, %p31
    %p33 = scmp.ne.s32.totalorder %s22, %s23
    %p34 = scmp.eq.s32.totalorder %s14, 0
    %p35 = por %p33, %p34
    %p36 = scmp.ne.s32.totalorder %s22, %s23
    %p37 = scmp.eq.s32.totalorder %s15, 1
    %p38 = por %p36, %p37
    %p40 = scmp.ne.s32.totalorder %s23, %s39
    %p41 = scmp.eq.s32.totalorder %s15, 0
    %p42 = por %p40, %p41
    %s44 = sadd.s32 %s43, 1
    %p47 = scmp.eq.s32.totalorder %s9, 1
    %p48 = scmp.ne.s32.totalorder %s43, %s45
    %p49 = scmp.eq.s32.totalorder %s9, 0
    %p50 = por %p48, %p49
    %p51 = scmp.ne.s32.totalorder %s43, %s45
    %p52 = scmp.eq.s32.totalorder %s14, 1
    %p53 = por %p51, %p52
    %p54 = scmp.ne.s32.totalorder %s45, %s46
    %p55 = scmp.eq.s32.totalorder %s14, 0
    %p56 = por %p54, %p55
    %p57 = scmp.ne.s32.totalorder %s45, %s46
    %p58 = scmp.eq.s32.totalorder %s15, 1
    %p59 = por %p57, %p58
    %p61 = scmp.ne.s32.totalorder %s46, %s60
    %p62 = scmp.eq.s32.totalorder %s15, 0
    %p63 = por %p61, %p62
    %s65 = sadd.s32 %s64, 1
    %p68 = scmp.eq.s32.totalorder %s9, 1
    %p69 = scmp.ne.s32.totalorder %s64, %s66
    %p70 = scmp.eq.s32.totalorder %s9, 0
    %p71 = por %p69, %p70
    %p72 = scmp.ne.s32.totalorder %s64, %s66
    %p73 = scmp.eq.s32.totalorder %s14, 1
    %p74 = por %p72, %p73
    %p75 = scmp.ne.s32.totalorder %s66, %s67
    %p76 = scmp.eq.s32.totalorder %s14, 0
    %p77 = por %p75, %p76
    %p78 = scmp.ne.s32.totalorder %s66, %s67
    %p79 = scmp.eq.s32.totalorder %s15, 1
    %p80 = por %p78, %p79
    %p82 = scmp.ne.s32.totalorder %s67, %s81
    %p83 = scmp.eq.s32.totalorder %s15, 0
    %p84 = por %p82, %p83
    %s85 = ssub.s32 %s9, %s16
    %p86 = scmp.eq.s32.totalorder %s85, 0
    %s88 = sadd.s32 %s87, 1
    %s89 = scalar_select %p86, %s87, %s88
    %p92 = pneg %p86
    %p93 = scmp.eq.s32.totalorder %s9, 1
    %p94 = por %p92, %p93
    %p95 = scmp.ne.s32.totalorder %s87, %s90
    %p96 = scmp.eq.s32.totalorder %s9, 0
    %p97 = por %p95, %p96
    %p98 = scmp.ne.s32.totalorder %s87, %s90
    %p99 = scmp.eq.s32.totalorder %s14, 1
    %p100 = por %p98, %p99
    %p101 = scmp.ne.s32.totalorder %s90, %s91
    %p102 = scmp.eq.s32.totalorder %s14, 0
    %p103 = por %p101, %p102
    %p104 = scmp.ne.s32.totalorder %s90, %s91
    %p105 = scmp.eq.s32.totalorder %s15, 1
    %p106 = por %p104, %p105
    %p108 = scmp.ne.s32.totalorder %s91, %s107
    %p109 = scmp.eq.s32.totalorder %s15, 0
    %p110 = por %p108, %p109
    %p111 = scmp.le.s32.totalorder 1, %s9
    %p112 = scmp.lt.s32.totalorder %s9, 3
    %p113 = pnand %p111, %p112
    %p114 = pneg %p113
    // Predicated region
    $region9: #{generator_forward.12} parent=5 // pred_check
      _
    $region10: #{generator_forward.12} parent=5 // pred_check_branch
      %116 = sbr.rel (%p113) target = $region12
    $region11: #{generator_forward.12} parent=5 // pred_region
      %s117 = ssub.s32 %s9, 1
      // Predicated region
      $region13: #{generator_forward.12} parent=11 // pred_check
        %p118 = pneg %p56
      $region14: #{generator_forward.12} parent=11 // pred_check_branch
        %120 = sbr.rel (%p118) target = $region16
      $region15: #{generator_forward.12} parent=11 // pred_region
        _
      $region16: #{generator_forward.12} parent=11 // pred_fallthru
        _
      // Predicated region
      $region17: #{generator_forward.12} parent=11 // pred_check
        %p121 = pneg %p77
      $region18: #{generator_forward.12} parent=11 // pred_check_branch
        %123 = sbr.rel (%p121) target = $region20
      $region19: #{generator_forward.12} parent=11 // pred_region
        _
      $region20: #{generator_forward.12} parent=11 // pred_fallthru
        _
    $region12: #{generator_forward.12} parent=5 // pred_fallthru
      _
    %p124 = scmp.lt.s32.totalorder %s9, 2
    // Predicated region
    $region21: #{generator_forward.12} parent=5 // pred_check
      %p125 = pneg %p124
    $region22: #{generator_forward.12} parent=5 // pred_check_branch
      %127 = sbr.rel (%p125) target = $region24
    $region23: #{generator_forward.12} parent=5 // pred_region
      // Predicated region
      $region25: #{generator_forward.12} parent=23 // pred_check
        %p128 = pneg %p29
      $region26: #{generator_forward.12} parent=23 // pred_check_branch
        %130 = sbr.rel (%p128) target = $region28
      $region27: #{generator_forward.12} parent=23 // pred_region
        %s131 = smul.u32 2, %s9
        %p132 = scmp.lt.s32.totalorder %s131, 3
        %s133 = scalar_select %p132, %s131, 3
        %s134 = smul.addr %s133, 4
        %s135 = scalar_lea.vmem %s0, %s134
        %s136 = smul.u32 2, %s9
      $region28: #{generator_forward.12} parent=23 // pred_fallthru
        _
    $region24: #{generator_forward.12} parent=5 // pred_fallthru
      _
    %p137 = scmp.le.s32.totalorder 1, %s9
    %p138 = scmp.lt.s32.totalorder %s9, 3
    %p139 = pnand %p137, %p138
    %p140 = pneg %p139
    // Predicated region
    $region29: #{generator_forward.12} parent=5 // pred_check
      _
    $region30: #{generator_forward.12} parent=5 // pred_check_branch
      %142 = sbr.rel (%p139) target = $region32
    $region31: #{generator_forward.12} parent=5 // pred_region
      %s143 = ssub.s32 %s9, 1
      %s144 = smul.u32 2, %s14
      %p145 = scmp.lt.s32.totalorder %s144, 3
      %s146 = scalar_select %p145, %s144, 3
      %s147 = smul.addr %s146, 4
      %s148 = scalar_lea.vmem %s0, %s147
      %p149 = pneg %p35
      %p150 = pneg %p32
      %p151 = pneg %p56
      %p152 = pneg %p53
      %p153 = pneg %p77
      %p154 = pneg %p74
      %p155 = pneg %p103
      %p156 = pneg %p100
      %s157 = smul.u32 2, %s14
      %p158 = scmp.lt.s32.totalorder %s157, 3
      %s159 = scalar_select %p158, %s157, 3
      %s160 = smul.addr %s159, 4
      %s161 = scalar_lea.vmem %s3, %s160
      %s162 = smul.u32 2, %s14
      %p163 = scmp.lt.s32.totalorder %s162, 3
      %s164 = scalar_select %p163, %s162, 3
      %s165 = smul.addr %s164, 4
      %s166 = scalar_lea.vmem %s0, %s165
      %s167 = smul.u32 2, %s14
      %s168 = smul.u32 2, %s14
      %p169 = scmp.lt.s32.totalorder %s168, 3
      %s170 = scalar_select %p169, %s168, 3
      %s171 = smul.addr %s170, 4
      %s172 = scalar_lea.vmem %s3, %s171
      %s173 = smul.u32 2, %s14
      %v174 = vld [vmem:[%s166] sm:$0xf]
      %v175 = vld [vmem:[%s166 + $0x4] sm:$0xf]
      %v176 = vunpack.c.l.bf16 %v174
      %v177 = vunpack.c.l.bf16 %v175
      %v178 = vld [vmem:[%s1] sm:$0x1]
      %v180 = vlaneseq
      %v181 = vshrl.u32 %v180, 7
      %v182 = vsub.s32 0, %v181
      %v183 = vrot.slane %v178, %v182
      %v185 = vmul.f32 %v176, %v183
      %v186 = vmul.f32 %v177, %v183
      %v187 = vld [vmem:[%s2] sm:$0x1]
      %v189 = vlaneseq
      %v190 = vshrl.u32 %v189, 7
      %v191 = vsub.s32 0, %v190
      %v192 = vrot.slane %v187, %v191
      %v194 = vadd.f32 %v185, %v192
      %v195 = vadd.f32 %v186, %v192
      %v196 = vmax.f32 %v194, 0.0
      %v197 = vmax.f32 %v195, 0.0
      %v198 = vpack.c.bf16 %v197, %v196
      %v200 = vunpack.c.l.b16 %v198
      %v201 = vunpack.c.h.b16 %v198
      %v202 = vpack.c.b16 %v200, %v200
      %v203 = vpack.c.b16 %v201, %v201
      %206 = vst [vmem:[%s172] sm:$0xf] %v202
      %207 = vst [vmem:[%s172 + $0x4] sm:$0xf] %v203
      %s208 = smul.u32 2, %s14
      %p209 = scmp.lt.s32.totalorder %s208, 3
      %s210 = scalar_select %p209, %s208, 3
      %s211 = smul.addr %s210, 4
      %s212 = scalar_lea.vmem %s3, %s211
      // Predicated region
      $region33: #{generator_forward.12} parent=31 // pred_check
        %p213 = pneg %p100
      $region34: #{generator_forward.12} parent=31 // pred_check_branch
        %215 = sbr.rel (%p213) target = $region36
      $region35: #{generator_forward.12} parent=31 // pred_region
        %s216 = smul.u32 2, %s14
      $region36: #{generator_forward.12} parent=31 // pred_fallthru
        _
    $region32: #{generator_forward.12} parent=5 // pred_fallthru
      _
    %p217 = scmp.le.s32.totalorder 2, %s9
    // Predicated region
    $region37: #{generator_forward.12} parent=5 // pred_check
      %p218 = pneg %p217
    $region38: #{generator_forward.12} parent=5 // pred_check_branch
      %220 = sbr.rel (%p218) target = $region40
    $region39: #{generator_forward.12} parent=5 // pred_region
      %s221 = ssub.s32 %s9, 2
      // Predicated region
      $region41: #{generator_forward.12} parent=39 // pred_check
        %p222 = pneg %p106
      $region42: #{generator_forward.12} parent=39 // pred_check_branch
        %224 = sbr.rel (%p222) target = $region44
      $region43: #{generator_forward.12} parent=39 // pred_region
        %s225 = smul.u32 2, %s15
        %p226 = scmp.lt.s32.totalorder %s225, 3
        %s227 = scalar_select %p226, %s225, 3
        %s228 = smul.addr %s227, 4
        %s229 = scalar_lea.vmem %s3, %s228
      $region44: #{generator_forward.12} parent=39 // pred_fallthru
        _
    $region40: #{generator_forward.12} parent=5 // pred_fallthru
      _
  $region6: #{generator_forward.12} parent=0 // loop_footer
    %s13 = sadd.s32 1, %s9
  $region7: #{generator_forward.12} parent=0 // loop_footer_branch
    %8 = sbr.rel target = $region3
  $region8: #{generator_forward.12} parent=0 // loop_exit
    _

// kernel: generator_forward.11
$region0: #{generator_forward.11}
  #allocation0 [shape = 'u32[]', space=smem, size = 0x4, offset = 0x4, fixed_abs, tag = 'smem constant byte address 0x4 - core index']
  #allocation1 [shape = 'u32[144,128]{1,0:T(1,128)}', space=vmem, size = 0x12000, scoped, tag = 'internal scratch']
  %s0 = inlined_call_operand.vmem [shape: bf16[32,576], index: 0, kind: input, shape index: {}]
  %s1 = inlined_call_operand.vmem [shape: bf16[576,128], index: 1, kind: input, shape index: {}]
  %s2 = inlined_call_operand.vmem [shape: bf16[32,128], index: 2, kind: output, shape index: {0}]
  %s3 = inlined_call_operand.vmem [shape: f32[16,128], index: 3, kind: output, shape index: {1}]
  %s4 = inlined_call_operand.vmem [shape: f32[16,128], index: 4, kind: output, shape index: {2}]
  %5 = xla_tuple %s2, %s3, %s4
  %s6 = sld [smem:[#allocation0]]
  $region57: #{generator_forward.11} parent=0
    _
  %s8 = ssub.s32 1, %s6
  %s9 = scalar_select 0, %s8, %s6
  loop: start=0, step=1, limit=4
  $region2: #{generator_forward.11} parent=0 // loop_pre_header
    _
  $region3: #{generator_forward.11} parent=0 // loop_header
    %s11 = sphi 0, %s15
    %p12 = scmp.ge.s32.totalorder %s11, 4
    %s21 = sphi 0, %s23
    %s24 = sphi 0, %s21
    %s25 = sphi 0, %s24
    %s41 = sphi 0, %s25
    %s45 = sphi 0, %s45
    %s47 = sphi 0, %s45
    %s48 = sphi 0, %s47
    %s62 = sphi 0, %s48
    %s68 = sphi 0, %s70
    %s71 = sphi 0, %s68
    %s72 = sphi 0, %s71
    %s88 = sphi 0, %s72
    %s94 = sphi 0, %s96
    %s97 = sphi 0, %s94
    %s98 = sphi 0, %s97
    %s114 = sphi 0, %s98
    %s120 = sphi 0, %s122
    %s123 = sphi 0, %s120
    %s124 = sphi 0, %s123
    %s140 = sphi 0, %s124
  $region4: #{generator_forward.11} parent=0 // loop_header_branch
    %14 = sbr.rel (%p12) target = $region8
  $region5: #{generator_forward.11} parent=0 // loop_body
    %s16 = ssub.s32 %s11, 1
    %s17 = ssub.s32 %s11, 2
    %s18 = sadd.s32 %s11, 1
    %s19 = ssub.s32 %s11, %s18
    %p20 = scmp.eq.s32.totalorder %s19, 0
    %s22 = sadd.s32 %s21, 1
    %s23 = scalar_select %p20, %s21, %s22
    %p26 = pneg %p20
    %p27 = scmp.eq.s32.totalorder %s11, 1
    %p28 = por %p26, %p27
    %p29 = scmp.ne.s32.totalorder %s21, %s24
    %p30 = scmp.eq.s32.totalorder %s11, 0
    %p31 = por %p29, %p30
    %p32 = scmp.ne.s32.totalorder %s21, %s24
    %p33 = scmp.eq.s32.totalorder %s16, 1
    %p34 = por %p32, %p33
    %p35 = scmp.ne.s32.totalorder %s24, %s25
    %p36 = scmp.eq.s32.totalorder %s16, 0
    %p37 = por %p35, %p36
    %p38 = scmp.ne.s32.totalorder %s24, %s25
    %p39 = scmp.eq.s32.totalorder %s17, 1
    %p40 = por %p38, %p39
    %p42 = scmp.ne.s32.totalorder %s25, %s41
    %p43 = scmp.eq.s32.totalorder %s17, 0
    %p44 = por %p42, %p43
    %s46 = sadd.s32 %s45, 1
    %p49 = scmp.eq.s32.totalorder %s11, 1
    %p50 = scmp.ne.s32.totalorder %s45, %s47
    %p51 = scmp.eq.s32.totalorder %s11, 0
    %p52 = por %p50, %p51
    %p53 = scmp.ne.s32.totalorder %s45, %s47
    %p54 = scmp.eq.s32.totalorder %s16, 1
    %p55 = por %p53, %p54
    %p56 = scmp.ne.s32.totalorder %s47, %s48
    %p57 = scmp.eq.s32.totalorder %s16, 0
    %p58 = por %p56, %p57
    %p59 = scmp.ne.s32.totalorder %s47, %s48
    %p60 = scmp.eq.s32.totalorder %s17, 1
    %p61 = por %p59, %p60
    %p63 = scmp.ne.s32.totalorder %s48, %s62
    %p64 = scmp.eq.s32.totalorder %s17, 0
    %p65 = por %p63, %p64
    %s66 = ssub.s32 %s11, %s18
    %p67 = scmp.eq.s32.totalorder %s66, 0
    %s69 = sadd.s32 %s68, 1
    %s70 = scalar_select %p67, %s68, %s69
    %p73 = pneg %p67
    %p74 = scmp.eq.s32.totalorder %s11, 1
    %p75 = por %p73, %p74
    %p76 = scmp.ne.s32.totalorder %s68, %s71
    %p77 = scmp.eq.s32.totalorder %s11, 0
    %p78 = por %p76, %p77
    %p79 = scmp.ne.s32.totalorder %s68, %s71
    %p80 = scmp.eq.s32.totalorder %s16, 1
    %p81 = por %p79, %p80
    %p82 = scmp.ne.s32.totalorder %s71, %s72
    %p83 = scmp.eq.s32.totalorder %s16, 0
    %p84 = por %p82, %p83
    %p85 = scmp.ne.s32.totalorder %s71, %s72
    %p86 = scmp.eq.s32.totalorder %s17, 1
    %p87 = por %p85, %p86
    %p89 = scmp.ne.s32.totalorder %s72, %s88
    %p90 = scmp.eq.s32.totalorder %s17, 0
    %p91 = por %p89, %p90
    %s92 = ssub.s32 %s11, %s18
    %p93 = scmp.eq.s32.totalorder %s92, 0
    %s95 = sadd.s32 %s94, 1
    %s96 = scalar_select %p93, %s94, %s95
    %p99 = pneg %p93
    %p100 = scmp.eq.s32.totalorder %s11, 1
    %p101 = por %p99, %p100
    %p102 = scmp.ne.s32.totalorder %s94, %s97
    %p103 = scmp.eq.s32.totalorder %s11, 0
    %p104 = por %p102, %p103
    %p105 = scmp.ne.s32.totalorder %s94, %s97
    %p106 = scmp.eq.s32.totalorder %s16, 1
    %p107 = por %p105, %p106
    %p108 = scmp.ne.s32.totalorder %s97, %s98
    %p109 = scmp.eq.s32.totalorder %s16, 0
    %p110 = por %p108, %p109
    %p111 = scmp.ne.s32.totalorder %s97, %s98
    %p112 = scmp.eq.s32.totalorder %s17, 1
    %p113 = por %p111, %p112
    %p115 = scmp.ne.s32.totalorder %s98, %s114
    %p116 = scmp.eq.s32.totalorder %s17, 0
    %p117 = por %p115, %p116
    %s118 = ssub.s32 %s11, %s18
    %p119 = scmp.eq.s32.totalorder %s118, 0
    %s121 = sadd.s32 %s120, 1
    %s122 = scalar_select %p119, %s120, %s121
    %p125 = pneg %p119
    %p126 = scmp.eq.s32.totalorder %s11, 1
    %p127 = por %p125, %p126
    %p128 = scmp.ne.s32.totalorder %s120, %s123
    %p129 = scmp.eq.s32.totalorder %s11, 0
    %p130 = por %p128, %p129
    %p131 = scmp.ne.s32.totalorder %s120, %s123
    %p132 = scmp.eq.s32.totalorder %s16, 1
    %p133 = por %p131, %p132
    %p134 = scmp.ne.s32.totalorder %s123, %s124
    %p135 = scmp.eq.s32.totalorder %s16, 0
    %p136 = por %p134, %p135
    %p137 = scmp.ne.s32.totalorder %s123, %s124
    %p138 = scmp.eq.s32.totalorder %s17, 1
    %p139 = por %p137, %p138
    %p141 = scmp.ne.s32.totalorder %s124, %s140
    %p142 = scmp.eq.s32.totalorder %s17, 0
    %p143 = por %p141, %p142
    %p144 = scmp.le.s32.totalorder 1, %s11
    %p145 = scmp.lt.s32.totalorder %s11, 3
    %p146 = pnand %p144, %p145
    %p147 = pneg %p146
    // Predicated region
    $region9: #{generator_forward.11} parent=5 // pred_check
      _
    $region10: #{generator_forward.11} parent=5 // pred_check_branch
      %149 = sbr.rel (%p146) target = $region12
    $region11: #{generator_forward.11} parent=5 // pred_region
      %s150 = ssub.s32 %s11, 1
      // Predicated region
      $region13: #{generator_forward.11} parent=11 // pred_check
        %p151 = pneg %p58
      $region14: #{generator_forward.11} parent=11 // pred_check_branch
        %153 = sbr.rel (%p151) target = $region16
      $region15: #{generator_forward.11} parent=11 // pred_region
        _
      $region16: #{generator_forward.11} parent=11 // pred_fallthru
        _
    $region12: #{generator_forward.11} parent=5 // pred_fallthru
      _
    %p154 = scmp.lt.s32.totalorder %s11, 2
    // Predicated region
    $region17: #{generator_forward.11} parent=5 // pred_check
      %p155 = pneg %p154
    $region18: #{generator_forward.11} parent=5 // pred_check_branch
      %157 = sbr.rel (%p155) target = $region20
    $region19: #{generator_forward.11} parent=5 // pred_region
      // Predicated region
      $region21: #{generator_forward.11} parent=19 // pred_check
        %p158 = pneg %p31
      $region22: #{generator_forward.11} parent=19 // pred_check_branch
        %160 = sbr.rel (%p158) target = $region24
      $region23: #{generator_forward.11} parent=19 // pred_region
        %s161 = smul.u32 2, %s11
        %p162 = scmp.lt.s32.totalorder %s161, 3
        %s163 = scalar_select %p162, %s161, 3
        %s164 = smul.addr %s163, 5
        %s165 = smul.addr %s164, 4
        %s166 = scalar_lea.vmem %s0, %s165
        %s167 = smul.u32 2, %s11
      $region24: #{generator_forward.11} parent=19 // pred_fallthru
        _
    $region20: #{generator_forward.11} parent=5 // pred_fallthru
      _
    %p168 = scmp.le.s32.totalorder 1, %s11
    %p169 = scmp.lt.s32.totalorder %s11, 3
    %p170 = pnand %p168, %p169
    %p171 = pneg %p170
    // Predicated region
    $region25: #{generator_forward.11} parent=5 // pred_check
      _
    $region26: #{generator_forward.11} parent=5 // pred_check_branch
      %173 = sbr.rel (%p170) target = $region28
    $region27: #{generator_forward.11} parent=5 // pred_region
      %s174 = ssub.s32 %s11, 1
      %s175 = smul.u32 2, %s16
      %p176 = scmp.lt.s32.totalorder %s175, 3
      %s177 = scalar_select %p176, %s175, 3
      %s178 = smul.addr %s177, 5
      %s179 = smul.addr %s178, 4
      %s180 = scalar_lea.vmem %s0, %s179
      %p181 = pneg %p37
      %p182 = pneg %p34
      %p183 = pneg %p58
      %p184 = pneg %p55
      %p185 = pneg %p84
      %p186 = pneg %p81
      %s187 = smul.u32 2, %s16
      %p188 = scmp.lt.s32.totalorder %s187, 3
      %s189 = scalar_select %p188, %s187, 3
      %s190 = smul.addr %s189, 4
      %s191 = scalar_lea.vmem %s2, %s190
      %p192 = pneg %p110
      %p193 = pneg %p107
      %p194 = scmp.lt.s32.totalorder %s16, 1
      %s195 = scalar_select %p194, %s16, 1
      %s196 = smul.addr %s195, 8
      %s197 = scalar_lea.vmem %s3, %s196
      %p198 = pneg %p136
      %p199 = pneg %p133
      %p200 = scmp.lt.s32.totalorder %s16, 1
      %s201 = scalar_select %p200, %s16, 1
      %s202 = smul.addr %s201, 8
      %s203 = scalar_lea.vmem %s4, %s202
      %s204 = smul.u32 2, %s16
      %p205 = scmp.lt.s32.totalorder %s204, 3
      %s206 = scalar_select %p205, %s204, 3
      %s207 = smul.addr %s206, 5
      %s208 = smul.addr %s207, 4
      %s209 = scalar_lea.vmem %s0, %s208
      %s210 = smul.u32 2, %s16
      %s211 = smul.u32 2, %s16
      %p212 = scmp.lt.s32.totalorder %s211, 3
      %s213 = scalar_select %p212, %s211, 3
      %s214 = smul.addr %s213, 4
      %s215 = scalar_lea.vmem %s2, %s214
      %s216 = smul.u32 2, %s16
      %p217 = scmp.lt.s32.totalorder %s16, 1
      %s218 = scalar_select %p217, %s16, 1
      %s219 = smul.addr %s218, 8
      %s220 = scalar_lea.vmem %s3, %s219
      %p221 = scmp.lt.s32.totalorder %s16, 1
      %s222 = scalar_select %p221, %s16, 1
      %s223 = smul.addr %s222, 8
      %s224 = scalar_lea.vmem %s4, %s223
      %v226 = vld [vmem:[%s209] sm:$0xff]
      %v227 = vld [vmem:[%s209 + $0x8] sm:$0xff]
      %v228 = vld [vmem:[%s209 + $0x10] sm:$0xf]
      %v229 = vld [vmem:[%s209 + $0x14] sm:$0xff]
      %v230 = vld [vmem:[%s209 + $0x1c] sm:$0xff]
      %v231 = vld [vmem:[%s209 + $0x24] sm:$0xf]
      %v232 = vld [vmem:[%s1] sm:$0xf]
      %v233 = vld [vmem:[%s1 + $0x4] sm:$0xf]
      %v234 = vld [vmem:[%s1 + $0x8] sm:$0xf]
      %v235 = vld [vmem:[%s1 + $0xc] sm:$0xf]
      %v236 = vld [vmem:[%s1 + $0x10] sm:$0xf]
      %v237 = vld [vmem:[%s1 + $0x14] sm:$0xf]
      %v238 = vld [vmem:[%s1 + $0x18] sm:$0xf]
      %v239 = vld [vmem:[%s1 + $0x1c] sm:$0xf]
      %v240 = vld [vmem:[%s1 + $0x20] sm:$0xf]
      %v241 = vld [vmem:[%s1 + $0x24] sm:$0xf]
      %v242 = vld [vmem:[%s1 + $0x28] sm:$0xf]
      %v243 = vld [vmem:[%s1 + $0x2c] sm:$0xf]
      %v244 = vld [vmem:[%s1 + $0x30] sm:$0xf]
      %v245 = vld [vmem:[%s1 + $0x34] sm:$0xf]
      %v246 = vld [vmem:[%s1 + $0x38] sm:$0xf]
      %v247 = vld [vmem:[%s1 + $0x3c] sm:$0xf]
      %v248 = vld [vmem:[%s1 + $0x40] sm:$0xf]
      %v249 = vld [vmem:[%s1 + $0x44] sm:$0xf]
      %v250 = vld [vmem:[%s1 + $0x48] sm:$0xf]
      %v251 = vld [vmem:[%s1 + $0x4c] sm:$0xf]
      %v252 = vld [vmem:[%s1 + $0x50] sm:$0xf]
      %v253 = vld [vmem:[%s1 + $0x54] sm:$0xf]
      %v254 = vld [vmem:[%s1 + $0x58] sm:$0xf]
      %v255 = vld [vmem:[%s1 + $0x5c] sm:$0xf]
      %v256 = vld [vmem:[%s1 + $0x60] sm:$0xf]
      %v257 = vld [vmem:[%s1 + $0x64] sm:$0xf]
      %v258 = vld [vmem:[%s1 + $0x68] sm:$0xf]
      %v259 = vld [vmem:[%s1 + $0x6c] sm:$0xf]
      %v260 = vld [vmem:[%s1 + $0x70] sm:$0xf]
      %v261 = vld [vmem:[%s1 + $0x74] sm:$0xf]
      %v262 = vld [vmem:[%s1 + $0x78] sm:$0xf]
      %v263 = vld [vmem:[%s1 + $0x7c] sm:$0xf]
      %v264 = vld [vmem:[%s1 + $0x80] sm:$0xf]
      %v265 = vld [vmem:[%s1 + $0x84] sm:$0xf]
      %v266 = vld [vmem:[%s1 + $0x88] sm:$0xf]
      %v267 = vld [vmem:[%s1 + $0x8c] sm:$0xf]
      %v268 = vld [vmem:[%s1 + $0x90] sm:$0xf]
      %v269 = vld [vmem:[%s1 + $0x94] sm:$0xf]
      %v270 = vld [vmem:[%s1 + $0x98] sm:$0xf]
      %v271 = vld [vmem:[%s1 + $0x9c] sm:$0xf]
      %v272 = vld [vmem:[%s1 + $0xa0] sm:$0xf]
      %v273 = vld [vmem:[%s1 + $0xa4] sm:$0xf]
      %v274 = vld [vmem:[%s1 + $0xa8] sm:$0xf]
      %v275 = vld [vmem:[%s1 + $0xac] sm:$0xf]
      %v276 = vld [vmem:[%s1 + $0xb0] sm:$0xf]
      %v277 = vld [vmem:[%s1 + $0xb4] sm:$0xf]
      %v278 = vld [vmem:[%s1 + $0xb8] sm:$0xf]
      %v279 = vld [vmem:[%s1 + $0xbc] sm:$0xf]
      %v280 = vld [vmem:[%s1 + $0xc0] sm:$0xf]
      %v281 = vld [vmem:[%s1 + $0xc4] sm:$0xf]
      %v282 = vld [vmem:[%s1 + $0xc8] sm:$0xf]
      %v283 = vld [vmem:[%s1 + $0xcc] sm:$0xf]
      %v284 = vld [vmem:[%s1 + $0xd0] sm:$0xf]
      %v285 = vld [vmem:[%s1 + $0xd4] sm:$0xf]
      %v286 = vld [vmem:[%s1 + $0xd8] sm:$0xf]
      %v287 = vld [vmem:[%s1 + $0xdc] sm:$0xf]
      %v288 = vld [vmem:[%s1 + $0xe0] sm:$0xf]
      %v289 = vld [vmem:[%s1 + $0xe4] sm:$0xf]
      %v290 = vld [vmem:[%s1 + $0xe8] sm:$0xf]
      %v291 = vld [vmem:[%s1 + $0xec] sm:$0xf]
      %v292 = vld [vmem:[%s1 + $0xf0] sm:$0xf]
      %v293 = vld [vmem:[%s1 + $0xf4] sm:$0xf]
      %v294 = vld [vmem:[%s1 + $0xf8] sm:$0xf]
      %v295 = vld [vmem:[%s1 + $0xfc] sm:$0xf]
      %v296 = vld [vmem:[%s1 + $0x100] sm:$0xf]
      %v297 = vld [vmem:[%s1 + $0x104] sm:$0xf]
      %v298 = vld [vmem:[%s1 + $0x108] sm:$0xf]
      %v299 = vld [vmem:[%s1 + $0x10c] sm:$0xf]
      %v300 = vld [vmem:[%s1 + $0x110] sm:$0xf]
      %v301 = vld [vmem:[%s1 + $0x114] sm:$0xf]
      %v302 = vld [vmem:[%s1 + $0x118] sm:$0xf]
      %v303 = vld [vmem:[%s1 + $0x11c] sm:$0xf]
      %v310 = vunpack.c.l.b16 %v226
      %v311 = vunpack.c.h.b16 %v226
      %v312 = vunpack.c.l.b16 %v227
      %v313 = vunpack.c.h.b16 %v227
      %v314 = vunpack.c.l.b16 %v228
      %v315 = vunpack.c.l.b16 %v229
      %v316 = vunpack.c.h.b16 %v229
      %v317 = vunpack.c.l.b16 %v230
      %v318 = vunpack.c.h.b16 %v230
      %v319 = vunpack.c.l.b16 %v231
      %v320 = vpack.c.b16 %v315, %v310
      %v321 = vpack.c.b16 %v316, %v311
      %v322 = vpack.c.b16 %v317, %v312
      %v323 = vpack.c.b16 %v318, %v313
      %v324 = vpack.c.b16 %v319, %v314
      %v401 = vunpack.c.l.b16 %v232
      %v402 = vunpack.c.l.b16 %v233
      %v403 = vunpack.c.l.b16 %v234
      %v404 = vunpack.c.l.b16 %v235
      %v405 = vunpack.c.l.b16 %v236
      %v406 = vunpack.c.l.b16 %v237
      %v407 = vunpack.c.l.b16 %v238
      %v408 = vunpack.c.l.b16 %v239
      %v409 = vunpack.c.l.b16 %v240
      %v410 = vunpack.c.l.b16 %v241
      %v411 = vunpack.c.l.b16 %v242
      %v412 = vunpack.c.l.b16 %v243
      %v413 = vunpack.c.l.b16 %v244
      %v414 = vunpack.c.l.b16 %v245
      %v415 = vunpack.c.l.b16 %v246
      %v416 = vunpack.c.l.b16 %v247
      %v417 = vunpack.c.l.b16 %v248
      %v418 = vunpack.c.l.b16 %v249
      %v419 = vunpack.c.l.b16 %v250
      %v420 = vunpack.c.l.b16 %v251
      %v421 = vunpack.c.l.b16 %v252
      %v422 = vunpack.c.l.b16 %v253
      %v423 = vunpack.c.l.b16 %v254
      %v424 = vunpack.c.l.b16 %v255
      %v425 = vunpack.c.l.b16 %v256
      %v426 = vunpack.c.l.b16 %v257
      %v427 = vunpack.c.l.b16 %v258
      %v428 = vunpack.c.l.b16 %v259
      %v429 = vunpack.c.l.b16 %v260
      %v430 = vunpack.c.l.b16 %v261
      %v431 = vunpack.c.l.b16 %v262
      %v432 = vunpack.c.l.b16 %v263
      %v433 = vunpack.c.l.b16 %v264
      %v434 = vunpack.c.l.b16 %v265
      %v435 = vunpack.c.l.b16 %v266
      %v436 = vunpack.c.l.b16 %v267
      %v437 = vunpack.c.l.b16 %v268
      %v438 = vunpack.c.l.b16 %v269
      %v439 = vunpack.c.l.b16 %v270
      %v440 = vunpack.c.l.b16 %v271
      %v441 = vunpack.c.l.b16 %v272
      %v442 = vunpack.c.l.b16 %v273
      %v443 = vunpack.c.l.b16 %v274
      %v444 = vunpack.c.l.b16 %v275
      %v445 = vunpack.c.l.b16 %v276
      %v446 = vunpack.c.l.b16 %v277
      %v447 = vunpack.c.l.b16 %v278
      %v448 = vunpack.c.l.b16 %v279
      %v449 = vunpack.c.l.b16 %v280
      %v450 = vunpack.c.l.b16 %v281
      %v451 = vunpack.c.l.b16 %v282
      %v452 = vunpack.c.l.b16 %v283
      %v453 = vunpack.c.l.b16 %v284
      %v454 = vunpack.c.l.b16 %v285
      %v455 = vunpack.c.l.b16 %v286
      %v456 = vunpack.c.l.b16 %v287
      %v457 = vunpack.c.l.b16 %v288
      %v458 = vunpack.c.l.b16 %v289
      %v459 = vunpack.c.l.b16 %v290
      %v460 = vunpack.c.l.b16 %v291
      %v461 = vunpack.c.l.b16 %v292
      %v462 = vunpack.c.l.b16 %v293
      %v463 = vunpack.c.l.b16 %v294
      %v464 = vunpack.c.l.b16 %v295
      %v465 = vunpack.c.l.b16 %v296
      %v466 = vunpack.c.l.b16 %v297
      %v467 = vunpack.c.l.b16 %v298
      %v468 = vunpack.c.l.b16 %v299
      %v469 = vunpack.c.l.b16 %v300
      %v470 = vunpack.c.l.b16 %v301
      %v471 = vunpack.c.l.b16 %v302
      %v472 = vunpack.c.l.b16 %v303
      %v473 = vpack.c.b16 %v402, %v401
      %v474 = vpack.c.b16 %v404, %v403
      %v475 = vpack.c.b16 %v406, %v405
      %v476 = vpack.c.b16 %v408, %v407
      %v477 = vpack.c.b16 %v410, %v409
      %v478 = vpack.c.b16 %v412, %v411
      %v479 = vpack.c.b16 %v414, %v413
      %v480 = vpack.c.b16 %v416, %v415
      %v481 = vpack.c.b16 %v418, %v417
      %v482 = vpack.c.b16 %v420, %v419
      %v483 = vpack.c.b16 %v422, %v421
      %v484 = vpack.c.b16 %v424, %v423
      %v485 = vpack.c.b16 %v426, %v425
      %v486 = vpack.c.b16 %v428, %v427
      %v487 = vpack.c.b16 %v430, %v429
      %v488 = vpack.c.b16 %v432, %v431
      %v489 = vpack.c.b16 %v434, %v433
      %v490 = vpack.c.b16 %v436, %v435
      %v491 = vpack.c.b16 %v438, %v437
      %v492 = vpack.c.b16 %v440, %v439
      %v493 = vpack.c.b16 %v442, %v441
      %v494 = vpack.c.b16 %v444, %v443
      %v495 = vpack.c.b16 %v446, %v445
      %v496 = vpack.c.b16 %v448, %v447
      %v497 = vpack.c.b16 %v450, %v449
      %v498 = vpack.c.b16 %v452, %v451
      %v499 = vpack.c.b16 %v454, %v453
      %v500 = vpack.c.b16 %v456, %v455
      %v501 = vpack.c.b16 %v458, %v457
      %v502 = vpack.c.b16 %v460, %v459
      %v503 = vpack.c.b16 %v462, %v461
      %v504 = vpack.c.b16 %v464, %v463
      %v505 = vpack.c.b16 %v466, %v465
      %v506 = vpack.c.b16 %v468, %v467
      %v507 = vpack.c.b16 %v470, %v469
      %v508 = vpack.c.b16 %v472, %v471
      %vm545 = vcmask 523264
      %v547 = vsel %vm545, %v324, 0
      %549 = vmatprep.subr.bf16.mxu0 0
      %550 = vmatpush1.bf16.msra.mxu0 %v480
      %551 = vmatprep.subr.bf16.mxu0 0
      %552 = vmatpush1.bf16.msra.mxu0 %v479
      %553 = vmatprep.subr.bf16.mxu0 0
      %554 = vmatpush1.bf16.msra.mxu0 %v478
      %555 = vmatprep.subr.bf16.mxu0 0
      %556 = vmatpush1.bf16.msra.mxu0 %v477
      %557 = vmatprep.subr.bf16.mxu0 0
      %558 = vmatpush1.bf16.msra.mxu0 %v476
      %559 = vmatprep.subr.bf16.mxu0 0
      %560 = vmatpush1.bf16.msra.mxu0 %v475
      %561 = vmatprep.subr.bf16.mxu0 0
      %562 = vmatpush1.bf16.msra.mxu0 %v474
      %563 = vmatprep.subr.bf16.mxu0 0
      %564 = vmatpush1.bf16.msra.mxu0 %v473
      %565 = vmatprep.subr.bf16.mxu0 0
      %566 = vmatpush2.bf16.msra.mxu0 %v488
      %567 = vmatprep.subr.bf16.mxu0 0
      %568 = vmatpush2.bf16.msra.mxu0 %v487
      %569 = vmatprep.subr.bf16.mxu0 0
      %570 = vmatpush2.bf16.msra.mxu0 %v486
      %571 = vmatprep.subr.bf16.mxu0 0
      %572 = vmatpush2.bf16.msra.mxu0 %v485
      %573 = vmatprep.subr.bf16.mxu0 0
      %574 = vmatpush2.bf16.msra.mxu0 %v484
      %575 = vmatprep.subr.bf16.mxu0 0
      %576 = vmatpush2.bf16.msra.mxu0 %v483
      %577 = vmatprep.subr.bf16.mxu0 0
      %578 = vmatpush2.bf16.msra.mxu0 %v482
      %579 = vmatprep.subr.bf16.mxu0 0
      %580 = vmatpush2.bf16.msra.mxu0 %v481
      %581 = vmatprep.mubr.bf16.mxu0 %v321
      %582 = vmatmul.mubr.bf16.gmra.mxu0 %v320
      %v583 = vpop.f32.mrf.mxu0
      %v584 = vadd.f32 0.0, %v583
      %v585 = vpop.f32.mrf.mxu0
      %v586 = vpop.f32.mrf.mxu0
      %v587 = vadd.f32 0.0, %v586
      %v588 = vpop.f32.mrf.mxu0
      %589 = vdwg.mxu0
      %590 = vmatprep.subr.bf16.mxu0 0
      %591 = vmatpush1.bf16.msra.mxu0 %v496
      %592 = vmatprep.subr.bf16.mxu0 0
      %593 = vmatpush1.bf16.msra.mxu0 %v495
      %594 = vmatprep.subr.bf16.mxu0 0
      %595 = vmatpush1.bf16.msra.mxu0 %v494
      %596 = vmatprep.subr.bf16.mxu0 0
      %597 = vmatpush1.bf16.msra.mxu0 %v493
      %598 = vmatprep.subr.bf16.mxu0 0
      %599 = vmatpush1.bf16.msra.mxu0 %v492
      %600 = vmatprep.subr.bf16.mxu0 0
      %601 = vmatpush1.bf16.msra.mxu0 %v491
      %602 = vmatprep.subr.bf16.mxu0 0
      %603 = vmatpush1.bf16.msra.mxu0 %v490
      %604 = vmatprep.subr.bf16.mxu0 0
      %605 = vmatpush1.bf16.msra.mxu0 %v489
      %606 = vmatprep.subr.bf16.mxu0 0
      %607 = vmatpush2.bf16.msra.mxu0 %v504
      %608 = vmatprep.subr.bf16.mxu0 0
      %609 = vmatpush2.bf16.msra.mxu0 %v503
      %610 = vmatprep.subr.bf16.mxu0 0
      %611 = vmatpush2.bf16.msra.mxu0 %v502
      %612 = vmatprep.subr.bf16.mxu0 0
      %613 = vmatpush2.bf16.msra.mxu0 %v501
      %614 = vmatprep.subr.bf16.mxu0 0
      %615 = vmatpush2.bf16.msra.mxu0 %v500
      %616 = vmatprep.subr.bf16.mxu0 0
      %617 = vmatpush2.bf16.msra.mxu0 %v499
      %618 = vmatprep.subr.bf16.mxu0 0
      %619 = vmatpush2.bf16.msra.mxu0 %v498
      %620 = vmatprep.subr.bf16.mxu0 0
      %621 = vmatpush2.bf16.msra.mxu0 %v497
      %622 = vmatprep.mubr.bf16.mxu0 %v323
      %623 = vmatmul.mubr.bf16.gmra.mxu0 %v322
      %v624 = vpop.f32.mrf.mxu0
      %v625 = vadd.f32 %v584, %v624
      %v626 = vpop.f32.mrf.mxu0
      %v627 = vpop.f32.mrf.mxu0
      %v628 = vadd.f32 %v587, %v627
      %v629 = vpop.f32.mrf.mxu0
      %630 = vdwg.mxu0
      %631 = vmatprep.subr.bf16.mxu0 0
      %632 = vmatpush1.bf16.msra.mxu0 0
      %633 = vmatprep.subr.bf16.mxu0 0
      %634 = vmatpush1.bf16.msra.mxu0 0
      %635 = vmatprep.subr.bf16.mxu0 0
      %636 = vmatpush1.bf16.msra.mxu0 0
      %637 = vmatprep.subr.bf16.mxu0 0
      %638 = vmatpush1.bf16.msra.mxu0 0
      %639 = vmatprep.subr.bf16.mxu0 0
      %640 = vmatpush1.bf16.msra.mxu0 %v508
      %641 = vmatprep.subr.bf16.mxu0 0
      %642 = vmatpush1.bf16.msra.mxu0 %v507
      %643 = vmatprep.subr.bf16.mxu0 0
      %644 = vmatpush1.bf16.msra.mxu0 %v506
      %645 = vmatprep.subr.bf16.mxu0 0
      %646 = vmatpush1.bf16.msra.mxu0 %v505
      %647 = vmatprep.subr.bf16.mxu0 0
      %648 = vmatpush2.bf16.msra.mxu0 0
      %649 = vmatprep.subr.bf16.mxu0 0
      %650 = vmatpush2.bf16.msra.mxu0 0
      %651 = vmatprep.subr.bf16.mxu0 0
      %652 = vmatpush2.bf16.msra.mxu0 0
      %653 = vmatprep.subr.bf16.mxu0 0
      %654 = vmatpush2.bf16.msra.mxu0 0
      %655 = vmatprep.subr.bf16.mxu0 0
      %656 = vmatpush2.bf16.msra.mxu0 0
      %657 = vmatprep.subr.bf16.mxu0 0
      %658 = vmatpush2.bf16.msra.mxu0 0
      %659 = vmatprep.subr.bf16.mxu0 0
      %660 = vmatpush2.bf16.msra.mxu0 0
      %661 = vmatprep.subr.bf16.mxu0 0
      %662 = vmatpush2.bf16.msra.mxu0 0
      %663 = vmatprep.mubr.bf16.mxu0 0
      %664 = vmatmul.mubr.bf16.gmra.mxu0 %v547
      %v665 = vpop.f32.mrf.mxu0
      %v666 = vadd.f32 %v625, %v665
      %v667 = vpop.f32.mrf.mxu0
      %v668 = vpop.f32.mrf.mxu0
      %v669 = vadd.f32 %v628, %v668
      %v670 = vpop.f32.mrf.mxu0
      %671 = vdwg.mxu0
      %v672 = vadd.f32 %v666, %v669
      %v673 = vrot.slane %v672, 4
      %v674 = vadd.f32 %v672, %v673
      %v675 = vrot.slane %v674, 2
      %v676 = vadd.f32 %v674, %v675
      %v677 = vrot.slane %v676, 1
      %v678 = vadd.f32 %v676, %v677
      %v679 = vmul.f32 %v666, %v666
      %v680 = vmul.f32 %v669, %v669
      %v681 = vadd.f32 %v679, %v680
      %v682 = vrot.slane %v681, 4
      %v683 = vadd.f32 %v681, %v682
      %v684 = vrot.slane %v683, 2
      %v685 = vadd.f32 %v683, %v684
      %v686 = vrot.slane %v685, 1
      %v687 = vadd.f32 %v685, %v686
      %688 = vst [vmem:[%s220] sm:$0xff] %v678
      %689 = vst [vmem:[%s224] sm:$0xff] %v687
      %v690 = vpack.c.bf16 %v669, %v666
      %v692 = vunpack.c.l.b16 %v690
      %v693 = vunpack.c.h.b16 %v690
      %v694 = vpack.c.b16 %v692, %v692
      %v695 = vpack.c.b16 %v693, %v693
      %698 = vst [vmem:[%s215] sm:$0xf] %v694
      %699 = vst [vmem:[%s215 + $0x4] sm:$0xf] %v695
      %s700 = smul.u32 2, %s16
      %p701 = scmp.lt.s32.totalorder %s700, 3
      %s702 = scalar_select %p701, %s700, 3
      %s703 = smul.addr %s702, 4
      %s704 = scalar_lea.vmem %s2, %s703
      %p705 = scmp.lt.s32.totalorder %s16, 1
      %s706 = scalar_select %p705, %s16, 1
      %s707 = smul.addr %s706, 8
      %s708 = scalar_lea.vmem %s3, %s707
      %p709 = scmp.lt.s32.totalorder %s16, 1
      %s710 = scalar_select %p709, %s16, 1
      %s711 = smul.addr %s710, 8
      %s712 = scalar_lea.vmem %s4, %s711
      // Predicated region
      $region29: #{generator_forward.11} parent=27 // pred_check
        %p713 = pneg %p81
      $region30: #{generator_forward.11} parent=27 // pred_check_branch
        %715 = sbr.rel (%p713) target = $region32
      $region31: #{generator_forward.11} parent=27 // pred_region
        %s716 = smul.u32 2, %s16
      $region32: #{generator_forward.11} parent=27 // pred_fallthru
        _
      // Predicated region
      $region33: #{generator_forward.11} parent=27 // pred_check
        %p717 = pneg %p107
      $region34: #{generator_forward.11} parent=27 // pred_check_branch
        %719 = sbr.rel (%p717) target = $region36
      $region35: #{generator_forward.11} parent=27 // pred_region
        _
      $region36: #{generator_forward.11} parent=27 // pred_fallthru
        _
      // Predicated region
      $region37: #{generator_forward.11} parent=27 // pred_check
        %p720 = pneg %p133
      $region38: #{generator_forward.11} parent=27 // pred_check_branch
        %722 = sbr.rel (%p720) target = $region40
      $region39: #{generator_forward.11} parent=27 // pred_region
        _
      $region40: #{generator_forward.11} parent=27 // pred_fallthru
        _
    $region28: #{generator_forward.11} parent=5 // pred_fallthru
      _
    %p723 = scmp.le.s32.totalorder 2, %s11
    // Predicated region
    $region41: #{generator_forward.11} parent=5 // pred_check
      %p724 = pneg %p723
    $region42: #{generator_forward.11} parent=5 // pred_check_branch
      %726 = sbr.rel (%p724) target = $region44
    $region43: #{generator_forward.11} parent=5 // pred_region
      %s727 = ssub.s32 %s11, 2
      // Predicated region
      $region45: #{generator_forward.11} parent=43 // pred_check
        %p728 = pneg %p87
      $region46: #{generator_forward.11} parent=43 // pred_check_branch
        %730 = sbr.rel (%p728) target = $region48
      $region47: #{generator_forward.11} parent=43 // pred_region
        %s731 = smul.u32 2, %s17
        %p732 = scmp.lt.s32.totalorder %s731, 3
        %s733 = scalar_select %p732, %s731, 3
        %s734 = smul.addr %s733, 4
        %s735 = scalar_lea.vmem %s2, %s734
      $region48: #{generator_forward.11} parent=43 // pred_fallthru
        _
      // Predicated region
      $region49: #{generator_forward.11} parent=43 // pred_check
        %p736 = pneg %p113
      $region50: #{generator_forward.11} parent=43 // pred_check_branch
        %738 = sbr.rel (%p736) target = $region52
      $region51: #{generator_forward.11} parent=43 // pred_region
        %p739 = scmp.lt.s32.totalorder %s17, 1
        %s740 = scalar_select %p739, %s17, 1
        %s741 = smul.addr %s740, 8
        %s742 = scalar_lea.vmem %s3, %s741
      $region52: #{generator_forward.11} parent=43 // pred_fallthru
        _
      // Predicated region
      $region53: #{generator_forward.11} parent=43 // pred_check
        %p743 = pneg %p139
      $region54: #{generator_forward.11} parent=43 // pred_check_branch
        %745 = sbr.rel (%p743) target = $region56
      $region55: #{generator_forward.11} parent=43 // pred_region
        %p746 = scmp.lt.s32.totalorder %s17, 1
        %s747 = scalar_select %p746, %s17, 1
        %s748 = smul.addr %s747, 8
        %s749 = scalar_lea.vmem %s4, %s748
      $region56: #{generator_forward.11} parent=43 // pred_fallthru
        _
    $region44: #{generator_forward.11} parent=5 // pred_fallthru
      _
  $region6: #{generator_forward.11} parent=0 // loop_footer
    %s15 = sadd.s32 1, %s11
  $region7: #{generator_forward.11} parent=0 // loop_footer_branch
    %10 = sbr.rel target = $region3
  $region8: #{generator_forward.11} parent=0 // loop_exit
    _

// kernel: tile.67
$region0: #{tile.67}
  #allocation0 [shape = 's32[1]{0}', space=sflag, size = 0x4, scoped, tag = 'scoped memory for tile.67']
  %s0 = inlined_call_operand.vmem [shape: f32[16], index: 0, kind: input, shape index: {}]
  %s1 = inlined_call_operand.vmem [shape: f32[4,16], index: 1, kind: output, shape index: {}]
  // Predicated region
  $region2: #{tile.67} parent=0 // pred_check
    _
  $region3: #{tile.67} parent=0 // pred_check_branch
    %3 = sbr.rel (0) target = $region5
  $region4: #{tile.67} parent=0 // pred_region
    _
  $region5: #{tile.67} parent=0 // pred_fallthru
    _
  %v4 = vld [vmem:[%s0] ss:$0 sm:$0xff]
  %5 = vst [vmem:[%s1] sm:$0xf] %v4

// kernel: tile.69
$region0: #{tile.69}
  %s0 = inlined_call_operand.vmem [shape: f32[4,16], index: 0, kind: input, shape index: {}]
  %s1 = inlined_call_operand.vmem [shape: f32[1,64], index: 1, kind: output, shape index: {}]
  $region1: #{tile.69} parent=0
    #allocation0 [shape = 'u8[4096]{0}', space=vmem, size = 0x1000, scoped, tag = 'scoped mem for output reshape']
    #allocation1 [shape = 'u8[4096]{0}', space=vmem, size = 0x1000, scoped, tag = 'scoped mem for input reshape']
    %s3 = sshll.u32 1, 4
    %s4 = ssub.s32 %s3, 1
    %v5 = vld [vmem:[%s0] sm:%s4]
    %6 = vst [vmem:[#allocation1] sm:%s4] %v5
    %v7 = vld [vmem:[#allocation1] sm:$0x1]
    %vm8 = vcmask 130048
    %9 = vst.msk [vmem:[#allocation0] sm:$0x1] %vm8, %v7
    %s10 = scalar_lea.vmem [#allocation1], 3
    %v11 = vld [vmem:[%s10] sm:$0x1]
    %12 = vrot.lane.b32.xlu0 %v11, 48
    %v13 = vpop.permute.xlu0 %12
    %vm14 = vcmask 523648
    %15 = vst.msk [vmem:[#allocation0] sm:$0x1] %vm14, %v13
    %s16 = scalar_lea.vmem [#allocation1], 2
    %v17 = vld [vmem:[%s16] sm:$0x1]
    %18 = vrot.lane.b32.xlu0 %v17, 32
    %v19 = vpop.permute.xlu0 %18
    %vm20 = vcmask 392448
    %21 = vst.msk [vmem:[#allocation0] sm:$0x1] %vm20, %v19
    %s22 = scalar_lea.vmem [#allocation1], 1
    %v23 = vld [vmem:[%s22] sm:$0x1]
    %24 = vrot.lane.b32.xlu0 %v23, 16
    %v25 = vpop.permute.xlu0 %24
    %vm26 = vcmask 261248
    %27 = vst.msk [vmem:[#allocation0] sm:$0x1] %vm26, %v25
    %s29 = sshll.u32 1, 1
    %s30 = ssub.s32 %s29, 1
    %v32 = vld [vmem:[#allocation0] sm:%s30]
    %s33 = sshll.u32 1, 1
    %s34 = ssub.s32 %s33, 1
    %35 = vst [vmem:[%s1] sm:%s34] %v32

// kernel: generator_forward.13
$region0: #{generator_forward.13}
  #allocation0 [shape = 'u32[]', space=smem, size = 0x4, offset = 0x4, fixed_abs, tag = 'smem constant byte address 0x4 - core index']
  #allocation1 [shape = 'u32[144,128]{1,0:T(1,128)}', space=vmem, size = 0x12000, scoped, tag = 'internal scratch']
  %s0 = inlined_call_operand.vmem [shape: bf16[128,288], index: 0, kind: input, shape index: {}]
  %s1 = inlined_call_operand.vmem [shape: bf16[288,64], index: 1, kind: input, shape index: {}]
  %s2 = inlined_call_operand.vmem [shape: bf16[128,64], index: 2, kind: output, shape index: {0}]
  %s3 = inlined_call_operand.vmem [shape: f32[16,64], index: 3, kind: output, shape index: {1}]
  %s4 = inlined_call_operand.vmem [shape: f32[16,64], index: 4, kind: output, shape index: {2}]
  %5 = xla_tuple %s2, %s3, %s4
  %s6 = sld [smem:[#allocation0]]
  $region57: #{generator_forward.13} parent=0
    _
  %s8 = ssub.s32 1, %s6
  %s9 = scalar_select 0, %s8, %s6
  loop: start=0, step=1, limit=4
  $region2: #{generator_forward.13} parent=0 // loop_pre_header
    _
  $region3: #{generator_forward.13} parent=0 // loop_header
    %s11 = sphi 0, %s15
    %p12 = scmp.ge.s32.totalorder %s11, 4
    %s21 = sphi 0, %s23
    %s24 = sphi 0, %s21
    %s25 = sphi 0, %s24
    %s41 = sphi 0, %s25
    %s45 = sphi 0, %s45
    %s47 = sphi 0, %s45
    %s48 = sphi 0, %s47
    %s62 = sphi 0, %s48
    %s68 = sphi 0, %s70
    %s71 = sphi 0, %s68
    %s72 = sphi 0, %s71
    %s88 = sphi 0, %s72
    %s94 = sphi 0, %s96
    %s97 = sphi 0, %s94
    %s98 = sphi 0, %s97
    %s114 = sphi 0, %s98
    %s120 = sphi 0, %s122
    %s123 = sphi 0, %s120
    %s124 = sphi 0, %s123
    %s140 = sphi 0, %s124
  $region4: #{generator_forward.13} parent=0 // loop_header_branch
    %14 = sbr.rel (%p12) target = $region8
  $region5: #{generator_forward.13} parent=0 // loop_body
    %s16 = ssub.s32 %s11, 1
    %s17 = ssub.s32 %s11, 2
    %s18 = sadd.s32 %s11, 1
    %s19 = ssub.s32 %s11, %s18
    %p20 = scmp.eq.s32.totalorder %s19, 0
    %s22 = sadd.s32 %s21, 1
    %s23 = scalar_select %p20, %s21, %s22
    %p26 = pneg %p20
    %p27 = scmp.eq.s32.totalorder %s11, 1
    %p28 = por %p26, %p27
    %p29 = scmp.ne.s32.totalorder %s21, %s24
    %p30 = scmp.eq.s32.totalorder %s11, 0
    %p31 = por %p29, %p30
    %p32 = scmp.ne.s32.totalorder %s21, %s24
    %p33 = scmp.eq.s32.totalorder %s16, 1
    %p34 = por %p32, %p33
    %p35 = scmp.ne.s32.totalorder %s24, %s25
    %p36 = scmp.eq.s32.totalorder %s16, 0
    %p37 = por %p35, %p36
    %p38 = scmp.ne.s32.totalorder %s24, %s25
    %p39 = scmp.eq.s32.totalorder %s17, 1
    %p40 = por %p38, %p39
    %p42 = scmp.ne.s32.totalorder %s25, %s41
    %p43 = scmp.eq.s32.totalorder %s17, 0
    %p44 = por %p42, %p43
    %s46 = sadd.s32 %s45, 1
    %p49 = scmp.eq.s32.totalorder %s11, 1
    %p50 = scmp.ne.s32.totalorder %s45, %s47
    %p51 = scmp.eq.s32.totalorder %s11, 0
    %p52 = por %p50, %p51
    %p53 = scmp.ne.s32.totalorder %s45, %s47
    %p54 = scmp.eq.s32.totalorder %s16, 1
    %p55 = por %p53, %p54
    %p56 = scmp.ne.s32.totalorder %s47, %s48
    %p57 = scmp.eq.s32.totalorder %s16, 0
    %p58 = por %p56, %p57
    %p59 = scmp.ne.s32.totalorder %s47, %s48
    %p60 = scmp.eq.s32.totalorder %s17, 1
    %p61 = por %p59, %p60
    %p63 = scmp.ne.s32.totalorder %s48, %s62
    %p64 = scmp.eq.s32.totalorder %s17, 0
    %p65 = por %p63, %p64
    %s66 = ssub.s32 %s11, %s18
    %p67 = scmp.eq.s32.totalorder %s66, 0
    %s69 = sadd.s32 %s68, 1
    %s70 = scalar_select %p67, %s68, %s69
    %p73 = pneg %p67
    %p74 = scmp.eq.s32.totalorder %s11, 1
    %p75 = por %p73, %p74
    %p76 = scmp.ne.s32.totalorder %s68, %s71
    %p77 = scmp.eq.s32.totalorder %s11, 0
    %p78 = por %p76, %p77
    %p79 = scmp.ne.s32.totalorder %s68, %s71
    %p80 = scmp.eq.s32.totalorder %s16, 1
    %p81 = por %p79, %p80
    %p82 = scmp.ne.s32.totalorder %s71, %s72
    %p83 = scmp.eq.s32.totalorder %s16, 0
    %p84 = por %p82, %p83
    %p85 = scmp.ne.s32.totalorder %s71, %s72
    %p86 = scmp.eq.s32.totalorder %s17, 1
    %p87 = por %p85, %p86
    %p89 = scmp.ne.s32.totalorder %s72, %s88
    %p90 = scmp.eq.s32.totalorder %s17, 0
    %p91 = por %p89, %p90
    %s92 = ssub.s32 %s11, %s18
    %p93 = scmp.eq.s32.totalorder %s92, 0
    %s95 = sadd.s32 %s94, 1
    %s96 = scalar_select %p93, %s94, %s95
    %p99 = pneg %p93
    %p100 = scmp.eq.s32.totalorder %s11, 1
    %p101 = por %p99, %p100
    %p102 = scmp.ne.s32.totalorder %s94, %s97
    %p103 = scmp.eq.s32.totalorder %s11, 0
    %p104 = por %p102, %p103
    %p105 = scmp.ne.s32.totalorder %s94, %s97
    %p106 = scmp.eq.s32.totalorder %s16, 1
    %p107 = por %p105, %p106
    %p108 = scmp.ne.s32.totalorder %s97, %s98
    %p109 = scmp.eq.s32.totalorder %s16, 0
    %p110 = por %p108, %p109
    %p111 = scmp.ne.s32.totalorder %s97, %s98
    %p112 = scmp.eq.s32.totalorder %s17, 1
    %p113 = por %p111, %p112
    %p115 = scmp.ne.s32.totalorder %s98, %s114
    %p116 = scmp.eq.s32.totalorder %s17, 0
    %p117 = por %p115, %p116
    %s118 = ssub.s32 %s11, %s18
    %p119 = scmp.eq.s32.totalorder %s118, 0
    %s121 = sadd.s32 %s120, 1
    %s122 = scalar_select %p119, %s120, %s121
    %p125 = pneg %p119
    %p126 = scmp.eq.s32.totalorder %s11, 1
    %p127 = por %p125, %p126
    %p128 = scmp.ne.s32.totalorder %s120, %s123
    %p129 = scmp.eq.s32.totalorder %s11, 0
    %p130 = por %p128, %p129
    %p131 = scmp.ne.s32.totalorder %s120, %s123
    %p132 = scmp.eq.s32.totalorder %s16, 1
    %p133 = por %p131, %p132
    %p134 = scmp.ne.s32.totalorder %s123, %s124
    %p135 = scmp.eq.s32.totalorder %s16, 0
    %p136 = por %p134, %p135
    %p137 = scmp.ne.s32.totalorder %s123, %s124
    %p138 = scmp.eq.s32.totalorder %s17, 1
    %p139 = por %p137, %p138
    %p141 = scmp.ne.s32.totalorder %s124, %s140
    %p142 = scmp.eq.s32.totalorder %s17, 0
    %p143 = por %p141, %p142
    %p144 = scmp.le.s32.totalorder 1, %s11
    %p145 = scmp.lt.s32.totalorder %s11, 3
    %p146 = pnand %p144, %p145
    %p147 = pneg %p146
    // Predicated region
    $region9: #{generator_forward.13} parent=5 // pred_check
      _
    $region10: #{generator_forward.13} parent=5 // pred_check_branch
      %149 = sbr.rel (%p146) target = $region12
    $region11: #{generator_forward.13} parent=5 // pred_region
      %s150 = ssub.s32 %s11, 1
      // Predicated region
      $region13: #{generator_forward.13} parent=11 // pred_check
        %p151 = pneg %p58
      $region14: #{generator_forward.13} parent=11 // pred_check_branch
        %153 = sbr.rel (%p151) target = $region16
      $region15: #{generator_forward.13} parent=11 // pred_region
        _
      $region16: #{generator_forward.13} parent=11 // pred_fallthru
        _
    $region12: #{generator_forward.13} parent=5 // pred_fallthru
      _
    %p154 = scmp.lt.s32.totalorder %s11, 2
    // Predicated region
    $region17: #{generator_forward.13} parent=5 // pred_check
      %p155 = pneg %p154
    $region18: #{generator_forward.13} parent=5 // pred_check_branch
      %157 = sbr.rel (%p155) target = $region20
    $region19: #{generator_forward.13} parent=5 // pred_region
      // Predicated region
      $region21: #{generator_forward.13} parent=19 // pred_check
        %p158 = pneg %p31
      $region22: #{generator_forward.13} parent=19 // pred_check_branch
        %160 = sbr.rel (%p158) target = $region24
      $region23: #{generator_forward.13} parent=19 // pred_region
        %s161 = smul.u32 8, %s11
        %p162 = scmp.lt.s32.totalorder %s161, 15
        %s163 = scalar_select %p162, %s161, 15
        %s164 = smul.addr %s163, 3
        %s165 = smul.addr %s164, 4
        %s166 = scalar_lea.vmem %s0, %s165
        %s167 = smul.u32 8, %s11
      $region24: #{generator_forward.13} parent=19 // pred_fallthru
        _
    $region20: #{generator_forward.13} parent=5 // pred_fallthru
      _
    %p168 = scmp.le.s32.totalorder 1, %s11
    %p169 = scmp.lt.s32.totalorder %s11, 3
    %p170 = pnand %p168, %p169
    %p171 = pneg %p170
    // Predicated region
    $region25: #{generator_forward.13} parent=5 // pred_check
      _
    $region26: #{generator_forward.13} parent=5 // pred_check_branch
      %173 = sbr.rel (%p170) target = $region28
    $region27: #{generator_forward.13} parent=5 // pred_region
      %s174 = ssub.s32 %s11, 1
      %s175 = smul.u32 8, %s16
      %p176 = scmp.lt.s32.totalorder %s175, 15
      %s177 = scalar_select %p176, %s175, 15
      %s178 = smul.addr %s177, 3
      %s179 = smul.addr %s178, 4
      %s180 = scalar_lea.vmem %s0, %s179
      %p181 = pneg %p37
      %p182 = pneg %p34
      %p183 = pneg %p58
      %p184 = pneg %p55
      %p185 = pneg %p84
      %p186 = pneg %p81
      %s187 = smul.u32 8, %s16
      %p188 = scmp.lt.s32.totalorder %s187, 15
      %s189 = scalar_select %p188, %s187, 15
      %s190 = smul.addr %s189, 4
      %s191 = scalar_lea.vmem %s2, %s190
      %p192 = pneg %p110
      %p193 = pneg %p107
      %p194 = scmp.lt.s32.totalorder %s16, 1
      %s195 = scalar_select %p194, %s16, 1
      %s196 = smul.addr %s195, 8
      %s197 = scalar_lea.vmem %s3, %s196
      %p198 = pneg %p136
      %p199 = pneg %p133
      %p200 = scmp.lt.s32.totalorder %s16, 1
      %s201 = scalar_select %p200, %s16, 1
      %s202 = smul.addr %s201, 8
      %s203 = scalar_lea.vmem %s4, %s202
      %s204 = smul.u32 8, %s16
      %p205 = scmp.lt.s32.totalorder %s204, 15
      %s206 = scalar_select %p205, %s204, 15
      %s207 = smul.addr %s206, 3
      %s208 = smul.addr %s207, 4
      %s209 = scalar_lea.vmem %s0, %s208
      %s210 = smul.u32 8, %s16
      %s211 = smul.u32 8, %s16
      %p212 = scmp.lt.s32.totalorder %s211, 15
      %s213 = scalar_select %p212, %s211, 15
      %s214 = smul.addr %s213, 4
      %s215 = scalar_lea.vmem %s2, %s214
      %s216 = smul.u32 8, %s16
      %p217 = scmp.lt.s32.totalorder %s16, 1
      %s218 = scalar_select %p217, %s16, 1
      %s219 = smul.addr %s218, 8
      %s220 = scalar_lea.vmem %s3, %s219
      %p221 = scmp.lt.s32.totalorder %s16, 1
      %s222 = scalar_select %p221, %s16, 1
      %s223 = smul.addr %s222, 8
      %s224 = scalar_lea.vmem %s4, %s223
      %v226 = vld [vmem:[%s209] sm:$0xff]
      %v227 = vld [vmem:[%s209 + $0x8] sm:$0xf]
      %v228 = vld [vmem:[%s209 + $0xc] sm:$0xff]
      %v229 = vld [vmem:[%s209 + $0x14] sm:$0xf]
      %v230 = vld [vmem:[%s209 + $0x18] sm:$0xff]
      %v231 = vld [vmem:[%s209 + $0x20] sm:$0xf]
      %v232 = vld [vmem:[%s209 + $0x24] sm:$0xff]
      %v233 = vld [vmem:[%s209 + $0x2c] sm:$0xf]
      %v234 = vld [vmem:[%s209 + $0x30] sm:$0xff]
      %v235 = vld [vmem:[%s209 + $0x38] sm:$0xf]
      %v236 = vld [vmem:[%s209 + $0x3c] sm:$0xff]
      %v237 = vld [vmem:[%s209 + $0x44] sm:$0xf]
      %v238 = vld [vmem:[%s209 + $0x48] sm:$0xff]
      %v239 = vld [vmem:[%s209 + $0x50] sm:$0xf]
      %v240 = vld [vmem:[%s209 + $0x54] sm:$0xff]
      %v241 = vld [vmem:[%s209 + $0x5c] sm:$0xf]
      %v242 = vld [vmem:[%s1] sm:$0xf]
      %v243 = vld [vmem:[%s1 + $0x4] sm:$0xf]
      %v244 = vld [vmem:[%s1 + $0x8] sm:$0xf]
      %v245 = vld [vmem:[%s1 + $0xc] sm:$0xf]
      %v246 = vld [vmem:[%s1 + $0x10] sm:$0xf]
      %v247 = vld [vmem:[%s1 + $0x14] sm:$0xf]
      %v248 = vld [vmem:[%s1 + $0x18] sm:$0xf]
      %v249 = vld [vmem:[%s1 + $0x1c] sm:$0xf]
      %v250 = vld [vmem:[%s1 + $0x20] sm:$0xf]
      %v251 = vld [vmem:[%s1 + $0x24] sm:$0xf]
      %v252 = vld [vmem:[%s1 + $0x28] sm:$0xf]
      %v253 = vld [vmem:[%s1 + $0x2c] sm:$0xf]
      %v254 = vld [vmem:[%s1 + $0x30] sm:$0xf]
      %v255 = vld [vmem:[%s1 + $0x34] sm:$0xf]
      %v256 = vld [vmem:[%s1 + $0x38] sm:$0xf]
      %v257 = vld [vmem:[%s1 + $0x3c] sm:$0xf]
      %v258 = vld [vmem:[%s1 + $0x40] sm:$0xf]
      %v259 = vld [vmem:[%s1 + $0x44] sm:$0xf]
      %v260 = vld [vmem:[%s1 + $0x48] sm:$0xf]
      %v261 = vld [vmem:[%s1 + $0x4c] sm:$0xf]
      %v262 = vld [vmem:[%s1 + $0x50] sm:$0xf]
      %v263 = vld [vmem:[%s1 + $0x54] sm:$0xf]
      %v264 = vld [vmem:[%s1 + $0x58] sm:$0xf]
      %v265 = vld [vmem:[%s1 + $0x5c] sm:$0xf]
      %v266 = vld [vmem:[%s1 + $0x60] sm:$0xf]
      %v267 = vld [vmem:[%s1 + $0x64] sm:$0xf]
      %v268 = vld [vmem:[%s1 + $0x68] sm:$0xf]
      %v269 = vld [vmem:[%s1 + $0x6c] sm:$0xf]
      %v270 = vld [vmem:[%s1 + $0x70] sm:$0xf]
      %v271 = vld [vmem:[%s1 + $0x74] sm:$0xf]
      %v272 = vld [vmem:[%s1 + $0x78] sm:$0xf]
      %v273 = vld [vmem:[%s1 + $0x7c] sm:$0xf]
      %v274 = vld [vmem:[%s1 + $0x80] sm:$0xf]
      %v275 = vld [vmem:[%s1 + $0x84] sm:$0xf]
      %v276 = vld [vmem:[%s1 + $0x88] sm:$0xf]
      %v277 = vld [vmem:[%s1 + $0x8c] sm:$0xf]
      %v294 = vunpack.c.l.b16 %v226
      %v295 = vunpack.c.h.b16 %v226
      %v296 = vunpack.c.l.b16 %v227
      %v297 = vunpack.c.l.b16 %v228
      %v298 = vunpack.c.h.b16 %v228
      %v299 = vunpack.c.l.b16 %v229
      %v300 = vunpack.c.l.b16 %v230
      %v301 = vunpack.c.h.b16 %v230
      %v302 = vunpack.c.l.b16 %v231
      %v303 = vunpack.c.l.b16 %v232
      %v304 = vunpack.c.h.b16 %v232
      %v305 = vunpack.c.l.b16 %v233
      %v306 = vunpack.c.l.b16 %v234
      %v307 = vunpack.c.h.b16 %v234
      %v308 = vunpack.c.l.b16 %v235
      %v309 = vunpack.c.l.b16 %v236
      %v310 = vunpack.c.h.b16 %v236
      %v311 = vunpack.c.l.b16 %v237
      %v312 = vunpack.c.l.b16 %v238
      %v313 = vunpack.c.h.b16 %v238
      %v314 = vunpack.c.l.b16 %v239
      %v315 = vunpack.c.l.b16 %v240
      %v316 = vunpack.c.h.b16 %v240
      %v317 = vunpack.c.l.b16 %v241
      %v318 = vpack.c.b16 %v297, %v294
      %v319 = vpack.c.b16 %v298, %v295
      %v320 = vpack.c.b16 %v299, %v296
      %v321 = vpack.c.b16 %v303, %v300
      %v322 = vpack.c.b16 %v304, %v301
      %v323 = vpack.c.b16 %v305, %v302
      %v324 = vpack.c.b16 %v309, %v306
      %v325 = vpack.c.b16 %v310, %v307
      %v326 = vpack.c.b16 %v311, %v308
      %v327 = vpack.c.b16 %v315, %v312
      %v328 = vpack.c.b16 %v316, %v313
      %v329 = vpack.c.b16 %v317, %v314
      %v374 = vunpack.c.l.b16 %v242
      %v375 = vunpack.c.l.b16 %v243
      %v376 = vunpack.c.l.b16 %v244
      %v377 = vunpack.c.l.b16 %v245
      %v378 = vunpack.c.l.b16 %v246
      %v379 = vunpack.c.l.b16 %v247
      %v380 = vunpack.c.l.b16 %v248
      %v381 = vunpack.c.l.b16 %v249
      %v382 = vunpack.c.l.b16 %v250
      %v383 = vunpack.c.l.b16 %v251
      %v384 = vunpack.c.l.b16 %v252
      %v385 = vunpack.c.l.b16 %v253
      %v386 = vunpack.c.l.b16 %v254
      %v387 = vunpack.c.l.b16 %v255
      %v388 = vunpack.c.l.b16 %v256
      %v389 = vunpack.c.l.b16 %v257
      %v390 = vunpack.c.l.b16 %v258
      %v391 = vunpack.c.l.b16 %v259
      %v392 = vunpack.c.l.b16 %v260
      %v393 = vunpack.c.l.b16 %v261
      %v394 = vunpack.c.l.b16 %v262
      %v395 = vunpack.c.l.b16 %v263
      %v396 = vunpack.c.l.b16 %v264
      %v397 = vunpack.c.l.b16 %v265
      %v398 = vunpack.c.l.b16 %v266
      %v399 = vunpack.c.l.b16 %v267
      %v400 = vunpack.c.l.b16 %v268
      %v401 = vunpack.c.l.b16 %v269
      %v402 = vunpack.c.l.b16 %v270
      %v403 = vunpack.c.l.b16 %v271
      %v404 = vunpack.c.l.b16 %v272
      %v405 = vunpack.c.l.b16 %v273
      %v406 = vunpack.c.l.b16 %v274
      %v407 = vunpack.c.l.b16 %v275
      %v408 = vunpack.c.l.b16 %v276
      %v409 = vunpack.c.l.b16 %v277
      %v410 = vpack.c.b16 %v375, %v374
      %v411 = vpack.c.b16 %v377, %v376
      %v412 = vpack.c.b16 %v379, %v378
      %v413 = vpack.c.b16 %v381, %v380
      %v414 = vpack.c.b16 %v383, %v382
      %v415 = vpack.c.b16 %v385, %v384
      %v416 = vpack.c.b16 %v387, %v386
      %v417 = vpack.c.b16 %v389, %v388
      %v418 = vpack.c.b16 %v391, %v390
      %v419 = vpack.c.b16 %v393, %v392
      %v420 = vpack.c.b16 %v395, %v394
      %v421 = vpack.c.b16 %v397, %v396
      %v422 = vpack.c.b16 %v399, %v398
      %v423 = vpack.c.b16 %v401, %v400
      %v424 = vpack.c.b16 %v403, %v402
      %v425 = vpack.c.b16 %v405, %v404
      %v426 = vpack.c.b16 %v407, %v406
      %v427 = vpack.c.b16 %v409, %v408
      %vm446 = vcmask 261120
      %v448 = vsel %vm446, %v320, 0
      %v451 = vsel %vm446, %v323, 0
      %v454 = vsel %vm446, %v326, 0
      %v457 = vsel %vm446, %v329, 0
      %459 = vmatprep.subr.bf16.mxu0 0
      %460 = vmatpush1.bf16.msra.mxu0 %v417
      %461 = vmatprep.subr.bf16.mxu0 0
      %462 = vmatpush1.bf16.msra.mxu0 %v416
      %463 = vmatprep.subr.bf16.mxu0 0
      %464 = vmatpush1.bf16.msra.mxu0 %v415
      %465 = vmatprep.subr.bf16.mxu0 0
      %466 = vmatpush1.bf16.msra.mxu0 %v414
      %467 = vmatprep.subr.bf16.mxu0 0
      %468 = vmatpush1.bf16.msra.mxu0 %v413
      %469 = vmatprep.subr.bf16.mxu0 0
      %470 = vmatpush1.bf16.msra.mxu0 %v412
      %471 = vmatprep.subr.bf16.mxu0 0
      %472 = vmatpush1.bf16.msra.mxu0 %v411
      %473 = vmatprep.subr.bf16.mxu0 0
      %474 = vmatpush1.bf16.msra.mxu0 %v410
      %475 = vmatprep.subr.bf16.mxu0 0
      %476 = vmatpush2.bf16.msra.mxu0 %v425
      %477 = vmatprep.subr.bf16.mxu0 0
      %478 = vmatpush2.bf16.msra.mxu0 %v424
      %479 = vmatprep.subr.bf16.mxu0 0
      %480 = vmatpush2.bf16.msra.mxu0 %v423
      %481 = vmatprep.subr.bf16.mxu0 0
      %482 = vmatpush2.bf16.msra.mxu0 %v422
      %483 = vmatprep.subr.bf16.mxu0 0
      %484 = vmatpush2.bf16.msra.mxu0 %v421
      %485 = vmatprep.subr.bf16.mxu0 0
      %486 = vmatpush2.bf16.msra.mxu0 %v420
      %487 = vmatprep.subr.bf16.mxu0 0
      %488 = vmatpush2.bf16.msra.mxu0 %v419
      %489 = vmatprep.subr.bf16.mxu0 0
      %490 = vmatpush2.bf16.msra.mxu0 %v418
      %491 = vmatprep.mubr.bf16.mxu0 %v319
      %492 = vmatmul.mubr.bf16.gmra.mxu0 %v318
      %v493 = vpop.f32.mrf.mxu0
      %v494 = vadd.f32 0.0, %v493
      %v495 = vpop.f32.mrf.mxu0
      %v496 = vpop.f32.mrf.mxu0
      %v497 = vadd.f32 0.0, %v496
      %v498 = vpop.f32.mrf.mxu0
      %499 = vmatprep.mubr.bf16.mxu0 %v322
      %500 = vmatmul.mubr.bf16.gmra.mxu0 %v321
      %v501 = vpop.f32.mrf.mxu0
      %v502 = vadd.f32 0.0, %v501
      %v503 = vpop.f32.mrf.mxu0
      %v504 = vpop.f32.mrf.mxu0
      %v505 = vadd.f32 0.0, %v504
      %v506 = vpop.f32.mrf.mxu0
      %507 = vmatprep.mubr.bf16.mxu0 %v325
      %508 = vmatmul.mubr.bf16.gmra.mxu0 %v324
      %v509 = vpop.f32.mrf.mxu0
      %v510 = vadd.f32 0.0, %v509
      %v511 = vpop.f32.mrf.mxu0
      %v512 = vpop.f32.mrf.mxu0
      %v513 = vadd.f32 0.0, %v512
      %v514 = vpop.f32.mrf.mxu0
      %515 = vmatprep.mubr.bf16.mxu0 %v328
      %516 = vmatmul.mubr.bf16.gmra.mxu0 %v327
      %v517 = vpop.f32.mrf.mxu0
      %v518 = vadd.f32 0.0, %v517
      %v519 = vpop.f32.mrf.mxu0
      %v520 = vpop.f32.mrf.mxu0
      %v521 = vadd.f32 0.0, %v520
      %v522 = vpop.f32.mrf.mxu0
      %523 = vdwg.mxu0
      %524 = vmatprep.subr.bf16.mxu0 0
      %525 = vmatpush1.bf16.msra.mxu0 0
      %526 = vmatprep.subr.bf16.mxu0 0
      %527 = vmatpush1.bf16.msra.mxu0 0
      %528 = vmatprep.subr.bf16.mxu0 0
      %529 = vmatpush1.bf16.msra.mxu0 0
      %530 = vmatprep.subr.bf16.mxu0 0
      %531 = vmatpush1.bf16.msra.mxu0 0
      %532 = vmatprep.subr.bf16.mxu0 0
      %533 = vmatpush1.bf16.msra.mxu0 0
      %534 = vmatprep.subr.bf16.mxu0 0
      %535 = vmatpush1.bf16.msra.mxu0 0
      %536 = vmatprep.subr.bf16.mxu0 0
      %537 = vmatpush1.bf16.msra.mxu0 %v427
      %538 = vmatprep.subr.bf16.mxu0 0
      %539 = vmatpush1.bf16.msra.mxu0 %v426
      %540 = vmatprep.subr.bf16.mxu0 0
      %541 = vmatpush2.bf16.msra.mxu0 0
      %542 = vmatprep.subr.bf16.mxu0 0
      %543 = vmatpush2.bf16.msra.mxu0 0
      %544 = vmatprep.subr.bf16.mxu0 0
      %545 = vmatpush2.bf16.msra.mxu0 0
      %546 = vmatprep.subr.bf16.mxu0 0
      %547 = vmatpush2.bf16.msra.mxu0 0
      %548 = vmatprep.subr.bf16.mxu0 0
      %549 = vmatpush2.bf16.msra.mxu0 0
      %550 = vmatprep.subr.bf16.mxu0 0
      %551 = vmatpush2.bf16.msra.mxu0 0
      %552 = vmatprep.subr.bf16.mxu0 0
      %553 = vmatpush2.bf16.msra.mxu0 0
      %554 = vmatprep.subr.bf16.mxu0 0
      %555 = vmatpush2.bf16.msra.mxu0 0
      %556 = vmatprep.mubr.bf16.mxu0 0
      %557 = vmatmul.mubr.bf16.gmra.mxu0 %v448
      %v558 = vpop.f32.mrf.mxu0
      %v559 = vadd.f32 %v494, %v558
      %v560 = vpop.f32.mrf.mxu0
      %v561 = vpop.f32.mrf.mxu0
      %v562 = vadd.f32 %v497, %v561
      %v563 = vpop.f32.mrf.mxu0
      %564 = vmatprep.mubr.bf16.mxu0 0
      %565 = vmatmul.mubr.bf16.gmra.mxu0 %v451
      %v566 = vpop.f32.mrf.mxu0
      %v567 = vadd.f32 %v502, %v566
      %v568 = vpop.f32.mrf.mxu0
      %v569 = vpop.f32.mrf.mxu0
      %v570 = vadd.f32 %v505, %v569
      %v571 = vpop.f32.mrf.mxu0
      %572 = vmatprep.mubr.bf16.mxu0 0
      %573 = vmatmul.mubr.bf16.gmra.mxu0 %v454
      %v574 = vpop.f32.mrf.mxu0
      %v575 = vadd.f32 %v510, %v574
      %v576 = vpop.f32.mrf.mxu0
      %v577 = vpop.f32.mrf.mxu0
      %v578 = vadd.f32 %v513, %v577
      %v579 = vpop.f32.mrf.mxu0
      %580 = vmatprep.mubr.bf16.mxu0 0
      %581 = vmatmul.mubr.bf16.gmra.mxu0 %v457
      %v582 = vpop.f32.mrf.mxu0
      %v583 = vadd.f32 %v518, %v582
      %v584 = vpop.f32.mrf.mxu0
      %v585 = vpop.f32.mrf.mxu0
      %v586 = vadd.f32 %v521, %v585
      %v587 = vpop.f32.mrf.mxu0
      %588 = vdwg.mxu0
      %vm589 = vcmask 523264
      %v590 = vsel %vm589, %v559, 0.0
      %v591 = vsel %vm589, %v562, 0.0
      %v592 = vadd.f32 %v590, %v591
      %v593 = vsel %vm589, %v567, 0.0
      %v594 = vadd.f32 %v592, %v593
      %v595 = vsel %vm589, %v570, 0.0
      %v596 = vadd.f32 %v594, %v595
      %v597 = vsel %vm589, %v575, 0.0
      %v598 = vadd.f32 %v596, %v597
      %v599 = vsel %vm589, %v578, 0.0
      %v600 = vadd.f32 %v598, %v599
      %v601 = vsel %vm589, %v583, 0.0
      %v602 = vadd.f32 %v600, %v601
      %v603 = vsel %vm589, %v586, 0.0
      %v604 = vadd.f32 %v602, %v603
      %v605 = vrot.slane %v604, 4
      %v606 = vadd.f32 %v604, %v605
      %v607 = vrot.slane %v606, 2
      %v608 = vadd.f32 %v606, %v607
      %v609 = vrot.slane %v608, 1
      %v610 = vadd.f32 %v608, %v609
      %v611 = vmul.f32 %v559, %v559
      %v612 = vmul.f32 %v562, %v562
      %v613 = vmul.f32 %v567, %v567
      %v614 = vmul.f32 %v570, %v570
      %v615 = vmul.f32 %v575, %v575
      %v616 = vmul.f32 %v578, %v578
      %v617 = vmul.f32 %v583, %v583
      %v618 = vmul.f32 %v586, %v586
      %v619 = vsel %vm589, %v611, 0.0
      %v620 = vsel %vm589, %v612, 0.0
      %v621 = vadd.f32 %v619, %v620
      %v622 = vsel %vm589, %v613, 0.0
      %v623 = vadd.f32 %v621, %v622
      %v624 = vsel %vm589, %v614, 0.0
      %v625 = vadd.f32 %v623, %v624
      %v626 = vsel %vm589, %v615, 0.0
      %v627 = vadd.f32 %v625, %v626
      %v628 = vsel %vm589, %v616, 0.0
      %v629 = vadd.f32 %v627, %v628
      %v630 = vsel %vm589, %v617, 0.0
      %v631 = vadd.f32 %v629, %v630
      %v632 = vsel %vm589, %v618, 0.0
      %v633 = vadd.f32 %v631, %v632
      %v634 = vrot.slane %v633, 4
      %v635 = vadd.f32 %v633, %v634
      %v636 = vrot.slane %v635, 2
      %v637 = vadd.f32 %v635, %v636
      %v638 = vrot.slane %v637, 1
      %v639 = vadd.f32 %v637, %v638
      %640 = vst.msk [vmem:[%s220] sm:$0xff] %vm589, %v610
      %641 = vst.msk [vmem:[%s224] sm:$0xff] %vm589, %v639
      %v642 = vpack.c.bf16 %v562, %v559
      %v643 = vpack.c.bf16 %v570, %v567
      %v644 = vpack.c.bf16 %v578, %v575
      %v645 = vpack.c.bf16 %v586, %v583
      %v650 = vunpack.c.l.b16 %v642
      %v651 = vunpack.c.h.b16 %v642
      %v652 = vunpack.c.l.b16 %v643
      %v653 = vunpack.c.h.b16 %v643
      %v654 = vunpack.c.l.b16 %v644
      %v655 = vunpack.c.h.b16 %v644
      %v656 = vunpack.c.l.b16 %v645
      %v657 = vunpack.c.h.b16 %v645
      %v658 = vpack.c.b16 %v650, %v650
      %v659 = vpack.c.b16 %v651, %v651
      %v660 = vpack.c.b16 %v652, %v652
      %v661 = vpack.c.b16 %v653, %v653
      %v662 = vpack.c.b16 %v654, %v654
      %v663 = vpack.c.b16 %v655, %v655
      %v664 = vpack.c.b16 %v656, %v656
      %v665 = vpack.c.b16 %v657, %v657
      %vm674 = vcmask 519168
      %675 = vst.msk [vmem:[%s215] sm:$0xf] %vm674, %v658
      %676 = vst.msk [vmem:[%s215 + $0x4] sm:$0xf] %vm674, %v659
      %677 = vst.msk [vmem:[%s215 + $0x8] sm:$0xf] %vm674, %v660
      %678 = vst.msk [vmem:[%s215 + $0xc] sm:$0xf] %vm674, %v661
      %679 = vst.msk [vmem:[%s215 + $0x10] sm:$0xf] %vm674, %v662
      %680 = vst.msk [vmem:[%s215 + $0x14] sm:$0xf] %vm674, %v663
      %681 = vst.msk [vmem:[%s215 + $0x18] sm:$0xf] %vm674, %v664
      %682 = vst.msk [vmem:[%s215 + $0x1c] sm:$0xf] %vm674, %v665
      %s683 = smul.u32 8, %s16
      %p684 = scmp.lt.s32.totalorder %s683, 15
      %s685 = scalar_select %p684, %s683, 15
      %s686 = smul.addr %s685, 4
      %s687 = scalar_lea.vmem %s2, %s686
      %p688 = scmp.lt.s32.totalorder %s16, 1
      %s689 = scalar_select %p688, %s16, 1
      %s690 = smul.addr %s689, 8
      %s691 = scalar_lea.vmem %s3, %s690
      %p692 = scmp.lt.s32.totalorder %s16, 1
      %s693 = scalar_select %p692, %s16, 1
      %s694 = smul.addr %s693, 8
      %s695 = scalar_lea.vmem %s4, %s694
      // Predicated region
      $region29: #{generator_forward.13} parent=27 // pred_check
        %p696 = pneg %p81
      $region30: #{generator_forward.13} parent=27 // pred_check_branch
        %698 = sbr.rel (%p696) target = $region32
      $region31: #{generator_forward.13} parent=27 // pred_region
        %s699 = smul.u32 8, %s16
      $region32: #{generator_forward.13} parent=27 // pred_fallthru
        _
      // Predicated region
      $region33: #{generator_forward.13} parent=27 // pred_check
        %p700 = pneg %p107
      $region34: #{generator_forward.13} parent=27 // pred_check_branch
        %702 = sbr.rel (%p700) target = $region36
      $region35: #{generator_forward.13} parent=27 // pred_region
        _
      $region36: #{generator_forward.13} parent=27 // pred_fallthru
        _
      // Predicated region
      $region37: #{generator_forward.13} parent=27 // pred_check
        %p703 = pneg %p133
      $region38: #{generator_forward.13} parent=27 // pred_check_branch
        %705 = sbr.rel (%p703) target = $region40
      $region39: #{generator_forward.13} parent=27 // pred_region
        _
      $region40: #{generator_forward.13} parent=27 // pred_fallthru
        _
    $region28: #{generator_forward.13} parent=5 // pred_fallthru
      _
    %p706 = scmp.le.s32.totalorder 2, %s11
    // Predicated region
    $region41: #{generator_forward.13} parent=5 // pred_check
      %p707 = pneg %p706
    $region42: #{generator_forward.13} parent=5 // pred_check_branch
      %709 = sbr.rel (%p707) target = $region44
    $region43: #{generator_forward.13} parent=5 // pred_region
      %s710 = ssub.s32 %s11, 2
      // Predicated region
      $region45: #{generator_forward.13} parent=43 // pred_check
        %p711 = pneg %p87
      $region46: #{generator_forward.13} parent=43 // pred_check_branch
        %713 = sbr.rel (%p711) target = $region48
      $region47: #{generator_forward.13} parent=43 // pred_region
        %s714 = smul.u32 8, %s17
        %p715 = scmp.lt.s32.totalorder %s714, 15
        %s716 = scalar_select %p715, %s714, 15
        %s717 = smul.addr %s716, 4
        %s718 = scalar_lea.vmem %s2, %s717
      $region48: #{generator_forward.13} parent=43 // pred_fallthru
        _
      // Predicated region
      $region49: #{generator_forward.13} parent=43 // pred_check
        %p719 = pneg %p113
      $region50: #{generator_forward.13} parent=43 // pred_check_branch
        %721 = sbr.rel (%p719) target = $region52
      $region51: #{generator_forward.13} parent=43 // pred_region
        %p722 = scmp.lt.s32.totalorder %s17, 1
        %s723 = scalar_select %p722, %s17, 1
        %s724 = smul.addr %s723, 8
        %s725 = scalar_lea.vmem %s3, %s724
      $region52: #{generator_forward.13} parent=43 // pred_fallthru
        _
      // Predicated region
      $region53: #{generator_forward.13} parent=43 // pred_check
        %p726 = pneg %p139
      $region54: #{generator_forward.13} parent=43 // pred_check_branch
        %728 = sbr.rel (%p726) target = $region56
      $region55: #{generator_forward.13} parent=43 // pred_region
        %p729 = scmp.lt.s32.totalorder %s17, 1
        %s730 = scalar_select %p729, %s17, 1
        %s731 = smul.addr %s730, 8
        %s732 = scalar_lea.vmem %s4, %s731
      $region56: #{generator_forward.13} parent=43 // pred_fallthru
        _
    $region44: #{generator_forward.13} parent=5 // pred_fallthru
      _
  $region6: #{generator_forward.13} parent=0 // loop_footer
    %s15 = sadd.s32 1, %s11
  $region7: #{generator_forward.13} parent=0 // loop_footer_branch
    %10 = sbr.rel target = $region3
  $region8: #{generator_forward.13} parent=0 // loop_exit
    _

// kernel: generator_forward.14
$region0: #{generator_forward.14}
  #allocation0 [shape = 'u32[]', space=smem, size = 0x4, offset = 0x4, fixed_abs, tag = 'smem constant byte address 0x4 - core index']
  #allocation1 [shape = 'u32[144,128]{1,0:T(1,128)}', space=vmem, size = 0x12000, scoped, tag = 'internal scratch']
  %s0 = inlined_call_operand.vmem [shape: bf16[128,64], index: 0, kind: input, shape index: {}]
  %s1 = inlined_call_operand.vmem [shape: f32[1,64], index: 1, kind: input, shape index: {}]
  %s2 = inlined_call_operand.vmem [shape: f32[1,64], index: 2, kind: input, shape index: {}]
  %s3 = inlined_call_operand.vmem [shape: bf16[128,64], index: 3, kind: output, shape index: {}]
  %s4 = sld [smem:[#allocation0]]
  $region45: #{generator_forward.14} parent=0
    _
  %s6 = ssub.s32 1, %s4
  %s7 = scalar_select 0, %s6, %s4
  loop: start=0, step=1, limit=4
  $region2: #{generator_forward.14} parent=0 // loop_pre_header
    _
  $region3: #{generator_forward.14} parent=0 // loop_header
    %s9 = sphi 0, %s13
    %p10 = scmp.ge.s32.totalorder %s9, 4
    %s19 = sphi 0, %s21
    %s22 = sphi 0, %s19
    %s23 = sphi 0, %s22
    %s39 = sphi 0, %s23
    %s43 = sphi 0, %s43
    %s45 = sphi 0, %s43
    %s46 = sphi 0, %s45
    %s60 = sphi 0, %s46
    %s64 = sphi 0, %s64
    %s66 = sphi 0, %s64
    %s67 = sphi 0, %s66
    %s81 = sphi 0, %s67
    %s87 = sphi 0, %s89
    %s90 = sphi 0, %s87
    %s91 = sphi 0, %s90
    %s107 = sphi 0, %s91
  $region4: #{generator_forward.14} parent=0 // loop_header_branch
    %12 = sbr.rel (%p10) target = $region8
  $region5: #{generator_forward.14} parent=0 // loop_body
    %s14 = ssub.s32 %s9, 1
    %s15 = ssub.s32 %s9, 2
    %s16 = sadd.s32 %s9, 1
    %s17 = ssub.s32 %s9, %s16
    %p18 = scmp.eq.s32.totalorder %s17, 0
    %s20 = sadd.s32 %s19, 1
    %s21 = scalar_select %p18, %s19, %s20
    %p24 = pneg %p18
    %p25 = scmp.eq.s32.totalorder %s9, 1
    %p26 = por %p24, %p25
    %p27 = scmp.ne.s32.totalorder %s19, %s22
    %p28 = scmp.eq.s32.totalorder %s9, 0
    %p29 = por %p27, %p28
    %p30 = scmp.ne.s32.totalorder %s19, %s22
    %p31 = scmp.eq.s32.totalorder %s14, 1
    %p32 = por %p30, %p31
    %p33 = scmp.ne.s32.totalorder %s22, %s23
    %p34 = scmp.eq.s32.totalorder %s14, 0
    %p35 = por %p33, %p34
    %p36 = scmp.ne.s32.totalorder %s22, %s23
    %p37 = scmp.eq.s32.totalorder %s15, 1
    %p38 = por %p36, %p37
    %p40 = scmp.ne.s32.totalorder %s23, %s39
    %p41 = scmp.eq.s32.totalorder %s15, 0
    %p42 = por %p40, %p41
    %s44 = sadd.s32 %s43, 1
    %p47 = scmp.eq.s32.totalorder %s9, 1
    %p48 = scmp.ne.s32.totalorder %s43, %s45
    %p49 = scmp.eq.s32.totalorder %s9, 0
    %p50 = por %p48, %p49
    %p51 = scmp.ne.s32.totalorder %s43, %s45
    %p52 = scmp.eq.s32.totalorder %s14, 1
    %p53 = por %p51, %p52
    %p54 = scmp.ne.s32.totalorder %s45, %s46
    %p55 = scmp.eq.s32.totalorder %s14, 0
    %p56 = por %p54, %p55
    %p57 = scmp.ne.s32.totalorder %s45, %s46
    %p58 = scmp.eq.s32.totalorder %s15, 1
    %p59 = por %p57, %p58
    %p61 = scmp.ne.s32.totalorder %s46, %s60
    %p62 = scmp.eq.s32.totalorder %s15, 0
    %p63 = por %p61, %p62
    %s65 = sadd.s32 %s64, 1
    %p68 = scmp.eq.s32.totalorder %s9, 1
    %p69 = scmp.ne.s32.totalorder %s64, %s66
    %p70 = scmp.eq.s32.totalorder %s9, 0
    %p71 = por %p69, %p70
    %p72 = scmp.ne.s32.totalorder %s64, %s66
    %p73 = scmp.eq.s32.totalorder %s14, 1
    %p74 = por %p72, %p73
    %p75 = scmp.ne.s32.totalorder %s66, %s67
    %p76 = scmp.eq.s32.totalorder %s14, 0
    %p77 = por %p75, %p76
    %p78 = scmp.ne.s32.totalorder %s66, %s67
    %p79 = scmp.eq.s32.totalorder %s15, 1
    %p80 = por %p78, %p79
    %p82 = scmp.ne.s32.totalorder %s67, %s81
    %p83 = scmp.eq.s32.totalorder %s15, 0
    %p84 = por %p82, %p83
    %s85 = ssub.s32 %s9, %s16
    %p86 = scmp.eq.s32.totalorder %s85, 0
    %s88 = sadd.s32 %s87, 1
    %s89 = scalar_select %p86, %s87, %s88
    %p92 = pneg %p86
    %p93 = scmp.eq.s32.totalorder %s9, 1
    %p94 = por %p92, %p93
    %p95 = scmp.ne.s32.totalorder %s87, %s90
    %p96 = scmp.eq.s32.totalorder %s9, 0
    %p97 = por %p95, %p96
    %p98 = scmp.ne.s32.totalorder %s87, %s90
    %p99 = scmp.eq.s32.totalorder %s14, 1
    %p100 = por %p98, %p99
    %p101 = scmp.ne.s32.totalorder %s90, %s91
    %p102 = scmp.eq.s32.totalorder %s14, 0
    %p103 = por %p101, %p102
    %p104 = scmp.ne.s32.totalorder %s90, %s91
    %p105 = scmp.eq.s32.totalorder %s15, 1
    %p106 = por %p104, %p105
    %p108 = scmp.ne.s32.totalorder %s91, %s107
    %p109 = scmp.eq.s32.totalorder %s15, 0
    %p110 = por %p108, %p109
    %p111 = scmp.le.s32.totalorder 1, %s9
    %p112 = scmp.lt.s32.totalorder %s9, 3
    %p113 = pnand %p111, %p112
    %p114 = pneg %p113
    // Predicated region
    $region9: #{generator_forward.14} parent=5 // pred_check
      _
    $region10: #{generator_forward.14} parent=5 // pred_check_branch
      %116 = sbr.rel (%p113) target = $region12
    $region11: #{generator_forward.14} parent=5 // pred_region
      %s117 = ssub.s32 %s9, 1
      // Predicated region
      $region13: #{generator_forward.14} parent=11 // pred_check
        %p118 = pneg %p56
      $region14: #{generator_forward.14} parent=11 // pred_check_branch
        %120 = sbr.rel (%p118) target = $region16
      $region15: #{generator_forward.14} parent=11 // pred_region
        _
      $region16: #{generator_forward.14} parent=11 // pred_fallthru
        _
      // Predicated region
      $region17: #{generator_forward.14} parent=11 // pred_check
        %p121 = pneg %p77
      $region18: #{generator_forward.14} parent=11 // pred_check_branch
        %123 = sbr.rel (%p121) target = $region20
      $region19: #{generator_forward.14} parent=11 // pred_region
        _
      $region20: #{generator_forward.14} parent=11 // pred_fallthru
        _
    $region12: #{generator_forward.14} parent=5 // pred_fallthru
      _
    %p124 = scmp.lt.s32.totalorder %s9, 2
    // Predicated region
    $region21: #{generator_forward.14} parent=5 // pred_check
      %p125 = pneg %p124
    $region22: #{generator_forward.14} parent=5 // pred_check_branch
      %127 = sbr.rel (%p125) target = $region24
    $region23: #{generator_forward.14} parent=5 // pred_region
      // Predicated region
      $region25: #{generator_forward.14} parent=23 // pred_check
        %p128 = pneg %p29
      $region26: #{generator_forward.14} parent=23 // pred_check_branch
        %130 = sbr.rel (%p128) target = $region28
      $region27: #{generator_forward.14} parent=23 // pred_region
        %s131 = smul.u32 8, %s9
        %p132 = scmp.lt.s32.totalorder %s131, 15
        %s133 = scalar_select %p132, %s131, 15
        %s134 = smul.addr %s133, 4
        %s135 = scalar_lea.vmem %s0, %s134
        %s136 = smul.u32 8, %s9
      $region28: #{generator_forward.14} parent=23 // pred_fallthru
        _
    $region24: #{generator_forward.14} parent=5 // pred_fallthru
      _
    %p137 = scmp.le.s32.totalorder 1, %s9
    %p138 = scmp.lt.s32.totalorder %s9, 3
    %p139 = pnand %p137, %p138
    %p140 = pneg %p139
    // Predicated region
    $region29: #{generator_forward.14} parent=5 // pred_check
      _
    $region30: #{generator_forward.14} parent=5 // pred_check_branch
      %142 = sbr.rel (%p139) target = $region32
    $region31: #{generator_forward.14} parent=5 // pred_region
      %s143 = ssub.s32 %s9, 1
      %s144 = smul.u32 8, %s14
      %p145 = scmp.lt.s32.totalorder %s144, 15
      %s146 = scalar_select %p145, %s144, 15
      %s147 = smul.addr %s146, 4
      %s148 = scalar_lea.vmem %s0, %s147
      %p149 = pneg %p35
      %p150 = pneg %p32
      %p151 = pneg %p56
      %p152 = pneg %p53
      %p153 = pneg %p77
      %p154 = pneg %p74
      %p155 = pneg %p103
      %p156 = pneg %p100
      %s157 = smul.u32 8, %s14
      %p158 = scmp.lt.s32.totalorder %s157, 15
      %s159 = scalar_select %p158, %s157, 15
      %s160 = smul.addr %s159, 4
      %s161 = scalar_lea.vmem %s3, %s160
      %s162 = smul.u32 8, %s14
      %p163 = scmp.lt.s32.totalorder %s162, 15
      %s164 = scalar_select %p163, %s162, 15
      %s165 = smul.addr %s164, 4
      %s166 = scalar_lea.vmem %s0, %s165
      %s167 = smul.u32 8, %s14
      %s168 = smul.u32 8, %s14
      %p169 = scmp.lt.s32.totalorder %s168, 15
      %s170 = scalar_select %p169, %s168, 15
      %s171 = smul.addr %s170, 4
      %s172 = scalar_lea.vmem %s3, %s171
      %s173 = smul.u32 8, %s14
      %v174 = vld [vmem:[%s166] sm:$0xf]
      %v175 = vld [vmem:[%s166 + $0x4] sm:$0xf]
      %v176 = vld [vmem:[%s166 + $0x8] sm:$0xf]
      %v177 = vld [vmem:[%s166 + $0xc] sm:$0xf]
      %v178 = vld [vmem:[%s166 + $0x10] sm:$0xf]
      %v179 = vld [vmem:[%s166 + $0x14] sm:$0xf]
      %v180 = vld [vmem:[%s166 + $0x18] sm:$0xf]
      %v181 = vld [vmem:[%s166 + $0x1c] sm:$0xf]
      %v182 = vunpack.c.l.bf16 %v174
      %v183 = vunpack.c.l.bf16 %v175
      %v184 = vunpack.c.l.bf16 %v176
      %v185 = vunpack.c.l.bf16 %v177
      %v186 = vunpack.c.l.bf16 %v178
      %v187 = vunpack.c.l.bf16 %v179
      %v188 = vunpack.c.l.bf16 %v180
      %v189 = vunpack.c.l.bf16 %v181
      %v190 = vld [vmem:[%s1] sm:$0x1]
      %v192 = vlaneseq
      %v193 = vshrl.u32 %v192, 7
      %v194 = vsub.s32 0, %v193
      %v195 = vrot.slane %v190, %v194
      %v197 = vmul.f32 %v182, %v195
      %v198 = vmul.f32 %v183, %v195
      %v199 = vmul.f32 %v184, %v195
      %v200 = vmul.f32 %v185, %v195
      %v201 = vmul.f32 %v186, %v195
      %v202 = vmul.f32 %v187, %v195
      %v203 = vmul.f32 %v188, %v195
      %v204 = vmul.f32 %v189, %v195
      %v205 = vld [vmem:[%s2] sm:$0x1]
      %v207 = vlaneseq
      %v208 = vshrl.u32 %v207, 7
      %v209 = vsub.s32 0, %v208
      %v210 = vrot.slane %v205, %v209
      %v212 = vadd.f32 %v197, %v210
      %v213 = vadd.f32 %v198, %v210
      %v214 = vadd.f32 %v199, %v210
      %v215 = vadd.f32 %v200, %v210
      %v216 = vadd.f32 %v201, %v210
      %v217 = vadd.f32 %v202, %v210
      %v218 = vadd.f32 %v203, %v210
      %v219 = vadd.f32 %v204, %v210
      %v220 = vmax.f32 %v212, 0.0
      %v221 = vmax.f32 %v213, 0.0
      %v222 = vmax.f32 %v214, 0.0
      %v223 = vmax.f32 %v215, 0.0
      %v224 = vmax.f32 %v216, 0.0
      %v225 = vmax.f32 %v217, 0.0
      %v226 = vmax.f32 %v218, 0.0
      %v227 = vmax.f32 %v219, 0.0
      %v228 = vpack.c.bf16 %v221, %v220
      %v229 = vpack.c.bf16 %v223, %v222
      %v230 = vpack.c.bf16 %v225, %v224
      %v231 = vpack.c.bf16 %v227, %v226
      %v236 = vunpack.c.l.b16 %v228
      %v237 = vunpack.c.h.b16 %v228
      %v238 = vunpack.c.l.b16 %v229
      %v239 = vunpack.c.h.b16 %v229
      %v240 = vunpack.c.l.b16 %v230
      %v241 = vunpack.c.h.b16 %v230
      %v242 = vunpack.c.l.b16 %v231
      %v243 = vunpack.c.h.b16 %v231
      %v244 = vpack.c.b16 %v236, %v236
      %v245 = vpack.c.b16 %v237, %v237
      %v246 = vpack.c.b16 %v238, %v238
      %v247 = vpack.c.b16 %v239, %v239
      %v248 = vpack.c.b16 %v240, %v240
      %v249 = vpack.c.b16 %v241, %v241
      %v250 = vpack.c.b16 %v242, %v242
      %v251 = vpack.c.b16 %v243, %v243
      %vm260 = vcmask 519168
      %261 = vst.msk [vmem:[%s172] sm:$0xf] %vm260, %v244
      %262 = vst.msk [vmem:[%s172 + $0x4] sm:$0xf] %vm260, %v245
      %263 = vst.msk [vmem:[%s172 + $0x8] sm:$0xf] %vm260, %v246
      %264 = vst.msk [vmem:[%s172 + $0xc] sm:$0xf] %vm260, %v247
      %265 = vst.msk [vmem:[%s172 + $0x10] sm:$0xf] %vm260, %v248
      %266 = vst.msk [vmem:[%s172 + $0x14] sm:$0xf] %vm260, %v249
      %267 = vst.msk [vmem:[%s172 + $0x18] sm:$0xf] %vm260, %v250
      %268 = vst.msk [vmem:[%s172 + $0x1c] sm:$0xf] %vm260, %v251
      %s269 = smul.u32 8, %s14
      %p270 = scmp.lt.s32.totalorder %s269, 15
      %s271 = scalar_select %p270, %s269, 15
      %s272 = smul.addr %s271, 4
      %s273 = scalar_lea.vmem %s3, %s272
      // Predicated region
      $region33: #{generator_forward.14} parent=31 // pred_check
        %p274 = pneg %p100
      $region34: #{generator_forward.14} parent=31 // pred_check_branch
        %276 = sbr.rel (%p274) target = $region36
      $region35: #{generator_forward.14} parent=31 // pred_region
        %s277 = smul.u32 8, %s14
      $region36: #{generator_forward.14} parent=31 // pred_fallthru
        _
    $region32: #{generator_forward.14} parent=5 // pred_fallthru
      _
    %p278 = scmp.le.s32.totalorder 2, %s9
    // Predicated region
    $region37: #{generator_forward.14} parent=5 // pred_check
      %p279 = pneg %p278
    $region38: #{generator_forward.14} parent=5 // pred_check_branch
      %281 = sbr.rel (%p279) target = $region40
    $region39: #{generator_forward.14} parent=5 // pred_region
      %s282 = ssub.s32 %s9, 2
      // Predicated region
      $region41: #{generator_forward.14} parent=39 // pred_check
        %p283 = pneg %p106
      $region42: #{generator_forward.14} parent=39 // pred_check_branch
        %285 = sbr.rel (%p283) target = $region44
      $region43: #{generator_forward.14} parent=39 // pred_region
        %s286 = smul.u32 8, %s15
        %p287 = scmp.lt.s32.totalorder %s286, 15
        %s288 = scalar_select %p287, %s286, 15
        %s289 = smul.addr %s288, 4
        %s290 = scalar_lea.vmem %s3, %s289
      $region44: #{generator_forward.14} parent=39 // pred_fallthru
        _
    $region40: #{generator_forward.14} parent=5 // pred_fallthru
      _
  $region6: #{generator_forward.14} parent=0 // loop_footer
    %s13 = sadd.s32 1, %s9
  $region7: #{generator_forward.14} parent=0 // loop_footer_branch
    %8 = sbr.rel target = $region3
  $region8: #{generator_forward.14} parent=0 // loop_exit
    _

// kernel: tile.77
$region0: #{tile.77}
  #allocation0 [shape = 's32[1]{0}', space=sflag, size = 0x4, scoped, tag = 'scoped memory for tile.77']
  %s0 = inlined_call_operand.vmem [shape: f32[8], index: 0, kind: input, shape index: {}]
  %s1 = inlined_call_operand.vmem [shape: f32[4,8], index: 1, kind: output, shape index: {}]
  // Predicated region
  $region2: #{tile.77} parent=0 // pred_check
    _
  $region3: #{tile.77} parent=0 // pred_check_branch
    %3 = sbr.rel (0) target = $region5
  $region4: #{tile.77} parent=0 // pred_region
    _
  $region5: #{tile.77} parent=0 // pred_fallthru
    _
  %v4 = vld [vmem:[%s0] ss:$0 sm:$0xff]
  %5 = vst [vmem:[%s1] sm:$0xf] %v4

// kernel: tile.79
$region0: #{tile.79}
  %s0 = inlined_call_operand.vmem [shape: f32[4,8], index: 0, kind: input, shape index: {}]
  %s1 = inlined_call_operand.vmem [shape: f32[1,32], index: 1, kind: output, shape index: {}]
  $region1: #{tile.79} parent=0
    #allocation0 [shape = 'u8[4096]{0}', space=vmem, size = 0x1000, scoped, tag = 'scoped mem for output reshape']
    #allocation1 [shape = 'u8[4096]{0}', space=vmem, size = 0x1000, scoped, tag = 'scoped mem for input reshape']
    %s3 = sshll.u32 1, 4
    %s4 = ssub.s32 %s3, 1
    %v5 = vld [vmem:[%s0] sm:%s4]
    %6 = vst [vmem:[#allocation1] sm:%s4] %v5
    %v7 = vld [vmem:[#allocation1] sm:$0x1]
    %vm8 = vcmask 64512
    %9 = vst.msk [vmem:[#allocation0] sm:$0x1] %vm8, %v7
    %s10 = scalar_lea.vmem [#allocation1], 3
    %v11 = vld [vmem:[%s10] sm:$0x1]
    %12 = vrot.lane.b32.xlu0 %v11, 24
    %v13 = vpop.permute.xlu0 %12
    %vm14 = vcmask 261312
    %15 = vst.msk [vmem:[#allocation0] sm:$0x1] %vm14, %v13
    %s16 = scalar_lea.vmem [#allocation1], 2
    %v17 = vld [vmem:[%s16] sm:$0x1]
    %18 = vrot.lane.b32.xlu0 %v17, 16
    %v19 = vpop.permute.xlu0 %18
    %vm20 = vcmask 195712
    %21 = vst.msk [vmem:[#allocation0] sm:$0x1] %vm20, %v19
    %s22 = scalar_lea.vmem [#allocation1], 1
    %v23 = vld [vmem:[%s22] sm:$0x1]
    %24 = vrot.lane.b32.xlu0 %v23, 8
    %v25 = vpop.permute.xlu0 %24
    %vm26 = vcmask 130112
    %27 = vst.msk [vmem:[#allocation0] sm:$0x1] %vm26, %v25
    %s29 = sshll.u32 1, 1
    %s30 = ssub.s32 %s29, 1
    %v32 = vld [vmem:[#allocation0] sm:%s30]
    %s33 = sshll.u32 1, 1
    %s34 = ssub.s32 %s33, 1
    %35 = vst [vmem:[%s1] sm:%s34] %v32

// kernel: generator_forward.15
$region0: #{generator_forward.15}
  #allocation0 [shape = 'u32[]', space=smem, size = 0x4, offset = 0x4, fixed_abs, tag = 'smem constant byte address 0x4 - core index']
  #allocation1 [shape = 'u32[144,128]{1,0:T(1,128)}', space=vmem, size = 0x12000, scoped, tag = 'internal scratch']
  %s0 = inlined_call_operand.vmem [shape: bf16[512,144], index: 0, kind: input, shape index: {}]
  %s1 = inlined_call_operand.vmem [shape: bf16[144,32], index: 1, kind: input, shape index: {}]
  %s2 = inlined_call_operand.vmem [shape: bf16[512,32], index: 2, kind: output, shape index: {0}]
  %s3 = inlined_call_operand.vmem [shape: f32[16,32], index: 3, kind: output, shape index: {1}]
  %s4 = inlined_call_operand.vmem [shape: f32[16,32], index: 4, kind: output, shape index: {2}]
  %5 = xla_tuple %s2, %s3, %s4
  %s6 = sld [smem:[#allocation0]]
  $region57: #{generator_forward.15} parent=0
    _
  %s8 = ssub.s32 1, %s6
  %s9 = scalar_select 0, %s8, %s6
  loop: start=0, step=1, limit=4
  $region2: #{generator_forward.15} parent=0 // loop_pre_header
    _
  $region3: #{generator_forward.15} parent=0 // loop_header
    %s11 = sphi 0, %s15
    %p12 = scmp.ge.s32.totalorder %s11, 4
    %s21 = sphi 0, %s23
    %s24 = sphi 0, %s21
    %s25 = sphi 0, %s24
    %s41 = sphi 0, %s25
    %s45 = sphi 0, %s45
    %s47 = sphi 0, %s45
    %s48 = sphi 0, %s47
    %s62 = sphi 0, %s48
    %s68 = sphi 0, %s70
    %s71 = sphi 0, %s68
    %s72 = sphi 0, %s71
    %s88 = sphi 0, %s72
    %s94 = sphi 0, %s96
    %s97 = sphi 0, %s94
    %s98 = sphi 0, %s97
    %s114 = sphi 0, %s98
    %s120 = sphi 0, %s122
    %s123 = sphi 0, %s120
    %s124 = sphi 0, %s123
    %s140 = sphi 0, %s124
  $region4: #{generator_forward.15} parent=0 // loop_header_branch
    %14 = sbr.rel (%p12) target = $region8
  $region5: #{generator_forward.15} parent=0 // loop_body
    %s16 = ssub.s32 %s11, 1
    %s17 = ssub.s32 %s11, 2
    %s18 = sadd.s32 %s11, 1
    %s19 = ssub.s32 %s11, %s18
    %p20 = scmp.eq.s32.totalorder %s19, 0
    %s22 = sadd.s32 %s21, 1
    %s23 = scalar_select %p20, %s21, %s22
    %p26 = pneg %p20
    %p27 = scmp.eq.s32.totalorder %s11, 1
    %p28 = por %p26, %p27
    %p29 = scmp.ne.s32.totalorder %s21, %s24
    %p30 = scmp.eq.s32.totalorder %s11, 0
    %p31 = por %p29, %p30
    %p32 = scmp.ne.s32.totalorder %s21, %s24
    %p33 = scmp.eq.s32.totalorder %s16, 1
    %p34 = por %p32, %p33
    %p35 = scmp.ne.s32.totalorder %s24, %s25
    %p36 = scmp.eq.s32.totalorder %s16, 0
    %p37 = por %p35, %p36
    %p38 = scmp.ne.s32.totalorder %s24, %s25
    %p39 = scmp.eq.s32.totalorder %s17, 1
    %p40 = por %p38, %p39
    %p42 = scmp.ne.s32.totalorder %s25, %s41
    %p43 = scmp.eq.s32.totalorder %s17, 0
    %p44 = por %p42, %p43
    %s46 = sadd.s32 %s45, 1
    %p49 = scmp.eq.s32.totalorder %s11, 1
    %p50 = scmp.ne.s32.totalorder %s45, %s47
    %p51 = scmp.eq.s32.totalorder %s11, 0
    %p52 = por %p50, %p51
    %p53 = scmp.ne.s32.totalorder %s45, %s47
    %p54 = scmp.eq.s32.totalorder %s16, 1
    %p55 = por %p53, %p54
    %p56 = scmp.ne.s32.totalorder %s47, %s48
    %p57 = scmp.eq.s32.totalorder %s16, 0
    %p58 = por %p56, %p57
    %p59 = scmp.ne.s32.totalorder %s47, %s48
    %p60 = scmp.eq.s32.totalorder %s17, 1
    %p61 = por %p59, %p60
    %p63 = scmp.ne.s32.totalorder %s48, %s62
    %p64 = scmp.eq.s32.totalorder %s17, 0
    %p65 = por %p63, %p64
    %s66 = ssub.s32 %s11, %s18
    %p67 = scmp.eq.s32.totalorder %s66, 0
    %s69 = sadd.s32 %s68, 1
    %s70 = scalar_select %p67, %s68, %s69
    %p73 = pneg %p67
    %p74 = scmp.eq.s32.totalorder %s11, 1
    %p75 = por %p73, %p74
    %p76 = scmp.ne.s32.totalorder %s68, %s71
    %p77 = scmp.eq.s32.totalorder %s11, 0
    %p78 = por %p76, %p77
    %p79 = scmp.ne.s32.totalorder %s68, %s71
    %p80 = scmp.eq.s32.totalorder %s16, 1
    %p81 = por %p79, %p80
    %p82 = scmp.ne.s32.totalorder %s71, %s72
    %p83 = scmp.eq.s32.totalorder %s16, 0
    %p84 = por %p82, %p83
    %p85 = scmp.ne.s32.totalorder %s71, %s72
    %p86 = scmp.eq.s32.totalorder %s17, 1
    %p87 = por %p85, %p86
    %p89 = scmp.ne.s32.totalorder %s72, %s88
    %p90 = scmp.eq.s32.totalorder %s17, 0
    %p91 = por %p89, %p90
    %s92 = ssub.s32 %s11, %s18
    %p93 = scmp.eq.s32.totalorder %s92, 0
    %s95 = sadd.s32 %s94, 1
    %s96 = scalar_select %p93, %s94, %s95
    %p99 = pneg %p93
    %p100 = scmp.eq.s32.totalorder %s11, 1
    %p101 = por %p99, %p100
    %p102 = scmp.ne.s32.totalorder %s94, %s97
    %p103 = scmp.eq.s32.totalorder %s11, 0
    %p104 = por %p102, %p103
    %p105 = scmp.ne.s32.totalorder %s94, %s97
    %p106 = scmp.eq.s32.totalorder %s16, 1
    %p107 = por %p105, %p106
    %p108 = scmp.ne.s32.totalorder %s97, %s98
    %p109 = scmp.eq.s32.totalorder %s16, 0
    %p110 = por %p108, %p109
    %p111 = scmp.ne.s32.totalorder %s97, %s98
    %p112 = scmp.eq.s32.totalorder %s17, 1
    %p113 = por %p111, %p112
    %p115 = scmp.ne.s32.totalorder %s98, %s114
    %p116 = scmp.eq.s32.totalorder %s17, 0
    %p117 = por %p115, %p116
    %s118 = ssub.s32 %s11, %s18
    %p119 = scmp.eq.s32.totalorder %s118, 0
    %s121 = sadd.s32 %s120, 1
    %s122 = scalar_select %p119, %s120, %s121
    %p125 = pneg %p119
    %p126 = scmp.eq.s32.totalorder %s11, 1
    %p127 = por %p125, %p126
    %p128 = scmp.ne.s32.totalorder %s120, %s123
    %p129 = scmp.eq.s32.totalorder %s11, 0
    %p130 = por %p128, %p129
    %p131 = scmp.ne.s32.totalorder %s120, %s123
    %p132 = scmp.eq.s32.totalorder %s16, 1
    %p133 = por %p131, %p132
    %p134 = scmp.ne.s32.totalorder %s123, %s124
    %p135 = scmp.eq.s32.totalorder %s16, 0
    %p136 = por %p134, %p135
    %p137 = scmp.ne.s32.totalorder %s123, %s124
    %p138 = scmp.eq.s32.totalorder %s17, 1
    %p139 = por %p137, %p138
    %p141 = scmp.ne.s32.totalorder %s124, %s140
    %p142 = scmp.eq.s32.totalorder %s17, 0
    %p143 = por %p141, %p142
    %p144 = scmp.le.s32.totalorder 1, %s11
    %p145 = scmp.lt.s32.totalorder %s11, 3
    %p146 = pnand %p144, %p145
    %p147 = pneg %p146
    // Predicated region
    $region9: #{generator_forward.15} parent=5 // pred_check
      _
    $region10: #{generator_forward.15} parent=5 // pred_check_branch
      %149 = sbr.rel (%p146) target = $region12
    $region11: #{generator_forward.15} parent=5 // pred_region
      %s150 = ssub.s32 %s11, 1
      // Predicated region
      $region13: #{generator_forward.15} parent=11 // pred_check
        %p151 = pneg %p58
      $region14: #{generator_forward.15} parent=11 // pred_check_branch
        %153 = sbr.rel (%p151) target = $region16
      $region15: #{generator_forward.15} parent=11 // pred_region
        _
      $region16: #{generator_forward.15} parent=11 // pred_fallthru
        _
    $region12: #{generator_forward.15} parent=5 // pred_fallthru
      _
    %p154 = scmp.lt.s32.totalorder %s11, 2
    // Predicated region
    $region17: #{generator_forward.15} parent=5 // pred_check
      %p155 = pneg %p154
    $region18: #{generator_forward.15} parent=5 // pred_check_branch
      %157 = sbr.rel (%p155) target = $region20
    $region19: #{generator_forward.15} parent=5 // pred_region
      // Predicated region
      $region21: #{generator_forward.15} parent=19 // pred_check
        %p158 = pneg %p31
      $region22: #{generator_forward.15} parent=19 // pred_check_branch
        %160 = sbr.rel (%p158) target = $region24
      $region23: #{generator_forward.15} parent=19 // pred_region
        %s161 = smul.u32 32, %s11
        %p162 = scmp.lt.s32.totalorder %s161, 63
        %s163 = scalar_select %p162, %s161, 63
        %s164 = smul.addr %s163, 2
        %s165 = smul.addr %s164, 4
        %s166 = scalar_lea.vmem %s0, %s165
        %s167 = smul.u32 32, %s11
      $region24: #{generator_forward.15} parent=19 // pred_fallthru
        _
    $region20: #{generator_forward.15} parent=5 // pred_fallthru
      _
    %p168 = scmp.le.s32.totalorder 1, %s11
    %p169 = scmp.lt.s32.totalorder %s11, 3
    %p170 = pnand %p168, %p169
    %p171 = pneg %p170
    // Predicated region
    $region25: #{generator_forward.15} parent=5 // pred_check
      _
    $region26: #{generator_forward.15} parent=5 // pred_check_branch
      %173 = sbr.rel (%p170) target = $region28
    $region27: #{generator_forward.15} parent=5 // pred_region
      %s174 = ssub.s32 %s11, 1
      %s175 = smul.u32 32, %s16
      %p176 = scmp.lt.s32.totalorder %s175, 63
      %s177 = scalar_select %p176, %s175, 63
      %s178 = smul.addr %s177, 2
      %s179 = smul.addr %s178, 4
      %s180 = scalar_lea.vmem %s0, %s179
      %p181 = pneg %p37
      %p182 = pneg %p34
      %p183 = pneg %p58
      %p184 = pneg %p55
      %p185 = pneg %p84
      %p186 = pneg %p81
      %s187 = smul.u32 32, %s16
      %p188 = scmp.lt.s32.totalorder %s187, 63
      %s189 = scalar_select %p188, %s187, 63
      %s190 = smul.addr %s189, 4
      %s191 = scalar_lea.vmem %s2, %s190
      %p192 = pneg %p110
      %p193 = pneg %p107
      %p194 = scmp.lt.s32.totalorder %s16, 1
      %s195 = scalar_select %p194, %s16, 1
      %s196 = smul.addr %s195, 8
      %s197 = scalar_lea.vmem %s3, %s196
      %p198 = pneg %p136
      %p199 = pneg %p133
      %p200 = scmp.lt.s32.totalorder %s16, 1
      %s201 = scalar_select %p200, %s16, 1
      %s202 = smul.addr %s201, 8
      %s203 = scalar_lea.vmem %s4, %s202
      %s204 = smul.u32 32, %s16
      %p205 = scmp.lt.s32.totalorder %s204, 63
      %s206 = scalar_select %p205, %s204, 63
      %s207 = smul.addr %s206, 2
      %s208 = smul.addr %s207, 4
      %s209 = scalar_lea.vmem %s0, %s208
      %s210 = smul.u32 32, %s16
      %s211 = smul.u32 32, %s16
      %p212 = scmp.lt.s32.totalorder %s211, 63
      %s213 = scalar_select %p212, %s211, 63
      %s214 = smul.addr %s213, 4
      %s215 = scalar_lea.vmem %s2, %s214
      %s216 = smul.u32 32, %s16
      %p217 = scmp.lt.s32.totalorder %s16, 1
      %s218 = scalar_select %p217, %s16, 1
      %s219 = smul.addr %s218, 8
      %s220 = scalar_lea.vmem %s3, %s219
      %p221 = scmp.lt.s32.totalorder %s16, 1
      %s222 = scalar_select %p221, %s16, 1
      %s223 = smul.addr %s222, 8
      %s224 = scalar_lea.vmem %s4, %s223
      %v226 = vld [vmem:[%s209] sm:$0xff]
      %v227 = vld [vmem:[%s209 + $0x8] sm:$0xff]
      %v228 = vld [vmem:[%s209 + $0x10] sm:$0xff]
      %v229 = vld [vmem:[%s209 + $0x18] sm:$0xff]
      %v230 = vld [vmem:[%s209 + $0x20] sm:$0xff]
      %v231 = vld [vmem:[%s209 + $0x28] sm:$0xff]
      %v232 = vld [vmem:[%s209 + $0x30] sm:$0xff]
      %v233 = vld [vmem:[%s209 + $0x38] sm:$0xff]
      %v234 = vld [vmem:[%s209 + $0x40] sm:$0xff]
      %v235 = vld [vmem:[%s209 + $0x48] sm:$0xff]
      %v236 = vld [vmem:[%s209 + $0x50] sm:$0xff]
      %v237 = vld [vmem:[%s209 + $0x58] sm:$0xff]
      %v238 = vld [vmem:[%s209 + $0x60] sm:$0xff]
      %v239 = vld [vmem:[%s209 + $0x68] sm:$0xff]
      %v240 = vld [vmem:[%s209 + $0x70] sm:$0xff]
      %v241 = vld [vmem:[%s209 + $0x78] sm:$0xff]
      %v242 = vld [vmem:[%s209 + $0x80] sm:$0xff]
      %v243 = vld [vmem:[%s209 + $0x88] sm:$0xff]
      %v244 = vld [vmem:[%s209 + $0x90] sm:$0xff]
      %v245 = vld [vmem:[%s209 + $0x98] sm:$0xff]
      %v246 = vld [vmem:[%s209 + $0xa0] sm:$0xff]
      %v247 = vld [vmem:[%s209 + $0xa8] sm:$0xff]
      %v248 = vld [vmem:[%s209 + $0xb0] sm:$0xff]
      %v249 = vld [vmem:[%s209 + $0xb8] sm:$0xff]
      %v250 = vld [vmem:[%s209 + $0xc0] sm:$0xff]
      %v251 = vld [vmem:[%s209 + $0xc8] sm:$0xff]
      %v252 = vld [vmem:[%s209 + $0xd0] sm:$0xff]
      %v253 = vld [vmem:[%s209 + $0xd8] sm:$0xff]
      %v254 = vld [vmem:[%s209 + $0xe0] sm:$0xff]
      %v255 = vld [vmem:[%s209 + $0xe8] sm:$0xff]
      %v256 = vld [vmem:[%s209 + $0xf0] sm:$0xff]
      %v257 = vld [vmem:[%s209 + $0xf8] sm:$0xff]
      %v258 = vld [vmem:[%s1] sm:$0xf]
      %v259 = vld [vmem:[%s1 + $0x4] sm:$0xf]
      %v260 = vld [vmem:[%s1 + $0x8] sm:$0xf]
      %v261 = vld [vmem:[%s1 + $0xc] sm:$0xf]
      %v262 = vld [vmem:[%s1 + $0x10] sm:$0xf]
      %v263 = vld [vmem:[%s1 + $0x14] sm:$0xf]
      %v264 = vld [vmem:[%s1 + $0x18] sm:$0xf]
      %v265 = vld [vmem:[%s1 + $0x1c] sm:$0xf]
      %v266 = vld [vmem:[%s1 + $0x20] sm:$0xf]
      %v267 = vld [vmem:[%s1 + $0x24] sm:$0xf]
      %v268 = vld [vmem:[%s1 + $0x28] sm:$0xf]
      %v269 = vld [vmem:[%s1 + $0x2c] sm:$0xf]
      %v270 = vld [vmem:[%s1 + $0x30] sm:$0xf]
      %v271 = vld [vmem:[%s1 + $0x34] sm:$0xf]
      %v272 = vld [vmem:[%s1 + $0x38] sm:$0xf]
      %v273 = vld [vmem:[%s1 + $0x3c] sm:$0xf]
      %v274 = vld [vmem:[%s1 + $0x40] sm:$0xf]
      %v275 = vld [vmem:[%s1 + $0x44] sm:$0xf]
      %v308 = vunpack.c.l.b16 %v226
      %v309 = vunpack.c.h.b16 %v226
      %v310 = vunpack.c.l.b16 %v227
      %v311 = vunpack.c.h.b16 %v227
      %v312 = vunpack.c.l.b16 %v228
      %v313 = vunpack.c.h.b16 %v228
      %v314 = vunpack.c.l.b16 %v229
      %v315 = vunpack.c.h.b16 %v229
      %v316 = vunpack.c.l.b16 %v230
      %v317 = vunpack.c.h.b16 %v230
      %v318 = vunpack.c.l.b16 %v231
      %v319 = vunpack.c.h.b16 %v231
      %v320 = vunpack.c.l.b16 %v232
      %v321 = vunpack.c.h.b16 %v232
      %v322 = vunpack.c.l.b16 %v233
      %v323 = vunpack.c.h.b16 %v233
      %v324 = vunpack.c.l.b16 %v234
      %v325 = vunpack.c.h.b16 %v234
      %v326 = vunpack.c.l.b16 %v235
      %v327 = vunpack.c.h.b16 %v235
      %v328 = vunpack.c.l.b16 %v236
      %v329 = vunpack.c.h.b16 %v236
      %v330 = vunpack.c.l.b16 %v237
      %v331 = vunpack.c.h.b16 %v237
      %v332 = vunpack.c.l.b16 %v238
      %v333 = vunpack.c.h.b16 %v238
      %v334 = vunpack.c.l.b16 %v239
      %v335 = vunpack.c.h.b16 %v239
      %v336 = vunpack.c.l.b16 %v240
      %v337 = vunpack.c.h.b16 %v240
      %v338 = vunpack.c.l.b16 %v241
      %v339 = vunpack.c.h.b16 %v241
      %v340 = vunpack.c.l.b16 %v242
      %v341 = vunpack.c.h.b16 %v242
      %v342 = vunpack.c.l.b16 %v243
      %v343 = vunpack.c.h.b16 %v243
      %v344 = vunpack.c.l.b16 %v244
      %v345 = vunpack.c.h.b16 %v244
      %v346 = vunpack.c.l.b16 %v245
      %v347 = vunpack.c.h.b16 %v245
      %v348 = vunpack.c.l.b16 %v246
      %v349 = vunpack.c.h.b16 %v246
      %v350 = vunpack.c.l.b16 %v247
      %v351 = vunpack.c.h.b16 %v247
      %v352 = vunpack.c.l.b16 %v248
      %v353 = vunpack.c.h.b16 %v248
      %v354 = vunpack.c.l.b16 %v249
      %v355 = vunpack.c.h.b16 %v249
      %v356 = vunpack.c.l.b16 %v250
      %v357 = vunpack.c.h.b16 %v250
      %v358 = vunpack.c.l.b16 %v251
      %v359 = vunpack.c.h.b16 %v251
      %v360 = vunpack.c.l.b16 %v252
      %v361 = vunpack.c.h.b16 %v252
      %v362 = vunpack.c.l.b16 %v253
      %v363 = vunpack.c.h.b16 %v253
      %v364 = vunpack.c.l.b16 %v254
      %v365 = vunpack.c.h.b16 %v254
      %v366 = vunpack.c.l.b16 %v255
      %v367 = vunpack.c.h.b16 %v255
      %v368 = vunpack.c.l.b16 %v256
      %v369 = vunpack.c.h.b16 %v256
      %v370 = vunpack.c.l.b16 %v257
      %v371 = vunpack.c.h.b16 %v257
      %v372 = vpack.c.b16 %v310, %v308
      %v373 = vpack.c.b16 %v311, %v309
      %v374 = vpack.c.b16 %v314, %v312
      %v375 = vpack.c.b16 %v315, %v313
      %v376 = vpack.c.b16 %v318, %v316
      %v377 = vpack.c.b16 %v319, %v317
      %v378 = vpack.c.b16 %v322, %v320
      %v379 = vpack.c.b16 %v323, %v321
      %v380 = vpack.c.b16 %v326, %v324
      %v381 = vpack.c.b16 %v327, %v325
      %v382 = vpack.c.b16 %v330, %v328
      %v383 = vpack.c.b16 %v331, %v329
      %v384 = vpack.c.b16 %v334, %v332
      %v385 = vpack.c.b16 %v335, %v333
      %v386 = vpack.c.b16 %v338, %v336
      %v387 = vpack.c.b16 %v339, %v337
      %v388 = vpack.c.b16 %v342, %v340
      %v389 = vpack.c.b16 %v343, %v341
      %v390 = vpack.c.b16 %v346, %v344
      %v391 = vpack.c.b16 %v347, %v345
      %v392 = vpack.c.b16 %v350, %v348
      %v393 = vpack.c.b16 %v351, %v349
      %v394 = vpack.c.b16 %v354, %v352
      %v395 = vpack.c.b16 %v355, %v353
      %v396 = vpack.c.b16 %v358, %v356
      %v397 = vpack.c.b16 %v359, %v357
      %v398 = vpack.c.b16 %v362, %v360
      %v399 = vpack.c.b16 %v363, %v361
      %v400 = vpack.c.b16 %v366, %v364
      %v401 = vpack.c.b16 %v367, %v365
      %v402 = vpack.c.b16 %v370, %v368
      %v403 = vpack.c.b16 %v371, %v369
      %v438 = vunpack.c.l.b16 %v258
      %v439 = vunpack.c.l.b16 %v259
      %v440 = vunpack.c.l.b16 %v260
      %v441 = vunpack.c.l.b16 %v261
      %v442 = vunpack.c.l.b16 %v262
      %v443 = vunpack.c.l.b16 %v263
      %v444 = vunpack.c.l.b16 %v264
      %v445 = vunpack.c.l.b16 %v265
      %v446 = vunpack.c.l.b16 %v266
      %v447 = vunpack.c.l.b16 %v267
      %v448 = vunpack.c.l.b16 %v268
      %v449 = vunpack.c.l.b16 %v269
      %v450 = vunpack.c.l.b16 %v270
      %v451 = vunpack.c.l.b16 %v271
      %v452 = vunpack.c.l.b16 %v272
      %v453 = vunpack.c.l.b16 %v273
      %v454 = vunpack.c.l.b16 %v274
      %v455 = vunpack.c.l.b16 %v275
      %v456 = vpack.c.b16 %v439, %v438
      %v457 = vpack.c.b16 %v441, %v440
      %v458 = vpack.c.b16 %v443, %v442
      %v459 = vpack.c.b16 %v445, %v444
      %v460 = vpack.c.b16 %v447, %v446
      %v461 = vpack.c.b16 %v449, %v448
      %v462 = vpack.c.b16 %v451, %v450
      %v463 = vpack.c.b16 %v453, %v452
      %v464 = vpack.c.b16 %v455, %v454
      %vm474 = vcmask 130048
      %v476 = vsel %vm474, %v373, 0
      %v479 = vsel %vm474, %v375, 0
      %v482 = vsel %vm474, %v377, 0
      %v485 = vsel %vm474, %v379, 0
      %v488 = vsel %vm474, %v381, 0
      %v491 = vsel %vm474, %v383, 0
      %v494 = vsel %vm474, %v385, 0
      %v497 = vsel %vm474, %v387, 0
      %v500 = vsel %vm474, %v389, 0
      %v503 = vsel %vm474, %v391, 0
      %v506 = vsel %vm474, %v393, 0
      %v509 = vsel %vm474, %v395, 0
      %v512 = vsel %vm474, %v397, 0
      %v515 = vsel %vm474, %v399, 0
      %v518 = vsel %vm474, %v401, 0
      %v521 = vsel %vm474, %v403, 0
      %523 = vmatprep.subr.bf16.mxu0 0
      %524 = vmatpush1.bf16.msra.mxu0 %v463
      %525 = vmatprep.subr.bf16.mxu0 0
      %526 = vmatpush1.bf16.msra.mxu0 %v462
      %527 = vmatprep.subr.bf16.mxu0 0
      %528 = vmatpush1.bf16.msra.mxu0 %v461
      %529 = vmatprep.subr.bf16.mxu0 0
      %530 = vmatpush1.bf16.msra.mxu0 %v460
      %531 = vmatprep.subr.bf16.mxu0 0
      %532 = vmatpush1.bf16.msra.mxu0 %v459
      %533 = vmatprep.subr.bf16.mxu0 0
      %534 = vmatpush1.bf16.msra.mxu0 %v458
      %535 = vmatprep.subr.bf16.mxu0 0
      %536 = vmatpush1.bf16.msra.mxu0 %v457
      %537 = vmatprep.subr.bf16.mxu0 0
      %538 = vmatpush1.bf16.msra.mxu0 %v456
      %539 = vmatprep.subr.bf16.mxu0 0
      %540 = vmatpush2.bf16.msra.mxu0 0
      %541 = vmatprep.subr.bf16.mxu0 0
      %542 = vmatpush2.bf16.msra.mxu0 0
      %543 = vmatprep.subr.bf16.mxu0 0
      %544 = vmatpush2.bf16.msra.mxu0 0
      %545 = vmatprep.subr.bf16.mxu0 0
      %546 = vmatpush2.bf16.msra.mxu0 0
      %547 = vmatprep.subr.bf16.mxu0 0
      %548 = vmatpush2.bf16.msra.mxu0 0
      %549 = vmatprep.subr.bf16.mxu0 0
      %550 = vmatpush2.bf16.msra.mxu0 0
      %551 = vmatprep.subr.bf16.mxu0 0
      %552 = vmatpush2.bf16.msra.mxu0 0
      %553 = vmatprep.subr.bf16.mxu0 0
      %554 = vmatpush2.bf16.msra.mxu0 %v464
      %555 = vmatprep.mubr.bf16.mxu0 %v476
      %556 = vmatmul.mubr.bf16.gmra.mxu0 %v372
      %v557 = vpop.f32.mrf.mxu0
      %v558 = vadd.f32 0.0, %v557
      %v559 = vpop.f32.mrf.mxu0
      %v560 = vpop.f32.mrf.mxu0
      %v561 = vadd.f32 0.0, %v560
      %v562 = vpop.f32.mrf.mxu0
      %563 = vmatprep.mubr.bf16.mxu0 %v479
      %564 = vmatmul.mubr.bf16.gmra.mxu0 %v374
      %v565 = vpop.f32.mrf.mxu0
      %v566 = vadd.f32 0.0, %v565
      %v567 = vpop.f32.mrf.mxu0
      %v568 = vpop.f32.mrf.mxu0
      %v569 = vadd.f32 0.0, %v568
      %v570 = vpop.f32.mrf.mxu0
      %571 = vmatprep.mubr.bf16.mxu0 %v482
      %572 = vmatmul.mubr.bf16.gmra.mxu0 %v376
      %v573 = vpop.f32.mrf.mxu0
      %v574 = vadd.f32 0.0, %v573
      %v575 = vpop.f32.mrf.mxu0
      %v576 = vpop.f32.mrf.mxu0
      %v577 = vadd.f32 0.0, %v576
      %v578 = vpop.f32.mrf.mxu0
      %579 = vmatprep.mubr.bf16.mxu0 %v485
      %580 = vmatmul.mubr.bf16.gmra.mxu0 %v378
      %v581 = vpop.f32.mrf.mxu0
      %v582 = vadd.f32 0.0, %v581
      %v583 = vpop.f32.mrf.mxu0
      %v584 = vpop.f32.mrf.mxu0
      %v585 = vadd.f32 0.0, %v584
      %v586 = vpop.f32.mrf.mxu0
      %587 = vmatprep.mubr.bf16.mxu0 %v488
      %588 = vmatmul.mubr.bf16.gmra.mxu0 %v380
      %v589 = vpop.f32.mrf.mxu0
      %v590 = vadd.f32 0.0, %v589
      %v591 = vpop.f32.mrf.mxu0
      %v592 = vpop.f32.mrf.mxu0
      %v593 = vadd.f32 0.0, %v592
      %v594 = vpop.f32.mrf.mxu0
      %595 = vmatprep.mubr.bf16.mxu0 %v491
      %596 = vmatmul.mubr.bf16.gmra.mxu0 %v382
      %v597 = vpop.f32.mrf.mxu0
      %v598 = vadd.f32 0.0, %v597
      %v599 = vpop.f32.mrf.mxu0
      %v600 = vpop.f32.mrf.mxu0
      %v601 = vadd.f32 0.0, %v600
      %v602 = vpop.f32.mrf.mxu0
      %603 = vmatprep.mubr.bf16.mxu0 %v494
      %604 = vmatmul.mubr.bf16.gmra.mxu0 %v384
      %v605 = vpop.f32.mrf.mxu0
      %v606 = vadd.f32 0.0, %v605
      %v607 = vpop.f32.mrf.mxu0
      %v608 = vpop.f32.mrf.mxu0
      %v609 = vadd.f32 0.0, %v608
      %v610 = vpop.f32.mrf.mxu0
      %611 = vmatprep.mubr.bf16.mxu0 %v497
      %612 = vmatmul.mubr.bf16.gmra.mxu0 %v386
      %v613 = vpop.f32.mrf.mxu0
      %v614 = vadd.f32 0.0, %v613
      %v615 = vpop.f32.mrf.mxu0
      %v616 = vpop.f32.mrf.mxu0
      %v617 = vadd.f32 0.0, %v616
      %v618 = vpop.f32.mrf.mxu0
      %619 = vmatprep.mubr.bf16.mxu0 %v500
      %620 = vmatmul.mubr.bf16.gmra.mxu0 %v388
      %v621 = vpop.f32.mrf.mxu0
      %v622 = vadd.f32 0.0, %v621
      %v623 = vpop.f32.mrf.mxu0
      %v624 = vpop.f32.mrf.mxu0
      %v625 = vadd.f32 0.0, %v624
      %v626 = vpop.f32.mrf.mxu0
      %627 = vmatprep.mubr.bf16.mxu0 %v503
      %628 = vmatmul.mubr.bf16.gmra.mxu0 %v390
      %v629 = vpop.f32.mrf.mxu0
      %v630 = vadd.f32 0.0, %v629
      %v631 = vpop.f32.mrf.mxu0
      %v632 = vpop.f32.mrf.mxu0
      %v633 = vadd.f32 0.0, %v632
      %v634 = vpop.f32.mrf.mxu0
      %635 = vmatprep.mubr.bf16.mxu0 %v506
      %636 = vmatmul.mubr.bf16.gmra.mxu0 %v392
      %v637 = vpop.f32.mrf.mxu0
      %v638 = vadd.f32 0.0, %v637
      %v639 = vpop.f32.mrf.mxu0
      %v640 = vpop.f32.mrf.mxu0
      %v641 = vadd.f32 0.0, %v640
      %v642 = vpop.f32.mrf.mxu0
      %643 = vmatprep.mubr.bf16.mxu0 %v509
      %644 = vmatmul.mubr.bf16.gmra.mxu0 %v394
      %v645 = vpop.f32.mrf.mxu0
      %v646 = vadd.f32 0.0, %v645
      %v647 = vpop.f32.mrf.mxu0
      %v648 = vpop.f32.mrf.mxu0
      %v649 = vadd.f32 0.0, %v648
      %v650 = vpop.f32.mrf.mxu0
      %651 = vmatprep.mubr.bf16.mxu0 %v512
      %652 = vmatmul.mubr.bf16.gmra.mxu0 %v396
      %v653 = vpop.f32.mrf.mxu0
      %v654 = vadd.f32 0.0, %v653
      %v655 = vpop.f32.mrf.mxu0
      %v656 = vpop.f32.mrf.mxu0
      %v657 = vadd.f32 0.0, %v656
      %v658 = vpop.f32.mrf.mxu0
      %659 = vmatprep.mubr.bf16.mxu0 %v515
      %660 = vmatmul.mubr.bf16.gmra.mxu0 %v398
      %v661 = vpop.f32.mrf.mxu0
      %v662 = vadd.f32 0.0, %v661
      %v663 = vpop.f32.mrf.mxu0
      %v664 = vpop.f32.mrf.mxu0
      %v665 = vadd.f32 0.0, %v664
      %v666 = vpop.f32.mrf.mxu0
      %667 = vmatprep.mubr.bf16.mxu0 %v518
      %668 = vmatmul.mubr.bf16.gmra.mxu0 %v400
      %v669 = vpop.f32.mrf.mxu0
      %v670 = vadd.f32 0.0, %v669
      %v671 = vpop.f32.mrf.mxu0
      %v672 = vpop.f32.mrf.mxu0
      %v673 = vadd.f32 0.0, %v672
      %v674 = vpop.f32.mrf.mxu0
      %675 = vmatprep.mubr.bf16.mxu0 %v521
      %676 = vmatmul.mubr.bf16.gmra.mxu0 %v402
      %v677 = vpop.f32.mrf.mxu0
      %v678 = vadd.f32 0.0, %v677
      %v679 = vpop.f32.mrf.mxu0
      %v680 = vpop.f32.mrf.mxu0
      %v681 = vadd.f32 0.0, %v680
      %v682 = vpop.f32.mrf.mxu0
      %683 = vdwg.mxu0
      %vm684 = vcmask 261120
      %v685 = vsel %vm684, %v558, 0.0
      %v686 = vsel %vm684, %v561, 0.0
      %v687 = vadd.f32 %v685, %v686
      %v688 = vsel %vm684, %v566, 0.0
      %v689 = vadd.f32 %v687, %v688
      %v690 = vsel %vm684, %v569, 0.0
      %v691 = vadd.f32 %v689, %v690
      %v692 = vsel %vm684, %v574, 0.0
      %v693 = vadd.f32 %v691, %v692
      %v694 = vsel %vm684, %v577, 0.0
      %v695 = vadd.f32 %v693, %v694
      %v696 = vsel %vm684, %v582, 0.0
      %v697 = vadd.f32 %v695, %v696
      %v698 = vsel %vm684, %v585, 0.0
      %v699 = vadd.f32 %v697, %v698
      %v700 = vsel %vm684, %v590, 0.0
      %v701 = vadd.f32 %v699, %v700
      %v702 = vsel %vm684, %v593, 0.0
      %v703 = vadd.f32 %v701, %v702
      %v704 = vsel %vm684, %v598, 0.0
      %v705 = vadd.f32 %v703, %v704
      %v706 = vsel %vm684, %v601, 0.0
      %v707 = vadd.f32 %v705, %v706
      %v708 = vsel %vm684, %v606, 0.0
      %v709 = vadd.f32 %v707, %v708
      %v710 = vsel %vm684, %v609, 0.0
      %v711 = vadd.f32 %v709, %v710
      %v712 = vsel %vm684, %v614, 0.0
      %v713 = vadd.f32 %v711, %v712
      %v714 = vsel %vm684, %v617, 0.0
      %v715 = vadd.f32 %v713, %v714
      %v716 = vsel %vm684, %v622, 0.0
      %v717 = vadd.f32 %v715, %v716
      %v718 = vsel %vm684, %v625, 0.0
      %v719 = vadd.f32 %v717, %v718
      %v720 = vsel %vm684, %v630, 0.0
      %v721 = vadd.f32 %v719, %v720
      %v722 = vsel %vm684, %v633, 0.0
      %v723 = vadd.f32 %v721, %v722
      %v724 = vsel %vm684, %v638, 0.0
      %v725 = vadd.f32 %v723, %v724
      %v726 = vsel %vm684, %v641, 0.0
      %v727 = vadd.f32 %v725, %v726
      %v728 = vsel %vm684, %v646, 0.0
      %v729 = vadd.f32 %v727, %v728
      %v730 = vsel %vm684, %v649, 0.0
      %v731 = vadd.f32 %v729, %v730
      %v732 = vsel %vm684, %v654, 0.0
      %v733 = vadd.f32 %v731, %v732
      %v734 = vsel %vm684, %v657, 0.0
      %v735 = vadd.f32 %v733, %v734
      %v736 = vsel %vm684, %v662, 0.0
      %v737 = vadd.f32 %v735, %v736
      %v738 = vsel %vm684, %v665, 0.0
      %v739 = vadd.f32 %v737, %v738
      %v740 = vsel %vm684, %v670, 0.0
      %v741 = vadd.f32 %v739, %v740
      %v742 = vsel %vm684, %v673, 0.0
      %v743 = vadd.f32 %v741, %v742
      %v744 = vsel %vm684, %v678, 0.0
      %v745 = vadd.f32 %v743, %v744
      %v746 = vsel %vm684, %v681, 0.0
      %v747 = vadd.f32 %v745, %v746
      %v748 = vrot.slane %v747, 4
      %v749 = vadd.f32 %v747, %v748
      %v750 = vrot.slane %v749, 2
      %v751 = vadd.f32 %v749, %v750
      %v752 = vrot.slane %v751, 1
      %v753 = vadd.f32 %v751, %v752
      %v754 = vmul.f32 %v558, %v558
      %v755 = vmul.f32 %v561, %v561
      %v756 = vmul.f32 %v566, %v566
      %v757 = vmul.f32 %v569, %v569
      %v758 = vmul.f32 %v574, %v574
      %v759 = vmul.f32 %v577, %v577
      %v760 = vmul.f32 %v582, %v582
      %v761 = vmul.f32 %v585, %v585
      %v762 = vmul.f32 %v590, %v590
      %v763 = vmul.f32 %v593, %v593
      %v764 = vmul.f32 %v598, %v598
      %v765 = vmul.f32 %v601, %v601
      %v766 = vmul.f32 %v606, %v606
      %v767 = vmul.f32 %v609, %v609
      %v768 = vmul.f32 %v614, %v614
      %v769 = vmul.f32 %v617, %v617
      %v770 = vmul.f32 %v622, %v622
      %v771 = vmul.f32 %v625, %v625
      %v772 = vmul.f32 %v630, %v630
      %v773 = vmul.f32 %v633, %v633
      %v774 = vmul.f32 %v638, %v638
      %v775 = vmul.f32 %v641, %v641
      %v776 = vmul.f32 %v646, %v646
      %v777 = vmul.f32 %v649, %v649
      %v778 = vmul.f32 %v654, %v654
      %v779 = vmul.f32 %v657, %v657
      %v780 = vmul.f32 %v662, %v662
      %v781 = vmul.f32 %v665, %v665
      %v782 = vmul.f32 %v670, %v670
      %v783 = vmul.f32 %v673, %v673
      %v784 = vmul.f32 %v678, %v678
      %v785 = vmul.f32 %v681, %v681
      %v786 = vsel %vm684, %v754, 0.0
      %v787 = vsel %vm684, %v755, 0.0
      %v788 = vadd.f32 %v786, %v787
      %v789 = vsel %vm684, %v756, 0.0
      %v790 = vadd.f32 %v788, %v789
      %v791 = vsel %vm684, %v757, 0.0
      %v792 = vadd.f32 %v790, %v791
      %v793 = vsel %vm684, %v758, 0.0
      %v794 = vadd.f32 %v792, %v793
      %v795 = vsel %vm684, %v759, 0.0
      %v796 = vadd.f32 %v794, %v795
      %v797 = vsel %vm684, %v760, 0.0
      %v798 = vadd.f32 %v796, %v797
      %v799 = vsel %vm684, %v761, 0.0
      %v800 = vadd.f32 %v798, %v799
      %v801 = vsel %vm684, %v762, 0.0
      %v802 = vadd.f32 %v800, %v801
      %v803 = vsel %vm684, %v763, 0.0
      %v804 = vadd.f32 %v802, %v803
      %v805 = vsel %vm684, %v764, 0.0
      %v806 = vadd.f32 %v804, %v805
      %v807 = vsel %vm684, %v765, 0.0
      %v808 = vadd.f32 %v806, %v807
      %v809 = vsel %vm684, %v766, 0.0
      %v810 = vadd.f32 %v808, %v809
      %v811 = vsel %vm684, %v767, 0.0
      %v812 = vadd.f32 %v810, %v811
      %v813 = vsel %vm684, %v768, 0.0
      %v814 = vadd.f32 %v812, %v813
      %v815 = vsel %vm684, %v769, 0.0
      %v816 = vadd.f32 %v814, %v815
      %v817 = vsel %vm684, %v770, 0.0
      %v818 = vadd.f32 %v816, %v817
      %v819 = vsel %vm684, %v771, 0.0
      %v820 = vadd.f32 %v818, %v819
      %v821 = vsel %vm684, %v772, 0.0
      %v822 = vadd.f32 %v820, %v821
      %v823 = vsel %vm684, %v773, 0.0
      %v824 = vadd.f32 %v822, %v823
      %v825 = vsel %vm684, %v774, 0.0
      %v826 = vadd.f32 %v824, %v825
      %v827 = vsel %vm684, %v775, 0.0
      %v828 = vadd.f32 %v826, %v827
      %v829 = vsel %vm684, %v776, 0.0
      %v830 = vadd.f32 %v828, %v829
      %v831 = vsel %vm684, %v777, 0.0
      %v832 = vadd.f32 %v830, %v831
      %v833 = vsel %vm684, %v778, 0.0
      %v834 = vadd.f32 %v832, %v833
      %v835 = vsel %vm684, %v779, 0.0
      %v836 = vadd.f32 %v834, %v835
      %v837 = vsel %vm684, %v780, 0.0
      %v838 = vadd.f32 %v836, %v837
      %v839 = vsel %vm684, %v781, 0.0
      %v840 = vadd.f32 %v838, %v839
      %v841 = vsel %vm684, %v782, 0.0
      %v842 = vadd.f32 %v840, %v841
      %v843 = vsel %vm684, %v783, 0.0
      %v844 = vadd.f32 %v842, %v843
      %v845 = vsel %vm684, %v784, 0.0
      %v846 = vadd.f32 %v844, %v845
      %v847 = vsel %vm684, %v785, 0.0
      %v848 = vadd.f32 %v846, %v847
      %v849 = vrot.slane %v848, 4
      %v850 = vadd.f32 %v848, %v849
      %v851 = vrot.slane %v850, 2
      %v852 = vadd.f32 %v850, %v851
      %v853 = vrot.slane %v852, 1
      %v854 = vadd.f32 %v852, %v853
      %855 = vst.msk [vmem:[%s220] sm:$0xff] %vm684, %v753
      %856 = vst.msk [vmem:[%s224] sm:$0xff] %vm684, %v854
      %v857 = vpack.c.bf16 %v561, %v558
      %v858 = vpack.c.bf16 %v569, %v566
      %v859 = vpack.c.bf16 %v577, %v574
      %v860 = vpack.c.bf16 %v585, %v582
      %v861 = vpack.c.bf16 %v593, %v590
      %v862 = vpack.c.bf16 %v601, %v598
      %v863 = vpack.c.bf16 %v609, %v606
      %v864 = vpack.c.bf16 %v617, %v614
      %v865 = vpack.c.bf16 %v625, %v622
      %v866 = vpack.c.bf16 %v633, %v630
      %v867 = vpack.c.bf16 %v641, %v638
      %v868 = vpack.c.bf16 %v649, %v646
      %v869 = vpack.c.bf16 %v657, %v654
      %v870 = vpack.c.bf16 %v665, %v662
      %v871 = vpack.c.bf16 %v673, %v670
      %v872 = vpack.c.bf16 %v681, %v678
      %v889 = vunpack.c.l.b16 %v857
      %v890 = vunpack.c.h.b16 %v857
      %v891 = vunpack.c.l.b16 %v858
      %v892 = vunpack.c.h.b16 %v858
      %v893 = vunpack.c.l.b16 %v859
      %v894 = vunpack.c.h.b16 %v859
      %v895 = vunpack.c.l.b16 %v860
      %v896 = vunpack.c.h.b16 %v860
      %v897 = vunpack.c.l.b16 %v861
      %v898 = vunpack.c.h.b16 %v861
      %v899 = vunpack.c.l.b16 %v862
      %v900 = vunpack.c.h.b16 %v862
      %v901 = vunpack.c.l.b16 %v863
      %v902 = vunpack.c.h.b16 %v863
      %v903 = vunpack.c.l.b16 %v864
      %v904 = vunpack.c.h.b16 %v864
      %v905 = vunpack.c.l.b16 %v865
      %v906 = vunpack.c.h.b16 %v865
      %v907 = vunpack.c.l.b16 %v866
      %v908 = vunpack.c.h.b16 %v866
      %v909 = vunpack.c.l.b16 %v867
      %v910 = vunpack.c.h.b16 %v867
      %v911 = vunpack.c.l.b16 %v868
      %v912 = vunpack.c.h.b16 %v868
      %v913 = vunpack.c.l.b16 %v869
      %v914 = vunpack.c.h.b16 %v869
      %v915 = vunpack.c.l.b16 %v870
      %v916 = vunpack.c.h.b16 %v870
      %v917 = vunpack.c.l.b16 %v871
      %v918 = vunpack.c.h.b16 %v871
      %v919 = vunpack.c.l.b16 %v872
      %v920 = vunpack.c.h.b16 %v872
      %v921 = vpack.c.b16 %v889, %v889
      %v922 = vpack.c.b16 %v890, %v890
      %v923 = vpack.c.b16 %v891, %v891
      %v924 = vpack.c.b16 %v892, %v892
      %v925 = vpack.c.b16 %v893, %v893
      %v926 = vpack.c.b16 %v894, %v894
      %v927 = vpack.c.b16 %v895, %v895
      %v928 = vpack.c.b16 %v896, %v896
      %v929 = vpack.c.b16 %v897, %v897
      %v930 = vpack.c.b16 %v898, %v898
      %v931 = vpack.c.b16 %v899, %v899
      %v932 = vpack.c.b16 %v900, %v900
      %v933 = vpack.c.b16 %v901, %v901
      %v934 = vpack.c.b16 %v902, %v902
      %v935 = vpack.c.b16 %v903, %v903
      %v936 = vpack.c.b16 %v904, %v904
      %v937 = vpack.c.b16 %v905, %v905
      %v938 = vpack.c.b16 %v906, %v906
      %v939 = vpack.c.b16 %v907, %v907
      %v940 = vpack.c.b16 %v908, %v908
      %v941 = vpack.c.b16 %v909, %v909
      %v942 = vpack.c.b16 %v910, %v910
      %v943 = vpack.c.b16 %v911, %v911
      %v944 = vpack.c.b16 %v912, %v912
      %v945 = vpack.c.b16 %v913, %v913
      %v946 = vpack.c.b16 %v914, %v914
      %v947 = vpack.c.b16 %v915, %v915
      %v948 = vpack.c.b16 %v916, %v916
      %v949 = vpack.c.b16 %v917, %v917
      %v950 = vpack.c.b16 %v918, %v918
      %v951 = vpack.c.b16 %v919, %v919
      %v952 = vpack.c.b16 %v920, %v920
      %vm985 = vcmask 257024
      %986 = vst.msk [vmem:[%s215] sm:$0xf] %vm985, %v921
      %987 = vst.msk [vmem:[%s215 + $0x4] sm:$0xf] %vm985, %v922
      %988 = vst.msk [vmem:[%s215 + $0x8] sm:$0xf] %vm985, %v923
      %989 = vst.msk [vmem:[%s215 + $0xc] sm:$0xf] %vm985, %v924
      %990 = vst.msk [vmem:[%s215 + $0x10] sm:$0xf] %vm985, %v925
      %991 = vst.msk [vmem:[%s215 + $0x14] sm:$0xf] %vm985, %v926
      %992 = vst.msk [vmem:[%s215 + $0x18] sm:$0xf] %vm985, %v927
      %993 = vst.msk [vmem:[%s215 + $0x1c] sm:$0xf] %vm985, %v928
      %994 = vst.msk [vmem:[%s215 + $0x20] sm:$0xf] %vm985, %v929
      %995 = vst.msk [vmem:[%s215 + $0x24] sm:$0xf] %vm985, %v930
      %996 = vst.msk [vmem:[%s215 + $0x28] sm:$0xf] %vm985, %v931
      %997 = vst.msk [vmem:[%s215 + $0x2c] sm:$0xf] %vm985, %v932
      %998 = vst.msk [vmem:[%s215 + $0x30] sm:$0xf] %vm985, %v933
      %999 = vst.msk [vmem:[%s215 + $0x34] sm:$0xf] %vm985, %v934
      %1000 = vst.msk [vmem:[%s215 + $0x38] sm:$0xf] %vm985, %v935
      %1001 = vst.msk [vmem:[%s215 + $0x3c] sm:$0xf] %vm985, %v936
      %1002 = vst.msk [vmem:[%s215 + $0x40] sm:$0xf] %vm985, %v937
      %1003 = vst.msk [vmem:[%s215 + $0x44] sm:$0xf] %vm985, %v938
      %1004 = vst.msk [vmem:[%s215 + $0x48] sm:$0xf] %vm985, %v939
      %1005 = vst.msk [vmem:[%s215 + $0x4c] sm:$0xf] %vm985, %v940
      %1006 = vst.msk [vmem:[%s215 + $0x50] sm:$0xf] %vm985, %v941
      %1007 = vst.msk [vmem:[%s215 + $0x54] sm:$0xf] %vm985, %v942
      %1008 = vst.msk [vmem:[%s215 + $0x58] sm:$0xf] %vm985, %v943
      %1009 = vst.msk [vmem:[%s215 + $0x5c] sm:$0xf] %vm985, %v944
      %1010 = vst.msk [vmem:[%s215 + $0x60] sm:$0xf] %vm985, %v945
      %1011 = vst.msk [vmem:[%s215 + $0x64] sm:$0xf] %vm985, %v946
      %1012 = vst.msk [vmem:[%s215 + $0x68] sm:$0xf] %vm985, %v947
      %1013 = vst.msk [vmem:[%s215 + $0x6c] sm:$0xf] %vm985, %v948
      %1014 = vst.msk [vmem:[%s215 + $0x70] sm:$0xf] %vm985, %v949
      %1015 = vst.msk [vmem:[%s215 + $0x74] sm:$0xf] %vm985, %v950
      %1016 = vst.msk [vmem:[%s215 + $0x78] sm:$0xf] %vm985, %v951
      %1017 = vst.msk [vmem:[%s215 + $0x7c] sm:$0xf] %vm985, %v952
      %s1018 = smul.u32 32, %s16
      %p1019 = scmp.lt.s32.totalorder %s1018, 63
      %s1020 = scalar_select %p1019, %s1018, 63
      %s1021 = smul.addr %s1020, 4
      %s1022 = scalar_lea.vmem %s2, %s1021
      %p1023 = scmp.lt.s32.totalorder %s16, 1
      %s1024 = scalar_select %p1023, %s16, 1
      %s1025 = smul.addr %s1024, 8
      %s1026 = scalar_lea.vmem %s3, %s1025
      %p1027 = scmp.lt.s32.totalorder %s16, 1
      %s1028 = scalar_select %p1027, %s16, 1
      %s1029 = smul.addr %s1028, 8
      %s1030 = scalar_lea.vmem %s4, %s1029
      // Predicated region
      $region29: #{generator_forward.15} parent=27 // pred_check
        %p1031 = pneg %p81
      $region30: #{generator_forward.15} parent=27 // pred_check_branch
        %1033 = sbr.rel (%p1031) target = $region32
      $region31: #{generator_forward.15} parent=27 // pred_region
        %s1034 = smul.u32 32, %s16
      $region32: #{generator_forward.15} parent=27 // pred_fallthru
        _
      // Predicated region
      $region33: #{generator_forward.15} parent=27 // pred_check
        %p1035 = pneg %p107
      $region34: #{generator_forward.15} parent=27 // pred_check_branch
        %1037 = sbr.rel (%p1035) target = $region36
      $region35: #{generator_forward.15} parent=27 // pred_region
        _
      $region36: #{generator_forward.15} parent=27 // pred_fallthru
        _
      // Predicated region
      $region37: #{generator_forward.15} parent=27 // pred_check
        %p1038 = pneg %p133
      $region38: #{generator_forward.15} parent=27 // pred_check_branch
        %1040 = sbr.rel (%p1038) target = $region40
      $region39: #{generator_forward.15} parent=27 // pred_region
        _
      $region40: #{generator_forward.15} parent=27 // pred_fallthru
        _
    $region28: #{generator_forward.15} parent=5 // pred_fallthru
      _
    %p1041 = scmp.le.s32.totalorder 2, %s11
    // Predicated region
    $region41: #{generator_forward.15} parent=5 // pred_check
      %p1042 = pneg %p1041
    $region42: #{generator_forward.15} parent=5 // pred_check_branch
      %1044 = sbr.rel (%p1042) target = $region44
    $region43: #{generator_forward.15} parent=5 // pred_region
      %s1045 = ssub.s32 %s11, 2
      // Predicated region
      $region45: #{generator_forward.15} parent=43 // pred_check
        %p1046 = pneg %p87
      $region46: #{generator_forward.15} parent=43 // pred_check_branch
        %1048 = sbr.rel (%p1046) target = $region48
      $region47: #{generator_forward.15} parent=43 // pred_region
        %s1049 = smul.u32 32, %s17
        %p1050 = scmp.lt.s32.totalorder %s1049, 63
        %s1051 = scalar_select %p1050, %s1049, 63
        %s1052 = smul.addr %s1051, 4
        %s1053 = scalar_lea.vmem %s2, %s1052
      $region48: #{generator_forward.15} parent=43 // pred_fallthru
        _
      // Predicated region
      $region49: #{generator_forward.15} parent=43 // pred_check
        %p1054 = pneg %p113
      $region50: #{generator_forward.15} parent=43 // pred_check_branch
        %1056 = sbr.rel (%p1054) target = $region52
      $region51: #{generator_forward.15} parent=43 // pred_region
        %p1057 = scmp.lt.s32.totalorder %s17, 1
        %s1058 = scalar_select %p1057, %s17, 1
        %s1059 = smul.addr %s1058, 8
        %s1060 = scalar_lea.vmem %s3, %s1059
      $region52: #{generator_forward.15} parent=43 // pred_fallthru
        _
      // Predicated region
      $region53: #{generator_forward.15} parent=43 // pred_check
        %p1061 = pneg %p139
      $region54: #{generator_forward.15} parent=43 // pred_check_branch
        %1063 = sbr.rel (%p1061) target = $region56
      $region55: #{generator_forward.15} parent=43 // pred_region
        %p1064 = scmp.lt.s32.totalorder %s17, 1
        %s1065 = scalar_select %p1064, %s17, 1
        %s1066 = smul.addr %s1065, 8
        %s1067 = scalar_lea.vmem %s4, %s1066
      $region56: #{generator_forward.15} parent=43 // pred_fallthru
        _
    $region44: #{generator_forward.15} parent=5 // pred_fallthru
      _
  $region6: #{generator_forward.15} parent=0 // loop_footer
    %s15 = sadd.s32 1, %s11
  $region7: #{generator_forward.15} parent=0 // loop_footer_branch
    %10 = sbr.rel target = $region3
  $region8: #{generator_forward.15} parent=0 // loop_exit
    _

// kernel: generator_forward.16
$region0: #{generator_forward.16}
  #allocation0 [shape = 'u32[]', space=smem, size = 0x4, offset = 0x4, fixed_abs, tag = 'smem constant byte address 0x4 - core index']
  #allocation1 [shape = 'u32[144,128]{1,0:T(1,128)}', space=vmem, size = 0x12000, scoped, tag = 'internal scratch']
  %s0 = inlined_call_operand.vmem [shape: bf16[512,32], index: 0, kind: input, shape index: {}]
  %s1 = inlined_call_operand.vmem [shape: f32[1,32], index: 1, kind: input, shape index: {}]
  %s2 = inlined_call_operand.vmem [shape: f32[1,32], index: 2, kind: input, shape index: {}]
  %s3 = inlined_call_operand.vmem [shape: bf16[512,32], index: 3, kind: output, shape index: {}]
  %s4 = sld [smem:[#allocation0]]
  $region45: #{generator_forward.16} parent=0
    _
  %s6 = ssub.s32 1, %s4
  %s7 = scalar_select 0, %s6, %s4
  loop: start=0, step=1, limit=4
  $region2: #{generator_forward.16} parent=0 // loop_pre_header
    _
  $region3: #{generator_forward.16} parent=0 // loop_header
    %s9 = sphi 0, %s13
    %p10 = scmp.ge.s32.totalorder %s9, 4
    %s19 = sphi 0, %s21
    %s22 = sphi 0, %s19
    %s23 = sphi 0, %s22
    %s39 = sphi 0, %s23
    %s43 = sphi 0, %s43
    %s45 = sphi 0, %s43
    %s46 = sphi 0, %s45
    %s60 = sphi 0, %s46
    %s64 = sphi 0, %s64
    %s66 = sphi 0, %s64
    %s67 = sphi 0, %s66
    %s81 = sphi 0, %s67
    %s87 = sphi 0, %s89
    %s90 = sphi 0, %s87
    %s91 = sphi 0, %s90
    %s107 = sphi 0, %s91
  $region4: #{generator_forward.16} parent=0 // loop_header_branch
    %12 = sbr.rel (%p10) target = $region8
  $region5: #{generator_forward.16} parent=0 // loop_body
    %s14 = ssub.s32 %s9, 1
    %s15 = ssub.s32 %s9, 2
    %s16 = sadd.s32 %s9, 1
    %s17 = ssub.s32 %s9, %s16
    %p18 = scmp.eq.s32.totalorder %s17, 0
    %s20 = sadd.s32 %s19, 1
    %s21 = scalar_select %p18, %s19, %s20
    %p24 = pneg %p18
    %p25 = scmp.eq.s32.totalorder %s9, 1
    %p26 = por %p24, %p25
    %p27 = scmp.ne.s32.totalorder %s19, %s22
    %p28 = scmp.eq.s32.totalorder %s9, 0
    %p29 = por %p27, %p28
    %p30 = scmp.ne.s32.totalorder %s19, %s22
    %p31 = scmp.eq.s32.totalorder %s14, 1
    %p32 = por %p30, %p31
    %p33 = scmp.ne.s32.totalorder %s22, %s23
    %p34 = scmp.eq.s32.totalorder %s14, 0
    %p35 = por %p33, %p34
    %p36 = scmp.ne.s32.totalorder %s22, %s23
    %p37 = scmp.eq.s32.totalorder %s15, 1
    %p38 = por %p36, %p37
    %p40 = scmp.ne.s32.totalorder %s23, %s39
    %p41 = scmp.eq.s32.totalorder %s15, 0
    %p42 = por %p40, %p41
    %s44 = sadd.s32 %s43, 1
    %p47 = scmp.eq.s32.totalorder %s9, 1
    %p48 = scmp.ne.s32.totalorder %s43, %s45
    %p49 = scmp.eq.s32.totalorder %s9, 0
    %p50 = por %p48, %p49
    %p51 = scmp.ne.s32.totalorder %s43, %s45
    %p52 = scmp.eq.s32.totalorder %s14, 1
    %p53 = por %p51, %p52
    %p54 = scmp.ne.s32.totalorder %s45, %s46
    %p55 = scmp.eq.s32.totalorder %s14, 0
    %p56 = por %p54, %p55
    %p57 = scmp.ne.s32.totalorder %s45, %s46
    %p58 = scmp.eq.s32.totalorder %s15, 1
    %p59 = por %p57, %p58
    %p61 = scmp.ne.s32.totalorder %s46, %s60
    %p62 = scmp.eq.s32.totalorder %s15, 0
    %p63 = por %p61, %p62
    %s65 = sadd.s32 %s64, 1
    %p68 = scmp.eq.s32.totalorder %s9, 1
    %p69 = scmp.ne.s32.totalorder %s64, %s66
    %p70 = scmp.eq.s32.totalorder %s9, 0
    %p71 = por %p69, %p70
    %p72 = scmp.ne.s32.totalorder %s64, %s66
    %p73 = scmp.eq.s32.totalorder %s14, 1
    %p74 = por %p72, %p73
    %p75 = scmp.ne.s32.totalorder %s66, %s67
    %p76 = scmp.eq.s32.totalorder %s14, 0
    %p77 = por %p75, %p76
    %p78 = scmp.ne.s32.totalorder %s66, %s67
    %p79 = scmp.eq.s32.totalorder %s15, 1
    %p80 = por %p78, %p79
    %p82 = scmp.ne.s32.totalorder %s67, %s81
    %p83 = scmp.eq.s32.totalorder %s15, 0
    %p84 = por %p82, %p83
    %s85 = ssub.s32 %s9, %s16
    %p86 = scmp.eq.s32.totalorder %s85, 0
    %s88 = sadd.s32 %s87, 1
    %s89 = scalar_select %p86, %s87, %s88
    %p92 = pneg %p86
    %p93 = scmp.eq.s32.totalorder %s9, 1
    %p94 = por %p92, %p93
    %p95 = scmp.ne.s32.totalorder %s87, %s90
    %p96 = scmp.eq.s32.totalorder %s9, 0
    %p97 = por %p95, %p96
    %p98 = scmp.ne.s32.totalorder %s87, %s90
    %p99 = scmp.eq.s32.totalorder %s14, 1
    %p100 = por %p98, %p99
    %p101 = scmp.ne.s32.totalorder %s90, %s91
    %p102 = scmp.eq.s32.totalorder %s14, 0
    %p103 = por %p101, %p102
    %p104 = scmp.ne.s32.totalorder %s90, %s91
    %p105 = scmp.eq.s32.totalorder %s15, 1
    %p106 = por %p104, %p105
    %p108 = scmp.ne.s32.totalorder %s91, %s107
    %p109 = scmp.eq.s32.totalorder %s15, 0
    %p110 = por %p108, %p109
    %p111 = scmp.le.s32.totalorder 1, %s9
    %p112 = scmp.lt.s32.totalorder %s9, 3
    %p113 = pnand %p111, %p112
    %p114 = pneg %p113
    // Predicated region
    $region9: #{generator_forward.16} parent=5 // pred_check
      _
    $region10: #{generator_forward.16} parent=5 // pred_check_branch
      %116 = sbr.rel (%p113) target = $region12
    $region11: #{generator_forward.16} parent=5 // pred_region
      %s117 = ssub.s32 %s9, 1
      // Predicated region
      $region13: #{generator_forward.16} parent=11 // pred_check
        %p118 = pneg %p56
      $region14: #{generator_forward.16} parent=11 // pred_check_branch
        %120 = sbr.rel (%p118) target = $region16
      $region15: #{generator_forward.16} parent=11 // pred_region
        _
      $region16: #{generator_forward.16} parent=11 // pred_fallthru
        _
      // Predicated region
      $region17: #{generator_forward.16} parent=11 // pred_check
        %p121 = pneg %p77
      $region18: #{generator_forward.16} parent=11 // pred_check_branch
        %123 = sbr.rel (%p121) target = $region20
      $region19: #{generator_forward.16} parent=11 // pred_region
        _
      $region20: #{generator_forward.16} parent=11 // pred_fallthru
        _
    $region12: #{generator_forward.16} parent=5 // pred_fallthru
      _
    %p124 = scmp.lt.s32.totalorder %s9, 2
    // Predicated region
    $region21: #{generator_forward.16} parent=5 // pred_check
      %p125 = pneg %p124
    $region22: #{generator_forward.16} parent=5 // pred_check_branch
      %127 = sbr.rel (%p125) target = $region24
    $region23: #{generator_forward.16} parent=5 // pred_region
      // Predicated region
      $region25: #{generator_forward.16} parent=23 // pred_check
        %p128 = pneg %p29
      $region26: #{generator_forward.16} parent=23 // pred_check_branch
        %130 = sbr.rel (%p128) target = $region28
      $region27: #{generator_forward.16} parent=23 // pred_region
        %s131 = smul.u32 32, %s9
        %p132 = scmp.lt.s32.totalorder %s131, 63
        %s133 = scalar_select %p132, %s131, 63
        %s134 = smul.addr %s133, 4
        %s135 = scalar_lea.vmem %s0, %s134
        %s136 = smul.u32 32, %s9
      $region28: #{generator_forward.16} parent=23 // pred_fallthru
        _
    $region24: #{generator_forward.16} parent=5 // pred_fallthru
      _
    %p137 = scmp.le.s32.totalorder 1, %s9
    %p138 = scmp.lt.s32.totalorder %s9, 3
    %p139 = pnand %p137, %p138
    %p140 = pneg %p139
    // Predicated region
    $region29: #{generator_forward.16} parent=5 // pred_check
      _
    $region30: #{generator_forward.16} parent=5 // pred_check_branch
      %142 = sbr.rel (%p139) target = $region32
    $region31: #{generator_forward.16} parent=5 // pred_region
      %s143 = ssub.s32 %s9, 1
      %s144 = smul.u32 32, %s14
      %p145 = scmp.lt.s32.totalorder %s144, 63
      %s146 = scalar_select %p145, %s144, 63
      %s147 = smul.addr %s146, 4
      %s148 = scalar_lea.vmem %s0, %s147
      %p149 = pneg %p35
      %p150 = pneg %p32
      %p151 = pneg %p56
      %p152 = pneg %p53
      %p153 = pneg %p77
      %p154 = pneg %p74
      %p155 = pneg %p103
      %p156 = pneg %p100
      %s157 = smul.u32 32, %s14
      %p158 = scmp.lt.s32.totalorder %s157, 63
      %s159 = scalar_select %p158, %s157, 63
      %s160 = smul.addr %s159, 4
      %s161 = scalar_lea.vmem %s3, %s160
      %s162 = smul.u32 32, %s14
      %p163 = scmp.lt.s32.totalorder %s162, 63
      %s164 = scalar_select %p163, %s162, 63
      %s165 = smul.addr %s164, 4
      %s166 = scalar_lea.vmem %s0, %s165
      %s167 = smul.u32 32, %s14
      %s168 = smul.u32 32, %s14
      %p169 = scmp.lt.s32.totalorder %s168, 63
      %s170 = scalar_select %p169, %s168, 63
      %s171 = smul.addr %s170, 4
      %s172 = scalar_lea.vmem %s3, %s171
      %s173 = smul.u32 32, %s14
      %v174 = vld [vmem:[%s166] sm:$0xf]
      %v175 = vld [vmem:[%s166 + $0x4] sm:$0xf]
      %v176 = vld [vmem:[%s166 + $0x8] sm:$0xf]
      %v177 = vld [vmem:[%s166 + $0xc] sm:$0xf]
      %v178 = vld [vmem:[%s166 + $0x10] sm:$0xf]
      %v179 = vld [vmem:[%s166 + $0x14] sm:$0xf]
      %v180 = vld [vmem:[%s166 + $0x18] sm:$0xf]
      %v181 = vld [vmem:[%s166 + $0x1c] sm:$0xf]
      %v182 = vld [vmem:[%s166 + $0x20] sm:$0xf]
      %v183 = vld [vmem:[%s166 + $0x24] sm:$0xf]
      %v184 = vld [vmem:[%s166 + $0x28] sm:$0xf]
      %v185 = vld [vmem:[%s166 + $0x2c] sm:$0xf]
      %v186 = vld [vmem:[%s166 + $0x30] sm:$0xf]
      %v187 = vld [vmem:[%s166 + $0x34] sm:$0xf]
      %v188 = vld [vmem:[%s166 + $0x38] sm:$0xf]
      %v189 = vld [vmem:[%s166 + $0x3c] sm:$0xf]
      %v190 = vld [vmem:[%s166 + $0x40] sm:$0xf]
      %v191 = vld [vmem:[%s166 + $0x44] sm:$0xf]
      %v192 = vld [vmem:[%s166 + $0x48] sm:$0xf]
      %v193 = vld [vmem:[%s166 + $0x4c] sm:$0xf]
      %v194 = vld [vmem:[%s166 + $0x50] sm:$0xf]
      %v195 = vld [vmem:[%s166 + $0x54] sm:$0xf]
      %v196 = vld [vmem:[%s166 + $0x58] sm:$0xf]
      %v197 = vld [vmem:[%s166 + $0x5c] sm:$0xf]
      %v198 = vld [vmem:[%s166 + $0x60] sm:$0xf]
      %v199 = vld [vmem:[%s166 + $0x64] sm:$0xf]
      %v200 = vld [vmem:[%s166 + $0x68] sm:$0xf]
      %v201 = vld [vmem:[%s166 + $0x6c] sm:$0xf]
      %v202 = vld [vmem:[%s166 + $0x70] sm:$0xf]
      %v203 = vld [vmem:[%s166 + $0x74] sm:$0xf]
      %v204 = vld [vmem:[%s166 + $0x78] sm:$0xf]
      %v205 = vld [vmem:[%s166 + $0x7c] sm:$0xf]
      %v206 = vunpack.c.l.bf16 %v174
      %v207 = vunpack.c.l.bf16 %v175
      %v208 = vunpack.c.l.bf16 %v176
      %v209 = vunpack.c.l.bf16 %v177
      %v210 = vunpack.c.l.bf16 %v178
      %v211 = vunpack.c.l.bf16 %v179
      %v212 = vunpack.c.l.bf16 %v180
      %v213 = vunpack.c.l.bf16 %v181
      %v214 = vunpack.c.l.bf16 %v182
      %v215 = vunpack.c.l.bf16 %v183
      %v216 = vunpack.c.l.bf16 %v184
      %v217 = vunpack.c.l.bf16 %v185
      %v218 = vunpack.c.l.bf16 %v186
      %v219 = vunpack.c.l.bf16 %v187
      %v220 = vunpack.c.l.bf16 %v188
      %v221 = vunpack.c.l.bf16 %v189
      %v222 = vunpack.c.l.bf16 %v190
      %v223 = vunpack.c.l.bf16 %v191
      %v224 = vunpack.c.l.bf16 %v192
      %v225 = vunpack.c.l.bf16 %v193
      %v226 = vunpack.c.l.bf16 %v194
      %v227 = vunpack.c.l.bf16 %v195
      %v228 = vunpack.c.l.bf16 %v196
      %v229 = vunpack.c.l.bf16 %v197
      %v230 = vunpack.c.l.bf16 %v198
      %v231 = vunpack.c.l.bf16 %v199
      %v232 = vunpack.c.l.bf16 %v200
      %v233 = vunpack.c.l.bf16 %v201
      %v234 = vunpack.c.l.bf16 %v202
      %v235 = vunpack.c.l.bf16 %v203
      %v236 = vunpack.c.l.bf16 %v204
      %v237 = vunpack.c.l.bf16 %v205
      %v238 = vld [vmem:[%s1] sm:$0x1]
      %v240 = vlaneseq
      %v241 = vshrl.u32 %v240, 7
      %v242 = vsub.s32 0, %v241
      %v243 = vrot.slane %v238, %v242
      %v245 = vmul.f32 %v206, %v243
      %v246 = vmul.f32 %v207, %v243
      %v247 = vmul.f32 %v208, %v243
      %v248 = vmul.f32 %v209, %v243
      %v249 = vmul.f32 %v210, %v243
      %v250 = vmul.f32 %v211, %v243
      %v251 = vmul.f32 %v212, %v243
      %v252 = vmul.f32 %v213, %v243
      %v253 = vmul.f32 %v214, %v243
      %v254 = vmul.f32 %v215, %v243
      %v255 = vmul.f32 %v216, %v243
      %v256 = vmul.f32 %v217, %v243
      %v257 = vmul.f32 %v218, %v243
      %v258 = vmul.f32 %v219, %v243
      %v259 = vmul.f32 %v220, %v243
      %v260 = vmul.f32 %v221, %v243
      %v261 = vmul.f32 %v222, %v243
      %v262 = vmul.f32 %v223, %v243
      %v263 = vmul.f32 %v224, %v243
      %v264 = vmul.f32 %v225, %v243
      %v265 = vmul.f32 %v226, %v243
      %v266 = vmul.f32 %v227, %v243
      %v267 = vmul.f32 %v228, %v243
      %v268 = vmul.f32 %v229, %v243
      %v269 = vmul.f32 %v230, %v243
      %v270 = vmul.f32 %v231, %v243
      %v271 = vmul.f32 %v232, %v243
      %v272 = vmul.f32 %v233, %v243
      %v273 = vmul.f32 %v234, %v243
      %v274 = vmul.f32 %v235, %v243
      %v275 = vmul.f32 %v236, %v243
      %v276 = vmul.f32 %v237, %v243
      %v277 = vld [vmem:[%s2] sm:$0x1]
      %v279 = vlaneseq
      %v280 = vshrl.u32 %v279, 7
      %v281 = vsub.s32 0, %v280
      %v282 = vrot.slane %v277, %v281
      %v284 = vadd.f32 %v245, %v282
      %v285 = vadd.f32 %v246, %v282
      %v286 = vadd.f32 %v247, %v282
      %v287 = vadd.f32 %v248, %v282
      %v288 = vadd.f32 %v249, %v282
      %v289 = vadd.f32 %v250, %v282
      %v290 = vadd.f32 %v251, %v282
      %v291 = vadd.f32 %v252, %v282
      %v292 = vadd.f32 %v253, %v282
      %v293 = vadd.f32 %v254, %v282
      %v294 = vadd.f32 %v255, %v282
      %v295 = vadd.f32 %v256, %v282
      %v296 = vadd.f32 %v257, %v282
      %v297 = vadd.f32 %v258, %v282
      %v298 = vadd.f32 %v259, %v282
      %v299 = vadd.f32 %v260, %v282
      %v300 = vadd.f32 %v261, %v282
      %v301 = vadd.f32 %v262, %v282
      %v302 = vadd.f32 %v263, %v282
      %v303 = vadd.f32 %v264, %v282
      %v304 = vadd.f32 %v265, %v282
      %v305 = vadd.f32 %v266, %v282
      %v306 = vadd.f32 %v267, %v282
      %v307 = vadd.f32 %v268, %v282
      %v308 = vadd.f32 %v269, %v282
      %v309 = vadd.f32 %v270, %v282
      %v310 = vadd.f32 %v271, %v282
      %v311 = vadd.f32 %v272, %v282
      %v312 = vadd.f32 %v273, %v282
      %v313 = vadd.f32 %v274, %v282
      %v314 = vadd.f32 %v275, %v282
      %v315 = vadd.f32 %v276, %v282
      %v316 = vmax.f32 %v284, 0.0
      %v317 = vmax.f32 %v285, 0.0
      %v318 = vmax.f32 %v286, 0.0
      %v319 = vmax.f32 %v287, 0.0
      %v320 = vmax.f32 %v288, 0.0
      %v321 = vmax.f32 %v289, 0.0
      %v322 = vmax.f32 %v290, 0.0
      %v323 = vmax.f32 %v291, 0.0
      %v324 = vmax.f32 %v292, 0.0
      %v325 = vmax.f32 %v293, 0.0
      %v326 = vmax.f32 %v294, 0.0
      %v327 = vmax.f32 %v295, 0.0
      %v328 = vmax.f32 %v296, 0.0
      %v329 = vmax.f32 %v297, 0.0
      %v330 = vmax.f32 %v298, 0.0
      %v331 = vmax.f32 %v299, 0.0
      %v332 = vmax.f32 %v300, 0.0
      %v333 = vmax.f32 %v301, 0.0
      %v334 = vmax.f32 %v302, 0.0
      %v335 = vmax.f32 %v303, 0.0
      %v336 = vmax.f32 %v304, 0.0
      %v337 = vmax.f32 %v305, 0.0
      %v338 = vmax.f32 %v306, 0.0
      %v339 = vmax.f32 %v307, 0.0
      %v340 = vmax.f32 %v308, 0.0
      %v341 = vmax.f32 %v309, 0.0
      %v342 = vmax.f32 %v310, 0.0
      %v343 = vmax.f32 %v311, 0.0
      %v344 = vmax.f32 %v312, 0.0
      %v345 = vmax.f32 %v313, 0.0
      %v346 = vmax.f32 %v314, 0.0
      %v347 = vmax.f32 %v315, 0.0
      %v348 = vpack.c.bf16 %v317, %v316
      %v349 = vpack.c.bf16 %v319, %v318
      %v350 = vpack.c.bf16 %v321, %v320
      %v351 = vpack.c.bf16 %v323, %v322
      %v352 = vpack.c.bf16 %v325, %v324
      %v353 = vpack.c.bf16 %v327, %v326
      %v354 = vpack.c.bf16 %v329, %v328
      %v355 = vpack.c.bf16 %v331, %v330
      %v356 = vpack.c.bf16 %v333, %v332
      %v357 = vpack.c.bf16 %v335, %v334
      %v358 = vpack.c.bf16 %v337, %v336
      %v359 = vpack.c.bf16 %v339, %v338
      %v360 = vpack.c.bf16 %v341, %v340
      %v361 = vpack.c.bf16 %v343, %v342
      %v362 = vpack.c.bf16 %v345, %v344
      %v363 = vpack.c.bf16 %v347, %v346
      %v380 = vunpack.c.l.b16 %v348
      %v381 = vunpack.c.h.b16 %v348
      %v382 = vunpack.c.l.b16 %v349
      %v383 = vunpack.c.h.b16 %v349
      %v384 = vunpack.c.l.b16 %v350
      %v385 = vunpack.c.h.b16 %v350
      %v386 = vunpack.c.l.b16 %v351
      %v387 = vunpack.c.h.b16 %v351
      %v388 = vunpack.c.l.b16 %v352
      %v389 = vunpack.c.h.b16 %v352
      %v390 = vunpack.c.l.b16 %v353
      %v391 = vunpack.c.h.b16 %v353
      %v392 = vunpack.c.l.b16 %v354
      %v393 = vunpack.c.h.b16 %v354
      %v394 = vunpack.c.l.b16 %v355
      %v395 = vunpack.c.h.b16 %v355
      %v396 = vunpack.c.l.b16 %v356
      %v397 = vunpack.c.h.b16 %v356
      %v398 = vunpack.c.l.b16 %v357
      %v399 = vunpack.c.h.b16 %v357
      %v400 = vunpack.c.l.b16 %v358
      %v401 = vunpack.c.h.b16 %v358
      %v402 = vunpack.c.l.b16 %v359
      %v403 = vunpack.c.h.b16 %v359
      %v404 = vunpack.c.l.b16 %v360
      %v405 = vunpack.c.h.b16 %v360
      %v406 = vunpack.c.l.b16 %v361
      %v407 = vunpack.c.h.b16 %v361
      %v408 = vunpack.c.l.b16 %v362
      %v409 = vunpack.c.h.b16 %v362
      %v410 = vunpack.c.l.b16 %v363
      %v411 = vunpack.c.h.b16 %v363
      %v412 = vpack.c.b16 %v380, %v380
      %v413 = vpack.c.b16 %v381, %v381
      %v414 = vpack.c.b16 %v382, %v382
      %v415 = vpack.c.b16 %v383, %v383
      %v416 = vpack.c.b16 %v384, %v384
      %v417 = vpack.c.b16 %v385, %v385
      %v418 = vpack.c.b16 %v386, %v386
      %v419 = vpack.c.b16 %v387, %v387
      %v420 = vpack.c.b16 %v388, %v388
      %v421 = vpack.c.b16 %v389, %v389
      %v422 = vpack.c.b16 %v390, %v390
      %v423 = vpack.c.b16 %v391, %v391
      %v424 = vpack.c.b16 %v392, %v392
      %v425 = vpack.c.b16 %v393, %v393
      %v426 = vpack.c.b16 %v394, %v394
      %v427 = vpack.c.b16 %v395, %v395
      %v428 = vpack.c.b16 %v396, %v396
      %v429 = vpack.c.b16 %v397, %v397
      %v430 = vpack.c.b16 %v398, %v398
      %v431 = vpack.c.b16 %v399, %v399
      %v432 = vpack.c.b16 %v400, %v400
      %v433 = vpack.c.b16 %v401, %v401
      %v434 = vpack.c.b16 %v402, %v402
      %v435 = vpack.c.b16 %v403, %v403
      %v436 = vpack.c.b16 %v404, %v404
      %v437 = vpack.c.b16 %v405, %v405
      %v438 = vpack.c.b16 %v406, %v406
      %v439 = vpack.c.b16 %v407, %v407
      %v440 = vpack.c.b16 %v408, %v408
      %v441 = vpack.c.b16 %v409, %v409
      %v442 = vpack.c.b16 %v410, %v410
      %v443 = vpack.c.b16 %v411, %v411
      %vm476 = vcmask 257024
      %477 = vst.msk [vmem:[%s172] sm:$0xf] %vm476, %v412
      %478 = vst.msk [vmem:[%s172 + $0x4] sm:$0xf] %vm476, %v413
      %479 = vst.msk [vmem:[%s172 + $0x8] sm:$0xf] %vm476, %v414
      %480 = vst.msk [vmem:[%s172 + $0xc] sm:$0xf] %vm476, %v415
      %481 = vst.msk [vmem:[%s172 + $0x10] sm:$0xf] %vm476, %v416
      %482 = vst.msk [vmem:[%s172 + $0x14] sm:$0xf] %vm476, %v417
      %483 = vst.msk [vmem:[%s172 + $0x18] sm:$0xf] %vm476, %v418
      %484 = vst.msk [vmem:[%s172 + $0x1c] sm:$0xf] %vm476, %v419
      %485 = vst.msk [vmem:[%s172 + $0x20] sm:$0xf] %vm476, %v420
      %486 = vst.msk [vmem:[%s172 + $0x24] sm:$0xf] %vm476, %v421
      %487 = vst.msk [vmem:[%s172 + $0x28] sm:$0xf] %vm476, %v422
      %488 = vst.msk [vmem:[%s172 + $0x2c] sm:$0xf] %vm476, %v423
      %489 = vst.msk [vmem:[%s172 + $0x30] sm:$0xf] %vm476, %v424
      %490 = vst.msk [vmem:[%s172 + $0x34] sm:$0xf] %vm476, %v425
      %491 = vst.msk [vmem:[%s172 + $0x38] sm:$0xf] %vm476, %v426
      %492 = vst.msk [vmem:[%s172 + $0x3c] sm:$0xf] %vm476, %v427
      %493 = vst.msk [vmem:[%s172 + $0x40] sm:$0xf] %vm476, %v428
      %494 = vst.msk [vmem:[%s172 + $0x44] sm:$0xf] %vm476, %v429
      %495 = vst.msk [vmem:[%s172 + $0x48] sm:$0xf] %vm476, %v430
      %496 = vst.msk [vmem:[%s172 + $0x4c] sm:$0xf] %vm476, %v431
      %497 = vst.msk [vmem:[%s172 + $0x50] sm:$0xf] %vm476, %v432
      %498 = vst.msk [vmem:[%s172 + $0x54] sm:$0xf] %vm476, %v433
      %499 = vst.msk [vmem:[%s172 + $0x58] sm:$0xf] %vm476, %v434
      %500 = vst.msk [vmem:[%s172 + $0x5c] sm:$0xf] %vm476, %v435
      %501 = vst.msk [vmem:[%s172 + $0x60] sm:$0xf] %vm476, %v436
      %502 = vst.msk [vmem:[%s172 + $0x64] sm:$0xf] %vm476, %v437
      %503 = vst.msk [vmem:[%s172 + $0x68] sm:$0xf] %vm476, %v438
      %504 = vst.msk [vmem:[%s172 + $0x6c] sm:$0xf] %vm476, %v439
      %505 = vst.msk [vmem:[%s172 + $0x70] sm:$0xf] %vm476, %v440
      %506 = vst.msk [vmem:[%s172 + $0x74] sm:$0xf] %vm476, %v441
      %507 = vst.msk [vmem:[%s172 + $0x78] sm:$0xf] %vm476, %v442
      %508 = vst.msk [vmem:[%s172 + $0x7c] sm:$0xf] %vm476, %v443
      %s509 = smul.u32 32, %s14
      %p510 = scmp.lt.s32.totalorder %s509, 63
      %s511 = scalar_select %p510, %s509, 63
      %s512 = smul.addr %s511, 4
      %s513 = scalar_lea.vmem %s3, %s512
      // Predicated region
      $region33: #{generator_forward.16} parent=31 // pred_check
        %p514 = pneg %p100
      $region34: #{generator_forward.16} parent=31 // pred_check_branch
        %516 = sbr.rel (%p514) target = $region36
      $region35: #{generator_forward.16} parent=31 // pred_region
        %s517 = smul.u32 32, %s14
      $region36: #{generator_forward.16} parent=31 // pred_fallthru
        _
    $region32: #{generator_forward.16} parent=5 // pred_fallthru
      _
    %p518 = scmp.le.s32.totalorder 2, %s9
    // Predicated region
    $region37: #{generator_forward.16} parent=5 // pred_check
      %p519 = pneg %p518
    $region38: #{generator_forward.16} parent=5 // pred_check_branch
      %521 = sbr.rel (%p519) target = $region40
    $region39: #{generator_forward.16} parent=5 // pred_region
      %s522 = ssub.s32 %s9, 2
      // Predicated region
      $region41: #{generator_forward.16} parent=39 // pred_check
        %p523 = pneg %p106
      $region42: #{generator_forward.16} parent=39 // pred_check_branch
        %525 = sbr.rel (%p523) target = $region44
      $region43: #{generator_forward.16} parent=39 // pred_region
        %s526 = smul.u32 32, %s15
        %p527 = scmp.lt.s32.totalorder %s526, 63
        %s528 = scalar_select %p527, %s526, 63
        %s529 = smul.addr %s528, 4
        %s530 = scalar_lea.vmem %s3, %s529
      $region44: #{generator_forward.16} parent=39 // pred_fallthru
        _
    $region40: #{generator_forward.16} parent=5 // pred_fallthru
      _
  $region6: #{generator_forward.16} parent=0 // loop_footer
    %s13 = sadd.s32 1, %s9
  $region7: #{generator_forward.16} parent=0 // loop_footer_branch
    %8 = sbr.rel target = $region3
  $region8: #{generator_forward.16} parent=0 // loop_exit
    _

// kernel: generator_forward.17
$region0: #{generator_forward.17}
  #allocation0 [shape = 'u32[]', space=smem, size = 0x4, offset = 0x4, fixed_abs, tag = 'smem constant byte address 0x4 - core index']
  #allocation1 [shape = 'u32[144,128]{1,0:T(1,128)}', space=vmem, size = 0x12000, scoped, tag = 'internal scratch']
  %s0 = inlined_call_operand.vmem [shape: bf16[2048,72], index: 0, kind: input, shape index: {}]
  %s1 = inlined_call_operand.vmem [shape: bf16[72,12], index: 1, kind: input, shape index: {}]
  %s2 = inlined_call_operand.vmem [shape: f32[2048,12], index: 2, kind: output, shape index: {}]
  %s3 = sld [smem:[#allocation0]]
  $region41: #{generator_forward.17} parent=0
    _
  %s5 = ssub.s32 1, %s3
  %s6 = scalar_select 0, %s5, %s3
  loop: start=0, step=1, limit=4
  $region2: #{generator_forward.17} parent=0 // loop_pre_header
    _
  $region3: #{generator_forward.17} parent=0 // loop_header
    %s8 = sphi 0, %s12
    %p9 = scmp.ge.s32.totalorder %s8, 4
    %s18 = sphi 0, %s20
    %s21 = sphi 0, %s18
    %s22 = sphi 0, %s21
    %s38 = sphi 0, %s22
    %s42 = sphi 0, %s42
    %s44 = sphi 0, %s42
    %s45 = sphi 0, %s44
    %s59 = sphi 0, %s45
    %s65 = sphi 0, %s67
    %s68 = sphi 0, %s65
    %s69 = sphi 0, %s68
    %s85 = sphi 0, %s69
  $region4: #{generator_forward.17} parent=0 // loop_header_branch
    %11 = sbr.rel (%p9) target = $region8
  $region5: #{generator_forward.17} parent=0 // loop_body
    %s13 = ssub.s32 %s8, 1
    %s14 = ssub.s32 %s8, 2
    %s15 = sadd.s32 %s8, 1
    %s16 = ssub.s32 %s8, %s15
    %p17 = scmp.eq.s32.totalorder %s16, 0
    %s19 = sadd.s32 %s18, 1
    %s20 = scalar_select %p17, %s18, %s19
    %p23 = pneg %p17
    %p24 = scmp.eq.s32.totalorder %s8, 1
    %p25 = por %p23, %p24
    %p26 = scmp.ne.s32.totalorder %s18, %s21
    %p27 = scmp.eq.s32.totalorder %s8, 0
    %p28 = por %p26, %p27
    %p29 = scmp.ne.s32.totalorder %s18, %s21
    %p30 = scmp.eq.s32.totalorder %s13, 1
    %p31 = por %p29, %p30
    %p32 = scmp.ne.s32.totalorder %s21, %s22
    %p33 = scmp.eq.s32.totalorder %s13, 0
    %p34 = por %p32, %p33
    %p35 = scmp.ne.s32.totalorder %s21, %s22
    %p36 = scmp.eq.s32.totalorder %s14, 1
    %p37 = por %p35, %p36
    %p39 = scmp.ne.s32.totalorder %s22, %s38
    %p40 = scmp.eq.s32.totalorder %s14, 0
    %p41 = por %p39, %p40
    %s43 = sadd.s32 %s42, 1
    %p46 = scmp.eq.s32.totalorder %s8, 1
    %p47 = scmp.ne.s32.totalorder %s42, %s44
    %p48 = scmp.eq.s32.totalorder %s8, 0
    %p49 = por %p47, %p48
    %p50 = scmp.ne.s32.totalorder %s42, %s44
    %p51 = scmp.eq.s32.totalorder %s13, 1
    %p52 = por %p50, %p51
    %p53 = scmp.ne.s32.totalorder %s44, %s45
    %p54 = scmp.eq.s32.totalorder %s13, 0
    %p55 = por %p53, %p54
    %p56 = scmp.ne.s32.totalorder %s44, %s45
    %p57 = scmp.eq.s32.totalorder %s14, 1
    %p58 = por %p56, %p57
    %p60 = scmp.ne.s32.totalorder %s45, %s59
    %p61 = scmp.eq.s32.totalorder %s14, 0
    %p62 = por %p60, %p61
    %s63 = ssub.s32 %s8, %s15
    %p64 = scmp.eq.s32.totalorder %s63, 0
    %s66 = sadd.s32 %s65, 1
    %s67 = scalar_select %p64, %s65, %s66
    %p70 = pneg %p64
    %p71 = scmp.eq.s32.totalorder %s8, 1
    %p72 = por %p70, %p71
    %p73 = scmp.ne.s32.totalorder %s65, %s68
    %p74 = scmp.eq.s32.totalorder %s8, 0
    %p75 = por %p73, %p74
    %p76 = scmp.ne.s32.totalorder %s65, %s68
    %p77 = scmp.eq.s32.totalorder %s13, 1
    %p78 = por %p76, %p77
    %p79 = scmp.ne.s32.totalorder %s68, %s69
    %p80 = scmp.eq.s32.totalorder %s13, 0
    %p81 = por %p79, %p80
    %p82 = scmp.ne.s32.totalorder %s68, %s69
    %p83 = scmp.eq.s32.totalorder %s14, 1
    %p84 = por %p82, %p83
    %p86 = scmp.ne.s32.totalorder %s69, %s85
    %p87 = scmp.eq.s32.totalorder %s14, 0
    %p88 = por %p86, %p87
    %p89 = scmp.le.s32.totalorder 1, %s8
    %p90 = scmp.lt.s32.totalorder %s8, 3
    %p91 = pnand %p89, %p90
    %p92 = pneg %p91
    // Predicated region
    $region9: #{generator_forward.17} parent=5 // pred_check
      _
    $region10: #{generator_forward.17} parent=5 // pred_check_branch
      %94 = sbr.rel (%p91) target = $region12
    $region11: #{generator_forward.17} parent=5 // pred_region
      %s95 = ssub.s32 %s8, 1
      // Predicated region
      $region13: #{generator_forward.17} parent=11 // pred_check
        %p96 = pneg %p55
      $region14: #{generator_forward.17} parent=11 // pred_check_branch
        %98 = sbr.rel (%p96) target = $region16
      $region15: #{generator_forward.17} parent=11 // pred_region
        _
      $region16: #{generator_forward.17} parent=11 // pred_fallthru
        _
    $region12: #{generator_forward.17} parent=5 // pred_fallthru
      _
    %p99 = scmp.lt.s32.totalorder %s8, 2
    // Predicated region
    $region17: #{generator_forward.17} parent=5 // pred_check
      %p100 = pneg %p99
    $region18: #{generator_forward.17} parent=5 // pred_check_branch
      %102 = sbr.rel (%p100) target = $region20
    $region19: #{generator_forward.17} parent=5 // pred_region
      // Predicated region
      $region21: #{generator_forward.17} parent=19 // pred_check
        %p103 = pneg %p28
      $region22: #{generator_forward.17} parent=19 // pred_check_branch
        %105 = sbr.rel (%p103) target = $region24
      $region23: #{generator_forward.17} parent=19 // pred_region
        %s106 = smul.u32 128, %s8
        %p107 = scmp.lt.s32.totalorder %s106, 255
        %s108 = scalar_select %p107, %s106, 255
        %s109 = smul.addr %s108, 4
        %s110 = scalar_lea.vmem %s0, %s109
        %s111 = smul.u32 128, %s8
      $region24: #{generator_forward.17} parent=19 // pred_fallthru
        _
    $region20: #{generator_forward.17} parent=5 // pred_fallthru
      _
    %p112 = scmp.le.s32.totalorder 1, %s8
    %p113 = scmp.lt.s32.totalorder %s8, 3
    %p114 = pnand %p112, %p113
    %p115 = pneg %p114
    // Predicated region
    $region25: #{generator_forward.17} parent=5 // pred_check
      _
    $region26: #{generator_forward.17} parent=5 // pred_check_branch
      %117 = sbr.rel (%p114) target = $region28
    $region27: #{generator_forward.17} parent=5 // pred_region
      %s118 = ssub.s32 %s8, 1
      %s119 = smul.u32 128, %s13
      %p120 = scmp.lt.s32.totalorder %s119, 255
      %s121 = scalar_select %p120, %s119, 255
      %s122 = smul.addr %s121, 4
      %s123 = scalar_lea.vmem %s0, %s122
      %p124 = pneg %p34
      %p125 = pneg %p31
      %p126 = pneg %p55
      %p127 = pneg %p52
      %p128 = pneg %p81
      %p129 = pneg %p78
      %s130 = smul.u32 128, %s13
      %p131 = scmp.lt.s32.totalorder %s130, 255
      %s132 = scalar_select %p131, %s130, 255
      %s133 = smul.addr %s132, 8
      %s134 = scalar_lea.vmem %s2, %s133
      %s135 = smul.u32 128, %s13
      %p136 = scmp.lt.s32.totalorder %s135, 255
      %s137 = scalar_select %p136, %s135, 255
      %s138 = smul.addr %s137, 4
      %s139 = scalar_lea.vmem %s0, %s138
      %s140 = smul.u32 128, %s13
      %s141 = smul.u32 128, %s13
      %p142 = scmp.lt.s32.totalorder %s141, 255
      %s143 = scalar_select %p142, %s141, 255
      %s144 = smul.addr %s143, 8
      %s145 = scalar_lea.vmem %s2, %s144
      %s146 = smul.u32 128, %s13
      %v148 = vld [vmem:[%s139] sm:$0xf]
      %v149 = vld [vmem:[%s139 + $0x4] sm:$0xf]
      %v150 = vld [vmem:[%s139 + $0x8] sm:$0xf]
      %v151 = vld [vmem:[%s139 + $0xc] sm:$0xf]
      %v152 = vld [vmem:[%s139 + $0x10] sm:$0xf]
      %v153 = vld [vmem:[%s139 + $0x14] sm:$0xf]
      %v154 = vld [vmem:[%s139 + $0x18] sm:$0xf]
      %v155 = vld [vmem:[%s139 + $0x1c] sm:$0xf]
      %v156 = vld [vmem:[%s139 + $0x20] sm:$0xf]
      %v157 = vld [vmem:[%s139 + $0x24] sm:$0xf]
      %v158 = vld [vmem:[%s139 + $0x28] sm:$0xf]
      %v159 = vld [vmem:[%s139 + $0x2c] sm:$0xf]
      %v160 = vld [vmem:[%s139 + $0x30] sm:$0xf]
      %v161 = vld [vmem:[%s139 + $0x34] sm:$0xf]
      %v162 = vld [vmem:[%s139 + $0x38] sm:$0xf]
      %v163 = vld [vmem:[%s139 + $0x3c] sm:$0xf]
      %v164 = vld [vmem:[%s139 + $0x40] sm:$0xf]
      %v165 = vld [vmem:[%s139 + $0x44] sm:$0xf]
      %v166 = vld [vmem:[%s139 + $0x48] sm:$0xf]
      %v167 = vld [vmem:[%s139 + $0x4c] sm:$0xf]
      %v168 = vld [vmem:[%s139 + $0x50] sm:$0xf]
      %v169 = vld [vmem:[%s139 + $0x54] sm:$0xf]
      %v170 = vld [vmem:[%s139 + $0x58] sm:$0xf]
      %v171 = vld [vmem:[%s139 + $0x5c] sm:$0xf]
      %v172 = vld [vmem:[%s139 + $0x60] sm:$0xf]
      %v173 = vld [vmem:[%s139 + $0x64] sm:$0xf]
      %v174 = vld [vmem:[%s139 + $0x68] sm:$0xf]
      %v175 = vld [vmem:[%s139 + $0x6c] sm:$0xf]
      %v176 = vld [vmem:[%s139 + $0x70] sm:$0xf]
      %v177 = vld [vmem:[%s139 + $0x74] sm:$0xf]
      %v178 = vld [vmem:[%s139 + $0x78] sm:$0xf]
      %v179 = vld [vmem:[%s139 + $0x7c] sm:$0xf]
      %v180 = vld [vmem:[%s139 + $0x80] sm:$0xf]
      %v181 = vld [vmem:[%s139 + $0x84] sm:$0xf]
      %v182 = vld [vmem:[%s139 + $0x88] sm:$0xf]
      %v183 = vld [vmem:[%s139 + $0x8c] sm:$0xf]
      %v184 = vld [vmem:[%s139 + $0x90] sm:$0xf]
      %v185 = vld [vmem:[%s139 + $0x94] sm:$0xf]
      %v186 = vld [vmem:[%s139 + $0x98] sm:$0xf]
      %v187 = vld [vmem:[%s139 + $0x9c] sm:$0xf]
      %v188 = vld [vmem:[%s139 + $0xa0] sm:$0xf]
      %v189 = vld [vmem:[%s139 + $0xa4] sm:$0xf]
      %v190 = vld [vmem:[%s139 + $0xa8] sm:$0xf]
      %v191 = vld [vmem:[%s139 + $0xac] sm:$0xf]
      %v192 = vld [vmem:[%s139 + $0xb0] sm:$0xf]
      %v193 = vld [vmem:[%s139 + $0xb4] sm:$0xf]
      %v194 = vld [vmem:[%s139 + $0xb8] sm:$0xf]
      %v195 = vld [vmem:[%s139 + $0xbc] sm:$0xf]
      %v196 = vld [vmem:[%s139 + $0xc0] sm:$0xf]
      %v197 = vld [vmem:[%s139 + $0xc4] sm:$0xf]
      %v198 = vld [vmem:[%s139 + $0xc8] sm:$0xf]
      %v199 = vld [vmem:[%s139 + $0xcc] sm:$0xf]
      %v200 = vld [vmem:[%s139 + $0xd0] sm:$0xf]
      %v201 = vld [vmem:[%s139 + $0xd4] sm:$0xf]
      %v202 = vld [vmem:[%s139 + $0xd8] sm:$0xf]
      %v203 = vld [vmem:[%s139 + $0xdc] sm:$0xf]
      %v204 = vld [vmem:[%s139 + $0xe0] sm:$0xf]
      %v205 = vld [vmem:[%s139 + $0xe4] sm:$0xf]
      %v206 = vld [vmem:[%s139 + $0xe8] sm:$0xf]
      %v207 = vld [vmem:[%s139 + $0xec] sm:$0xf]
      %v208 = vld [vmem:[%s139 + $0xf0] sm:$0xf]
      %v209 = vld [vmem:[%s139 + $0xf4] sm:$0xf]
      %v210 = vld [vmem:[%s139 + $0xf8] sm:$0xf]
      %v211 = vld [vmem:[%s139 + $0xfc] sm:$0xf]
      %v212 = vld [vmem:[%s139 + $0x100] sm:$0xf]
      %v213 = vld [vmem:[%s139 + $0x104] sm:$0xf]
      %v214 = vld [vmem:[%s139 + $0x108] sm:$0xf]
      %v215 = vld [vmem:[%s139 + $0x10c] sm:$0xf]
      %v216 = vld [vmem:[%s139 + $0x110] sm:$0xf]
      %v217 = vld [vmem:[%s139 + $0x114] sm:$0xf]
      %v218 = vld [vmem:[%s139 + $0x118] sm:$0xf]
      %v219 = vld [vmem:[%s139 + $0x11c] sm:$0xf]
      %v220 = vld [vmem:[%s139 + $0x120] sm:$0xf]
      %v221 = vld [vmem:[%s139 + $0x124] sm:$0xf]
      %v222 = vld [vmem:[%s139 + $0x128] sm:$0xf]
      %v223 = vld [vmem:[%s139 + $0x12c] sm:$0xf]
      %v224 = vld [vmem:[%s139 + $0x130] sm:$0xf]
      %v225 = vld [vmem:[%s139 + $0x134] sm:$0xf]
      %v226 = vld [vmem:[%s139 + $0x138] sm:$0xf]
      %v227 = vld [vmem:[%s139 + $0x13c] sm:$0xf]
      %v228 = vld [vmem:[%s139 + $0x140] sm:$0xf]
      %v229 = vld [vmem:[%s139 + $0x144] sm:$0xf]
      %v230 = vld [vmem:[%s139 + $0x148] sm:$0xf]
      %v231 = vld [vmem:[%s139 + $0x14c] sm:$0xf]
      %v232 = vld [vmem:[%s139 + $0x150] sm:$0xf]
      %v233 = vld [vmem:[%s139 + $0x154] sm:$0xf]
      %v234 = vld [vmem:[%s139 + $0x158] sm:$0xf]
      %v235 = vld [vmem:[%s139 + $0x15c] sm:$0xf]
      %v236 = vld [vmem:[%s139 + $0x160] sm:$0xf]
      %v237 = vld [vmem:[%s139 + $0x164] sm:$0xf]
      %v238 = vld [vmem:[%s139 + $0x168] sm:$0xf]
      %v239 = vld [vmem:[%s139 + $0x16c] sm:$0xf]
      %v240 = vld [vmem:[%s139 + $0x170] sm:$0xf]
      %v241 = vld [vmem:[%s139 + $0x174] sm:$0xf]
      %v242 = vld [vmem:[%s139 + $0x178] sm:$0xf]
      %v243 = vld [vmem:[%s139 + $0x17c] sm:$0xf]
      %v244 = vld [vmem:[%s139 + $0x180] sm:$0xf]
      %v245 = vld [vmem:[%s139 + $0x184] sm:$0xf]
      %v246 = vld [vmem:[%s139 + $0x188] sm:$0xf]
      %v247 = vld [vmem:[%s139 + $0x18c] sm:$0xf]
      %v248 = vld [vmem:[%s139 + $0x190] sm:$0xf]
      %v249 = vld [vmem:[%s139 + $0x194] sm:$0xf]
      %v250 = vld [vmem:[%s139 + $0x198] sm:$0xf]
      %v251 = vld [vmem:[%s139 + $0x19c] sm:$0xf]
      %v252 = vld [vmem:[%s139 + $0x1a0] sm:$0xf]
      %v253 = vld [vmem:[%s139 + $0x1a4] sm:$0xf]
      %v254 = vld [vmem:[%s139 + $0x1a8] sm:$0xf]
      %v255 = vld [vmem:[%s139 + $0x1ac] sm:$0xf]
      %v256 = vld [vmem:[%s139 + $0x1b0] sm:$0xf]
      %v257 = vld [vmem:[%s139 + $0x1b4] sm:$0xf]
      %v258 = vld [vmem:[%s139 + $0x1b8] sm:$0xf]
      %v259 = vld [vmem:[%s139 + $0x1bc] sm:$0xf]
      %v260 = vld [vmem:[%s139 + $0x1c0] sm:$0xf]
      %v261 = vld [vmem:[%s139 + $0x1c4] sm:$0xf]
      %v262 = vld [vmem:[%s139 + $0x1c8] sm:$0xf]
      %v263 = vld [vmem:[%s139 + $0x1cc] sm:$0xf]
      %v264 = vld [vmem:[%s139 + $0x1d0] sm:$0xf]
      %v265 = vld [vmem:[%s139 + $0x1d4] sm:$0xf]
      %v266 = vld [vmem:[%s139 + $0x1d8] sm:$0xf]
      %v267 = vld [vmem:[%s139 + $0x1dc] sm:$0xf]
      %v268 = vld [vmem:[%s139 + $0x1e0] sm:$0xf]
      %v269 = vld [vmem:[%s139 + $0x1e4] sm:$0xf]
      %v270 = vld [vmem:[%s139 + $0x1e8] sm:$0xf]
      %v271 = vld [vmem:[%s139 + $0x1ec] sm:$0xf]
      %v272 = vld [vmem:[%s139 + $0x1f0] sm:$0xf]
      %v273 = vld [vmem:[%s139 + $0x1f4] sm:$0xf]
      %v274 = vld [vmem:[%s139 + $0x1f8] sm:$0xf]
      %v275 = vld [vmem:[%s139 + $0x1fc] sm:$0xf]
      %v276 = vld [vmem:[%s1] sm:$0xf]
      %v277 = vld [vmem:[%s1 + $0x4] sm:$0xf]
      %v278 = vld [vmem:[%s1 + $0x8] sm:$0xf]
      %v279 = vld [vmem:[%s1 + $0xc] sm:$0xf]
      %v280 = vld [vmem:[%s1 + $0x10] sm:$0xf]
      %v281 = vld [vmem:[%s1 + $0x14] sm:$0xf]
      %v282 = vld [vmem:[%s1 + $0x18] sm:$0xf]
      %v283 = vld [vmem:[%s1 + $0x1c] sm:$0xf]
      %v284 = vld [vmem:[%s1 + $0x20] sm:$0xf]
      %v413 = vunpack.c.l.b16 %v148
      %v414 = vunpack.c.l.b16 %v149
      %v415 = vunpack.c.l.b16 %v150
      %v416 = vunpack.c.l.b16 %v151
      %v417 = vunpack.c.l.b16 %v152
      %v418 = vunpack.c.l.b16 %v153
      %v419 = vunpack.c.l.b16 %v154
      %v420 = vunpack.c.l.b16 %v155
      %v421 = vunpack.c.l.b16 %v156
      %v422 = vunpack.c.l.b16 %v157
      %v423 = vunpack.c.l.b16 %v158
      %v424 = vunpack.c.l.b16 %v159
      %v425 = vunpack.c.l.b16 %v160
      %v426 = vunpack.c.l.b16 %v161
      %v427 = vunpack.c.l.b16 %v162
      %v428 = vunpack.c.l.b16 %v163
      %v429 = vunpack.c.l.b16 %v164
      %v430 = vunpack.c.l.b16 %v165
      %v431 = vunpack.c.l.b16 %v166
      %v432 = vunpack.c.l.b16 %v167
      %v433 = vunpack.c.l.b16 %v168
      %v434 = vunpack.c.l.b16 %v169
      %v435 = vunpack.c.l.b16 %v170
      %v436 = vunpack.c.l.b16 %v171
      %v437 = vunpack.c.l.b16 %v172
      %v438 = vunpack.c.l.b16 %v173
      %v439 = vunpack.c.l.b16 %v174
      %v440 = vunpack.c.l.b16 %v175
      %v441 = vunpack.c.l.b16 %v176
      %v442 = vunpack.c.l.b16 %v177
      %v443 = vunpack.c.l.b16 %v178
      %v444 = vunpack.c.l.b16 %v179
      %v445 = vunpack.c.l.b16 %v180
      %v446 = vunpack.c.l.b16 %v181
      %v447 = vunpack.c.l.b16 %v182
      %v448 = vunpack.c.l.b16 %v183
      %v449 = vunpack.c.l.b16 %v184
      %v450 = vunpack.c.l.b16 %v185
      %v451 = vunpack.c.l.b16 %v186
      %v452 = vunpack.c.l.b16 %v187
      %v453 = vunpack.c.l.b16 %v188
      %v454 = vunpack.c.l.b16 %v189
      %v455 = vunpack.c.l.b16 %v190
      %v456 = vunpack.c.l.b16 %v191
      %v457 = vunpack.c.l.b16 %v192
      %v458 = vunpack.c.l.b16 %v193
      %v459 = vunpack.c.l.b16 %v194
      %v460 = vunpack.c.l.b16 %v195
      %v461 = vunpack.c.l.b16 %v196
      %v462 = vunpack.c.l.b16 %v197
      %v463 = vunpack.c.l.b16 %v198
      %v464 = vunpack.c.l.b16 %v199
      %v465 = vunpack.c.l.b16 %v200
      %v466 = vunpack.c.l.b16 %v201
      %v467 = vunpack.c.l.b16 %v202
      %v468 = vunpack.c.l.b16 %v203
      %v469 = vunpack.c.l.b16 %v204
      %v470 = vunpack.c.l.b16 %v205
      %v471 = vunpack.c.l.b16 %v206
      %v472 = vunpack.c.l.b16 %v207
      %v473 = vunpack.c.l.b16 %v208
      %v474 = vunpack.c.l.b16 %v209
      %v475 = vunpack.c.l.b16 %v210
      %v476 = vunpack.c.l.b16 %v211
      %v477 = vunpack.c.l.b16 %v212
      %v478 = vunpack.c.l.b16 %v213
      %v479 = vunpack.c.l.b16 %v214
      %v480 = vunpack.c.l.b16 %v215
      %v481 = vunpack.c.l.b16 %v216
      %v482 = vunpack.c.l.b16 %v217
      %v483 = vunpack.c.l.b16 %v218
      %v484 = vunpack.c.l.b16 %v219
      %v485 = vunpack.c.l.b16 %v220
      %v486 = vunpack.c.l.b16 %v221
      %v487 = vunpack.c.l.b16 %v222
      %v488 = vunpack.c.l.b16 %v223
      %v489 = vunpack.c.l.b16 %v224
      %v490 = vunpack.c.l.b16 %v225
      %v491 = vunpack.c.l.b16 %v226
      %v492 = vunpack.c.l.b16 %v227
      %v493 = vunpack.c.l.b16 %v228
      %v494 = vunpack.c.l.b16 %v229
      %v495 = vunpack.c.l.b16 %v230
      %v496 = vunpack.c.l.b16 %v231
      %v497 = vunpack.c.l.b16 %v232
      %v498 = vunpack.c.l.b16 %v233
      %v499 = vunpack.c.l.b16 %v234
      %v500 = vunpack.c.l.b16 %v235
      %v501 = vunpack.c.l.b16 %v236
      %v502 = vunpack.c.l.b16 %v237
      %v503 = vunpack.c.l.b16 %v238
      %v504 = vunpack.c.l.b16 %v239
      %v505 = vunpack.c.l.b16 %v240
      %v506 = vunpack.c.l.b16 %v241
      %v507 = vunpack.c.l.b16 %v242
      %v508 = vunpack.c.l.b16 %v243
      %v509 = vunpack.c.l.b16 %v244
      %v510 = vunpack.c.l.b16 %v245
      %v511 = vunpack.c.l.b16 %v246
      %v512 = vunpack.c.l.b16 %v247
      %v513 = vunpack.c.l.b16 %v248
      %v514 = vunpack.c.l.b16 %v249
      %v515 = vunpack.c.l.b16 %v250
      %v516 = vunpack.c.l.b16 %v251
      %v517 = vunpack.c.l.b16 %v252
      %v518 = vunpack.c.l.b16 %v253
      %v519 = vunpack.c.l.b16 %v254
      %v520 = vunpack.c.l.b16 %v255
      %v521 = vunpack.c.l.b16 %v256
      %v522 = vunpack.c.l.b16 %v257
      %v523 = vunpack.c.l.b16 %v258
      %v524 = vunpack.c.l.b16 %v259
      %v525 = vunpack.c.l.b16 %v260
      %v526 = vunpack.c.l.b16 %v261
      %v527 = vunpack.c.l.b16 %v262
      %v528 = vunpack.c.l.b16 %v263
      %v529 = vunpack.c.l.b16 %v264
      %v530 = vunpack.c.l.b16 %v265
      %v531 = vunpack.c.l.b16 %v266
      %v532 = vunpack.c.l.b16 %v267
      %v533 = vunpack.c.l.b16 %v268
      %v534 = vunpack.c.l.b16 %v269
      %v535 = vunpack.c.l.b16 %v270
      %v536 = vunpack.c.l.b16 %v271
      %v537 = vunpack.c.l.b16 %v272
      %v538 = vunpack.c.l.b16 %v273
      %v539 = vunpack.c.l.b16 %v274
      %v540 = vunpack.c.l.b16 %v275
      %v541 = vpack.c.b16 %v414, %v413
      %v542 = vpack.c.b16 %v416, %v415
      %v543 = vpack.c.b16 %v418, %v417
      %v544 = vpack.c.b16 %v420, %v419
      %v545 = vpack.c.b16 %v422, %v421
      %v546 = vpack.c.b16 %v424, %v423
      %v547 = vpack.c.b16 %v426, %v425
      %v548 = vpack.c.b16 %v428, %v427
      %v549 = vpack.c.b16 %v430, %v429
      %v550 = vpack.c.b16 %v432, %v431
      %v551 = vpack.c.b16 %v434, %v433
      %v552 = vpack.c.b16 %v436, %v435
      %v553 = vpack.c.b16 %v438, %v437
      %v554 = vpack.c.b16 %v440, %v439
      %v555 = vpack.c.b16 %v442, %v441
      %v556 = vpack.c.b16 %v444, %v443
      %v557 = vpack.c.b16 %v446, %v445
      %v558 = vpack.c.b16 %v448, %v447
      %v559 = vpack.c.b16 %v450, %v449
      %v560 = vpack.c.b16 %v452, %v451
      %v561 = vpack.c.b16 %v454, %v453
      %v562 = vpack.c.b16 %v456, %v455
      %v563 = vpack.c.b16 %v458, %v457
      %v564 = vpack.c.b16 %v460, %v459
      %v565 = vpack.c.b16 %v462, %v461
      %v566 = vpack.c.b16 %v464, %v463
      %v567 = vpack.c.b16 %v466, %v465
      %v568 = vpack.c.b16 %v468, %v467
      %v569 = vpack.c.b16 %v470, %v469
      %v570 = vpack.c.b16 %v472, %v471
      %v571 = vpack.c.b16 %v474, %v473
      %v572 = vpack.c.b16 %v476, %v475
      %v573 = vpack.c.b16 %v478, %v477
      %v574 = vpack.c.b16 %v480, %v479
      %v575 = vpack.c.b16 %v482, %v481
      %v576 = vpack.c.b16 %v484, %v483
      %v577 = vpack.c.b16 %v486, %v485
      %v578 = vpack.c.b16 %v488, %v487
      %v579 = vpack.c.b16 %v490, %v489
      %v580 = vpack.c.b16 %v492, %v491
      %v581 = vpack.c.b16 %v494, %v493
      %v582 = vpack.c.b16 %v496, %v495
      %v583 = vpack.c.b16 %v498, %v497
      %v584 = vpack.c.b16 %v500, %v499
      %v585 = vpack.c.b16 %v502, %v501
      %v586 = vpack.c.b16 %v504, %v503
      %v587 = vpack.c.b16 %v506, %v505
      %v588 = vpack.c.b16 %v508, %v507
      %v589 = vpack.c.b16 %v510, %v509
      %v590 = vpack.c.b16 %v512, %v511
      %v591 = vpack.c.b16 %v514, %v513
      %v592 = vpack.c.b16 %v516, %v515
      %v593 = vpack.c.b16 %v518, %v517
      %v594 = vpack.c.b16 %v520, %v519
      %v595 = vpack.c.b16 %v522, %v521
      %v596 = vpack.c.b16 %v524, %v523
      %v597 = vpack.c.b16 %v526, %v525
      %v598 = vpack.c.b16 %v528, %v527
      %v599 = vpack.c.b16 %v530, %v529
      %v600 = vpack.c.b16 %v532, %v531
      %v601 = vpack.c.b16 %v534, %v533
      %v602 = vpack.c.b16 %v536, %v535
      %v603 = vpack.c.b16 %v538, %v537
      %v604 = vpack.c.b16 %v540, %v539
      %v614 = vunpack.c.l.b16 %v276
      %v615 = vunpack.c.l.b16 %v277
      %v616 = vunpack.c.l.b16 %v278
      %v617 = vunpack.c.l.b16 %v279
      %v618 = vunpack.c.l.b16 %v280
      %v619 = vunpack.c.l.b16 %v281
      %v620 = vunpack.c.l.b16 %v282
      %v621 = vunpack.c.l.b16 %v283
      %v622 = vunpack.c.l.b16 %v284
      %v623 = vpack.c.b16 %v615, %v614
      %v624 = vpack.c.b16 %v617, %v616
      %v625 = vpack.c.b16 %v619, %v618
      %v626 = vpack.c.b16 %v621, %v620
      %v627 = vpack.c.b16 %v622, %v622
      %vm632 = vcmask 588800
      %v634 = vsel %vm632, %v541, 0
      %v637 = vsel %vm632, %v542, 0
      %v640 = vsel %vm632, %v543, 0
      %v643 = vsel %vm632, %v544, 0
      %v646 = vsel %vm632, %v545, 0
      %v649 = vsel %vm632, %v546, 0
      %v652 = vsel %vm632, %v547, 0
      %v655 = vsel %vm632, %v548, 0
      %v658 = vsel %vm632, %v549, 0
      %v661 = vsel %vm632, %v550, 0
      %v664 = vsel %vm632, %v551, 0
      %v667 = vsel %vm632, %v552, 0
      %v670 = vsel %vm632, %v553, 0
      %v673 = vsel %vm632, %v554, 0
      %v676 = vsel %vm632, %v555, 0
      %v679 = vsel %vm632, %v556, 0
      %v682 = vsel %vm632, %v557, 0
      %v685 = vsel %vm632, %v558, 0
      %v688 = vsel %vm632, %v559, 0
      %v691 = vsel %vm632, %v560, 0
      %v694 = vsel %vm632, %v561, 0
      %v697 = vsel %vm632, %v562, 0
      %v700 = vsel %vm632, %v563, 0
      %v703 = vsel %vm632, %v564, 0
      %v706 = vsel %vm632, %v565, 0
      %v709 = vsel %vm632, %v566, 0
      %v712 = vsel %vm632, %v567, 0
      %v715 = vsel %vm632, %v568, 0
      %v718 = vsel %vm632, %v569, 0
      %v721 = vsel %vm632, %v570, 0
      %v724 = vsel %vm632, %v571, 0
      %v727 = vsel %vm632, %v572, 0
      %v730 = vsel %vm632, %v573, 0
      %v733 = vsel %vm632, %v574, 0
      %v736 = vsel %vm632, %v575, 0
      %v739 = vsel %vm632, %v576, 0
      %v742 = vsel %vm632, %v577, 0
      %v745 = vsel %vm632, %v578, 0
      %v748 = vsel %vm632, %v579, 0
      %v751 = vsel %vm632, %v580, 0
      %v754 = vsel %vm632, %v581, 0
      %v757 = vsel %vm632, %v582, 0
      %v760 = vsel %vm632, %v583, 0
      %v763 = vsel %vm632, %v584, 0
      %v766 = vsel %vm632, %v585, 0
      %v769 = vsel %vm632, %v586, 0
      %v772 = vsel %vm632, %v587, 0
      %v775 = vsel %vm632, %v588, 0
      %v778 = vsel %vm632, %v589, 0
      %v781 = vsel %vm632, %v590, 0
      %v784 = vsel %vm632, %v591, 0
      %v787 = vsel %vm632, %v592, 0
      %v790 = vsel %vm632, %v593, 0
      %v793 = vsel %vm632, %v594, 0
      %v796 = vsel %vm632, %v595, 0
      %v799 = vsel %vm632, %v596, 0
      %v802 = vsel %vm632, %v597, 0
      %v805 = vsel %vm632, %v598, 0
      %v808 = vsel %vm632, %v599, 0
      %v811 = vsel %vm632, %v600, 0
      %v814 = vsel %vm632, %v601, 0
      %v817 = vsel %vm632, %v602, 0
      %v820 = vsel %vm632, %v603, 0
      %v823 = vsel %vm632, %v604, 0
      %vm825 = vcmask 1043456
      %v827 = vsel %vm825, %v627, 0
      %829 = vmatprep.subr.bf16.mxu0 0
      %830 = vmatpush1.bf16.msra.mxu0 0
      %831 = vmatprep.subr.bf16.mxu0 0
      %832 = vmatpush1.bf16.msra.mxu0 0
      %833 = vmatprep.subr.bf16.mxu0 0
      %834 = vmatpush1.bf16.msra.mxu0 0
      %835 = vmatprep.subr.bf16.mxu0 0
      %836 = vmatpush1.bf16.msra.mxu0 %v827
      %837 = vmatprep.subr.bf16.mxu0 0
      %838 = vmatpush1.bf16.msra.mxu0 %v626
      %839 = vmatprep.subr.bf16.mxu0 0
      %840 = vmatpush1.bf16.msra.mxu0 %v625
      %841 = vmatprep.subr.bf16.mxu0 0
      %842 = vmatpush1.bf16.msra.mxu0 %v624
      %843 = vmatprep.subr.bf16.mxu0 0
      %844 = vmatpush1.bf16.msra.mxu0 %v623
      %845 = vmatprep.subr.bf16.mxu0 0
      %846 = vmatpush2.bf16.msra.mxu0 0
      %847 = vmatprep.subr.bf16.mxu0 0
      %848 = vmatpush2.bf16.msra.mxu0 0
      %849 = vmatprep.subr.bf16.mxu0 0
      %850 = vmatpush2.bf16.msra.mxu0 0
      %851 = vmatprep.subr.bf16.mxu0 0
      %852 = vmatpush2.bf16.msra.mxu0 0
      %853 = vmatprep.subr.bf16.mxu0 0
      %854 = vmatpush2.bf16.msra.mxu0 0
      %855 = vmatprep.subr.bf16.mxu0 0
      %856 = vmatpush2.bf16.msra.mxu0 0
      %857 = vmatprep.subr.bf16.mxu0 0
      %858 = vmatpush2.bf16.msra.mxu0 0
      %859 = vmatprep.subr.bf16.mxu0 0
      %860 = vmatpush2.bf16.msra.mxu0 0
      %861 = vmatprep.mubr.bf16.mxu0 0
      %862 = vmatmul.mubr.bf16.gmra.mxu0 %v634
      %v863 = vpop.f32.mrf.mxu0
      %v864 = vadd.f32 0.0, %v863
      %v865 = vpop.f32.mrf.mxu0
      %v866 = vpop.f32.mrf.mxu0
      %v867 = vadd.f32 0.0, %v866
      %v868 = vpop.f32.mrf.mxu0
      %869 = vmatprep.mubr.bf16.mxu0 0
      %870 = vmatmul.mubr.bf16.gmra.mxu0 %v637
      %v871 = vpop.f32.mrf.mxu0
      %v872 = vadd.f32 0.0, %v871
      %v873 = vpop.f32.mrf.mxu0
      %v874 = vpop.f32.mrf.mxu0
      %v875 = vadd.f32 0.0, %v874
      %v876 = vpop.f32.mrf.mxu0
      %877 = vmatprep.mubr.bf16.mxu0 0
      %878 = vmatmul.mubr.bf16.gmra.mxu0 %v640
      %v879 = vpop.f32.mrf.mxu0
      %v880 = vadd.f32 0.0, %v879
      %v881 = vpop.f32.mrf.mxu0
      %v882 = vpop.f32.mrf.mxu0
      %v883 = vadd.f32 0.0, %v882
      %v884 = vpop.f32.mrf.mxu0
      %885 = vmatprep.mubr.bf16.mxu0 0
      %886 = vmatmul.mubr.bf16.gmra.mxu0 %v643
      %v887 = vpop.f32.mrf.mxu0
      %v888 = vadd.f32 0.0, %v887
      %v889 = vpop.f32.mrf.mxu0
      %v890 = vpop.f32.mrf.mxu0
      %v891 = vadd.f32 0.0, %v890
      %v892 = vpop.f32.mrf.mxu0
      %893 = vmatprep.mubr.bf16.mxu0 0
      %894 = vmatmul.mubr.bf16.gmra.mxu0 %v646
      %v895 = vpop.f32.mrf.mxu0
      %v896 = vadd.f32 0.0, %v895
      %v897 = vpop.f32.mrf.mxu0
      %v898 = vpop.f32.mrf.mxu0
      %v899 = vadd.f32 0.0, %v898
      %v900 = vpop.f32.mrf.mxu0
      %901 = vmatprep.mubr.bf16.mxu0 0
      %902 = vmatmul.mubr.bf16.gmra.mxu0 %v649
      %v903 = vpop.f32.mrf.mxu0
      %v904 = vadd.f32 0.0, %v903
      %v905 = vpop.f32.mrf.mxu0
      %v906 = vpop.f32.mrf.mxu0
      %v907 = vadd.f32 0.0, %v906
      %v908 = vpop.f32.mrf.mxu0
      %909 = vmatprep.mubr.bf16.mxu0 0
      %910 = vmatmul.mubr.bf16.gmra.mxu0 %v652
      %v911 = vpop.f32.mrf.mxu0
      %v912 = vadd.f32 0.0, %v911
      %v913 = vpop.f32.mrf.mxu0
      %v914 = vpop.f32.mrf.mxu0
      %v915 = vadd.f32 0.0, %v914
      %v916 = vpop.f32.mrf.mxu0
      %917 = vmatprep.mubr.bf16.mxu0 0
      %918 = vmatmul.mubr.bf16.gmra.mxu0 %v655
      %v919 = vpop.f32.mrf.mxu0
      %v920 = vadd.f32 0.0, %v919
      %v921 = vpop.f32.mrf.mxu0
      %v922 = vpop.f32.mrf.mxu0
      %v923 = vadd.f32 0.0, %v922
      %v924 = vpop.f32.mrf.mxu0
      %925 = vmatprep.mubr.bf16.mxu0 0
      %926 = vmatmul.mubr.bf16.gmra.mxu0 %v658
      %v927 = vpop.f32.mrf.mxu0
      %v928 = vadd.f32 0.0, %v927
      %v929 = vpop.f32.mrf.mxu0
      %v930 = vpop.f32.mrf.mxu0
      %v931 = vadd.f32 0.0, %v930
      %v932 = vpop.f32.mrf.mxu0
      %933 = vmatprep.mubr.bf16.mxu0 0
      %934 = vmatmul.mubr.bf16.gmra.mxu0 %v661
      %v935 = vpop.f32.mrf.mxu0
      %v936 = vadd.f32 0.0, %v935
      %v937 = vpop.f32.mrf.mxu0
      %v938 = vpop.f32.mrf.mxu0
      %v939 = vadd.f32 0.0, %v938
      %v940 = vpop.f32.mrf.mxu0
      %941 = vmatprep.mubr.bf16.mxu0 0
      %942 = vmatmul.mubr.bf16.gmra.mxu0 %v664
      %v943 = vpop.f32.mrf.mxu0
      %v944 = vadd.f32 0.0, %v943
      %v945 = vpop.f32.mrf.mxu0
      %v946 = vpop.f32.mrf.mxu0
      %v947 = vadd.f32 0.0, %v946
      %v948 = vpop.f32.mrf.mxu0
      %949 = vmatprep.mubr.bf16.mxu0 0
      %950 = vmatmul.mubr.bf16.gmra.mxu0 %v667
      %v951 = vpop.f32.mrf.mxu0
      %v952 = vadd.f32 0.0, %v951
      %v953 = vpop.f32.mrf.mxu0
      %v954 = vpop.f32.mrf.mxu0
      %v955 = vadd.f32 0.0, %v954
      %v956 = vpop.f32.mrf.mxu0
      %957 = vmatprep.mubr.bf16.mxu0 0
      %958 = vmatmul.mubr.bf16.gmra.mxu0 %v670
      %v959 = vpop.f32.mrf.mxu0
      %v960 = vadd.f32 0.0, %v959
      %v961 = vpop.f32.mrf.mxu0
      %v962 = vpop.f32.mrf.mxu0
      %v963 = vadd.f32 0.0, %v962
      %v964 = vpop.f32.mrf.mxu0
      %965 = vmatprep.mubr.bf16.mxu0 0
      %966 = vmatmul.mubr.bf16.gmra.mxu0 %v673
      %v967 = vpop.f32.mrf.mxu0
      %v968 = vadd.f32 0.0, %v967
      %v969 = vpop.f32.mrf.mxu0
      %v970 = vpop.f32.mrf.mxu0
      %v971 = vadd.f32 0.0, %v970
      %v972 = vpop.f32.mrf.mxu0
      %973 = vmatprep.mubr.bf16.mxu0 0
      %974 = vmatmul.mubr.bf16.gmra.mxu0 %v676
      %v975 = vpop.f32.mrf.mxu0
      %v976 = vadd.f32 0.0, %v975
      %v977 = vpop.f32.mrf.mxu0
      %v978 = vpop.f32.mrf.mxu0
      %v979 = vadd.f32 0.0, %v978
      %v980 = vpop.f32.mrf.mxu0
      %981 = vmatprep.mubr.bf16.mxu0 0
      %982 = vmatmul.mubr.bf16.gmra.mxu0 %v679
      %v983 = vpop.f32.mrf.mxu0
      %v984 = vadd.f32 0.0, %v983
      %v985 = vpop.f32.mrf.mxu0
      %v986 = vpop.f32.mrf.mxu0
      %v987 = vadd.f32 0.0, %v986
      %v988 = vpop.f32.mrf.mxu0
      %989 = vmatprep.mubr.bf16.mxu0 0
      %990 = vmatmul.mubr.bf16.gmra.mxu0 %v682
      %v991 = vpop.f32.mrf.mxu0
      %v992 = vadd.f32 0.0, %v991
      %v993 = vpop.f32.mrf.mxu0
      %v994 = vpop.f32.mrf.mxu0
      %v995 = vadd.f32 0.0, %v994
      %v996 = vpop.f32.mrf.mxu0
      %997 = vmatprep.mubr.bf16.mxu0 0
      %998 = vmatmul.mubr.bf16.gmra.mxu0 %v685
      %v999 = vpop.f32.mrf.mxu0
      %v1000 = vadd.f32 0.0, %v999
      %v1001 = vpop.f32.mrf.mxu0
      %v1002 = vpop.f32.mrf.mxu0
      %v1003 = vadd.f32 0.0, %v1002
      %v1004 = vpop.f32.mrf.mxu0
      %1005 = vmatprep.mubr.bf16.mxu0 0
      %1006 = vmatmul.mubr.bf16.gmra.mxu0 %v688
      %v1007 = vpop.f32.mrf.mxu0
      %v1008 = vadd.f32 0.0, %v1007
      %v1009 = vpop.f32.mrf.mxu0
      %v1010 = vpop.f32.mrf.mxu0
      %v1011 = vadd.f32 0.0, %v1010
      %v1012 = vpop.f32.mrf.mxu0
      %1013 = vmatprep.mubr.bf16.mxu0 0
      %1014 = vmatmul.mubr.bf16.gmra.mxu0 %v691
      %v1015 = vpop.f32.mrf.mxu0
      %v1016 = vadd.f32 0.0, %v1015
      %v1017 = vpop.f32.mrf.mxu0
      %v1018 = vpop.f32.mrf.mxu0
      %v1019 = vadd.f32 0.0, %v1018
      %v1020 = vpop.f32.mrf.mxu0
      %1021 = vmatprep.mubr.bf16.mxu0 0
      %1022 = vmatmul.mubr.bf16.gmra.mxu0 %v694
      %v1023 = vpop.f32.mrf.mxu0
      %v1024 = vadd.f32 0.0, %v1023
      %v1025 = vpop.f32.mrf.mxu0
      %v1026 = vpop.f32.mrf.mxu0
      %v1027 = vadd.f32 0.0, %v1026
      %v1028 = vpop.f32.mrf.mxu0
      %1029 = vmatprep.mubr.bf16.mxu0 0
      %1030 = vmatmul.mubr.bf16.gmra.mxu0 %v697
      %v1031 = vpop.f32.mrf.mxu0
      %v1032 = vadd.f32 0.0, %v1031
      %v1033 = vpop.f32.mrf.mxu0
      %v1034 = vpop.f32.mrf.mxu0
      %v1035 = vadd.f32 0.0, %v1034
      %v1036 = vpop.f32.mrf.mxu0
      %1037 = vmatprep.mubr.bf16.mxu0 0
      %1038 = vmatmul.mubr.bf16.gmra.mxu0 %v700
      %v1039 = vpop.f32.mrf.mxu0
      %v1040 = vadd.f32 0.0, %v1039
      %v1041 = vpop.f32.mrf.mxu0
      %v1042 = vpop.f32.mrf.mxu0
      %v1043 = vadd.f32 0.0, %v1042
      %v1044 = vpop.f32.mrf.mxu0
      %1045 = vmatprep.mubr.bf16.mxu0 0
      %1046 = vmatmul.mubr.bf16.gmra.mxu0 %v703
      %v1047 = vpop.f32.mrf.mxu0
      %v1048 = vadd.f32 0.0, %v1047
      %v1049 = vpop.f32.mrf.mxu0
      %v1050 = vpop.f32.mrf.mxu0
      %v1051 = vadd.f32 0.0, %v1050
      %v1052 = vpop.f32.mrf.mxu0
      %1053 = vmatprep.mubr.bf16.mxu0 0
      %1054 = vmatmul.mubr.bf16.gmra.mxu0 %v706
      %v1055 = vpop.f32.mrf.mxu0
      %v1056 = vadd.f32 0.0, %v1055
      %v1057 = vpop.f32.mrf.mxu0
      %v1058 = vpop.f32.mrf.mxu0
      %v1059 = vadd.f32 0.0, %v1058
      %v1060 = vpop.f32.mrf.mxu0
      %1061 = vmatprep.mubr.bf16.mxu0 0
      %1062 = vmatmul.mubr.bf16.gmra.mxu0 %v709
      %v1063 = vpop.f32.mrf.mxu0
      %v1064 = vadd.f32 0.0, %v1063
      %v1065 = vpop.f32.mrf.mxu0
      %v1066 = vpop.f32.mrf.mxu0
      %v1067 = vadd.f32 0.0, %v1066
      %v1068 = vpop.f32.mrf.mxu0
      %1069 = vmatprep.mubr.bf16.mxu0 0
      %1070 = vmatmul.mubr.bf16.gmra.mxu0 %v712
      %v1071 = vpop.f32.mrf.mxu0
      %v1072 = vadd.f32 0.0, %v1071
      %v1073 = vpop.f32.mrf.mxu0
      %v1074 = vpop.f32.mrf.mxu0
      %v1075 = vadd.f32 0.0, %v1074
      %v1076 = vpop.f32.mrf.mxu0
      %1077 = vmatprep.mubr.bf16.mxu0 0
      %1078 = vmatmul.mubr.bf16.gmra.mxu0 %v715
      %v1079 = vpop.f32.mrf.mxu0
      %v1080 = vadd.f32 0.0, %v1079
      %v1081 = vpop.f32.mrf.mxu0
      %v1082 = vpop.f32.mrf.mxu0
      %v1083 = vadd.f32 0.0, %v1082
      %v1084 = vpop.f32.mrf.mxu0
      %1085 = vmatprep.mubr.bf16.mxu0 0
      %1086 = vmatmul.mubr.bf16.gmra.mxu0 %v718
      %v1087 = vpop.f32.mrf.mxu0
      %v1088 = vadd.f32 0.0, %v1087
      %v1089 = vpop.f32.mrf.mxu0
      %v1090 = vpop.f32.mrf.mxu0
      %v1091 = vadd.f32 0.0, %v1090
      %v1092 = vpop.f32.mrf.mxu0
      %1093 = vmatprep.mubr.bf16.mxu0 0
      %1094 = vmatmul.mubr.bf16.gmra.mxu0 %v721
      %v1095 = vpop.f32.mrf.mxu0
      %v1096 = vadd.f32 0.0, %v1095
      %v1097 = vpop.f32.mrf.mxu0
      %v1098 = vpop.f32.mrf.mxu0
      %v1099 = vadd.f32 0.0, %v1098
      %v1100 = vpop.f32.mrf.mxu0
      %1101 = vmatprep.mubr.bf16.mxu0 0
      %1102 = vmatmul.mubr.bf16.gmra.mxu0 %v724
      %v1103 = vpop.f32.mrf.mxu0
      %v1104 = vadd.f32 0.0, %v1103
      %v1105 = vpop.f32.mrf.mxu0
      %v1106 = vpop.f32.mrf.mxu0
      %v1107 = vadd.f32 0.0, %v1106
      %v1108 = vpop.f32.mrf.mxu0
      %1109 = vmatprep.mubr.bf16.mxu0 0
      %1110 = vmatmul.mubr.bf16.gmra.mxu0 %v727
      %v1111 = vpop.f32.mrf.mxu0
      %v1112 = vadd.f32 0.0, %v1111
      %v1113 = vpop.f32.mrf.mxu0
      %v1114 = vpop.f32.mrf.mxu0
      %v1115 = vadd.f32 0.0, %v1114
      %v1116 = vpop.f32.mrf.mxu0
      %1117 = vmatprep.mubr.bf16.mxu0 0
      %1118 = vmatmul.mubr.bf16.gmra.mxu0 %v730
      %v1119 = vpop.f32.mrf.mxu0
      %v1120 = vadd.f32 0.0, %v1119
      %v1121 = vpop.f32.mrf.mxu0
      %v1122 = vpop.f32.mrf.mxu0
      %v1123 = vadd.f32 0.0, %v1122
      %v1124 = vpop.f32.mrf.mxu0
      %1125 = vmatprep.mubr.bf16.mxu0 0
      %1126 = vmatmul.mubr.bf16.gmra.mxu0 %v733
      %v1127 = vpop.f32.mrf.mxu0
      %v1128 = vadd.f32 0.0, %v1127
      %v1129 = vpop.f32.mrf.mxu0
      %v1130 = vpop.f32.mrf.mxu0
      %v1131 = vadd.f32 0.0, %v1130
      %v1132 = vpop.f32.mrf.mxu0
      %1133 = vmatprep.mubr.bf16.mxu0 0
      %1134 = vmatmul.mubr.bf16.gmra.mxu0 %v736
      %v1135 = vpop.f32.mrf.mxu0
      %v1136 = vadd.f32 0.0, %v1135
      %v1137 = vpop.f32.mrf.mxu0
      %v1138 = vpop.f32.mrf.mxu0
      %v1139 = vadd.f32 0.0, %v1138
      %v1140 = vpop.f32.mrf.mxu0
      %1141 = vmatprep.mubr.bf16.mxu0 0
      %1142 = vmatmul.mubr.bf16.gmra.mxu0 %v739
      %v1143 = vpop.f32.mrf.mxu0
      %v1144 = vadd.f32 0.0, %v1143
      %v1145 = vpop.f32.mrf.mxu0
      %v1146 = vpop.f32.mrf.mxu0
      %v1147 = vadd.f32 0.0, %v1146
      %v1148 = vpop.f32.mrf.mxu0
      %1149 = vmatprep.mubr.bf16.mxu0 0
      %1150 = vmatmul.mubr.bf16.gmra.mxu0 %v742
      %v1151 = vpop.f32.mrf.mxu0
      %v1152 = vadd.f32 0.0, %v1151
      %v1153 = vpop.f32.mrf.mxu0
      %v1154 = vpop.f32.mrf.mxu0
      %v1155 = vadd.f32 0.0, %v1154
      %v1156 = vpop.f32.mrf.mxu0
      %1157 = vmatprep.mubr.bf16.mxu0 0
      %1158 = vmatmul.mubr.bf16.gmra.mxu0 %v745
      %v1159 = vpop.f32.mrf.mxu0
      %v1160 = vadd.f32 0.0, %v1159
      %v1161 = vpop.f32.mrf.mxu0
      %v1162 = vpop.f32.mrf.mxu0
      %v1163 = vadd.f32 0.0, %v1162
      %v1164 = vpop.f32.mrf.mxu0
      %1165 = vmatprep.mubr.bf16.mxu0 0
      %1166 = vmatmul.mubr.bf16.gmra.mxu0 %v748
      %v1167 = vpop.f32.mrf.mxu0
      %v1168 = vadd.f32 0.0, %v1167
      %v1169 = vpop.f32.mrf.mxu0
      %v1170 = vpop.f32.mrf.mxu0
      %v1171 = vadd.f32 0.0, %v1170
      %v1172 = vpop.f32.mrf.mxu0
      %1173 = vmatprep.mubr.bf16.mxu0 0
      %1174 = vmatmul.mubr.bf16.gmra.mxu0 %v751
      %v1175 = vpop.f32.mrf.mxu0
      %v1176 = vadd.f32 0.0, %v1175
      %v1177 = vpop.f32.mrf.mxu0
      %v1178 = vpop.f32.mrf.mxu0
      %v1179 = vadd.f32 0.0, %v1178
      %v1180 = vpop.f32.mrf.mxu0
      %1181 = vmatprep.mubr.bf16.mxu0 0
      %1182 = vmatmul.mubr.bf16.gmra.mxu0 %v754
      %v1183 = vpop.f32.mrf.mxu0
      %v1184 = vadd.f32 0.0, %v1183
      %v1185 = vpop.f32.mrf.mxu0
      %v1186 = vpop.f32.mrf.mxu0
      %v1187 = vadd.f32 0.0, %v1186
      %v1188 = vpop.f32.mrf.mxu0
      %1189 = vmatprep.mubr.bf16.mxu0 0
      %1190 = vmatmul.mubr.bf16.gmra.mxu0 %v757
      %v1191 = vpop.f32.mrf.mxu0
      %v1192 = vadd.f32 0.0, %v1191
      %v1193 = vpop.f32.mrf.mxu0
      %v1194 = vpop.f32.mrf.mxu0
      %v1195 = vadd.f32 0.0, %v1194
      %v1196 = vpop.f32.mrf.mxu0
      %1197 = vmatprep.mubr.bf16.mxu0 0
      %1198 = vmatmul.mubr.bf16.gmra.mxu0 %v760
      %v1199 = vpop.f32.mrf.mxu0
      %v1200 = vadd.f32 0.0, %v1199
      %v1201 = vpop.f32.mrf.mxu0
      %v1202 = vpop.f32.mrf.mxu0
      %v1203 = vadd.f32 0.0, %v1202
      %v1204 = vpop.f32.mrf.mxu0
      %1205 = vmatprep.mubr.bf16.mxu0 0
      %1206 = vmatmul.mubr.bf16.gmra.mxu0 %v763
      %v1207 = vpop.f32.mrf.mxu0
      %v1208 = vadd.f32 0.0, %v1207
      %v1209 = vpop.f32.mrf.mxu0
      %v1210 = vpop.f32.mrf.mxu0
      %v1211 = vadd.f32 0.0, %v1210
      %v1212 = vpop.f32.mrf.mxu0
      %1213 = vmatprep.mubr.bf16.mxu0 0
      %1214 = vmatmul.mubr.bf16.gmra.mxu0 %v766
      %v1215 = vpop.f32.mrf.mxu0
      %v1216 = vadd.f32 0.0, %v1215
      %v1217 = vpop.f32.mrf.mxu0
      %v1218 = vpop.f32.mrf.mxu0
      %v1219 = vadd.f32 0.0, %v1218
      %v1220 = vpop.f32.mrf.mxu0
      %1221 = vmatprep.mubr.bf16.mxu0 0
      %1222 = vmatmul.mubr.bf16.gmra.mxu0 %v769
      %v1223 = vpop.f32.mrf.mxu0
      %v1224 = vadd.f32 0.0, %v1223
      %v1225 = vpop.f32.mrf.mxu0
      %v1226 = vpop.f32.mrf.mxu0
      %v1227 = vadd.f32 0.0, %v1226
      %v1228 = vpop.f32.mrf.mxu0
      %1229 = vmatprep.mubr.bf16.mxu0 0
      %1230 = vmatmul.mubr.bf16.gmra.mxu0 %v772
      %v1231 = vpop.f32.mrf.mxu0
      %v1232 = vadd.f32 0.0, %v1231
      %v1233 = vpop.f32.mrf.mxu0
      %v1234 = vpop.f32.mrf.mxu0
      %v1235 = vadd.f32 0.0, %v1234
      %v1236 = vpop.f32.mrf.mxu0
      %1237 = vmatprep.mubr.bf16.mxu0 0
      %1238 = vmatmul.mubr.bf16.gmra.mxu0 %v775
      %v1239 = vpop.f32.mrf.mxu0
      %v1240 = vadd.f32 0.0, %v1239
      %v1241 = vpop.f32.mrf.mxu0
      %v1242 = vpop.f32.mrf.mxu0
      %v1243 = vadd.f32 0.0, %v1242
      %v1244 = vpop.f32.mrf.mxu0
      %1245 = vmatprep.mubr.bf16.mxu0 0
      %1246 = vmatmul.mubr.bf16.gmra.mxu0 %v778
      %v1247 = vpop.f32.mrf.mxu0
      %v1248 = vadd.f32 0.0, %v1247
      %v1249 = vpop.f32.mrf.mxu0
      %v1250 = vpop.f32.mrf.mxu0
      %v1251 = vadd.f32 0.0, %v1250
      %v1252 = vpop.f32.mrf.mxu0
      %1253 = vmatprep.mubr.bf16.mxu0 0
      %1254 = vmatmul.mubr.bf16.gmra.mxu0 %v781
      %v1255 = vpop.f32.mrf.mxu0
      %v1256 = vadd.f32 0.0, %v1255
      %v1257 = vpop.f32.mrf.mxu0
      %v1258 = vpop.f32.mrf.mxu0
      %v1259 = vadd.f32 0.0, %v1258
      %v1260 = vpop.f32.mrf.mxu0
      %1261 = vmatprep.mubr.bf16.mxu0 0
      %1262 = vmatmul.mubr.bf16.gmra.mxu0 %v784
      %v1263 = vpop.f32.mrf.mxu0
      %v1264 = vadd.f32 0.0, %v1263
      %v1265 = vpop.f32.mrf.mxu0
      %v1266 = vpop.f32.mrf.mxu0
      %v1267 = vadd.f32 0.0, %v1266
      %v1268 = vpop.f32.mrf.mxu0
      %1269 = vmatprep.mubr.bf16.mxu0 0
      %1270 = vmatmul.mubr.bf16.gmra.mxu0 %v787
      %v1271 = vpop.f32.mrf.mxu0
      %v1272 = vadd.f32 0.0, %v1271
      %v1273 = vpop.f32.mrf.mxu0
      %v1274 = vpop.f32.mrf.mxu0
      %v1275 = vadd.f32 0.0, %v1274
      %v1276 = vpop.f32.mrf.mxu0
      %1277 = vmatprep.mubr.bf16.mxu0 0
      %1278 = vmatmul.mubr.bf16.gmra.mxu0 %v790
      %v1279 = vpop.f32.mrf.mxu0
      %v1280 = vadd.f32 0.0, %v1279
      %v1281 = vpop.f32.mrf.mxu0
      %v1282 = vpop.f32.mrf.mxu0
      %v1283 = vadd.f32 0.0, %v1282
      %v1284 = vpop.f32.mrf.mxu0
      %1285 = vmatprep.mubr.bf16.mxu0 0
      %1286 = vmatmul.mubr.bf16.gmra.mxu0 %v793
      %v1287 = vpop.f32.mrf.mxu0
      %v1288 = vadd.f32 0.0, %v1287
      %v1289 = vpop.f32.mrf.mxu0
      %v1290 = vpop.f32.mrf.mxu0
      %v1291 = vadd.f32 0.0, %v1290
      %v1292 = vpop.f32.mrf.mxu0
      %1293 = vmatprep.mubr.bf16.mxu0 0
      %1294 = vmatmul.mubr.bf16.gmra.mxu0 %v796
      %v1295 = vpop.f32.mrf.mxu0
      %v1296 = vadd.f32 0.0, %v1295
      %v1297 = vpop.f32.mrf.mxu0
      %v1298 = vpop.f32.mrf.mxu0
      %v1299 = vadd.f32 0.0, %v1298
      %v1300 = vpop.f32.mrf.mxu0
      %1301 = vmatprep.mubr.bf16.mxu0 0
      %1302 = vmatmul.mubr.bf16.gmra.mxu0 %v799
      %v1303 = vpop.f32.mrf.mxu0
      %v1304 = vadd.f32 0.0, %v1303
      %v1305 = vpop.f32.mrf.mxu0
      %v1306 = vpop.f32.mrf.mxu0
      %v1307 = vadd.f32 0.0, %v1306
      %v1308 = vpop.f32.mrf.mxu0
      %1309 = vmatprep.mubr.bf16.mxu0 0
      %1310 = vmatmul.mubr.bf16.gmra.mxu0 %v802
      %v1311 = vpop.f32.mrf.mxu0
      %v1312 = vadd.f32 0.0, %v1311
      %v1313 = vpop.f32.mrf.mxu0
      %v1314 = vpop.f32.mrf.mxu0
      %v1315 = vadd.f32 0.0, %v1314
      %v1316 = vpop.f32.mrf.mxu0
      %1317 = vmatprep.mubr.bf16.mxu0 0
      %1318 = vmatmul.mubr.bf16.gmra.mxu0 %v805
      %v1319 = vpop.f32.mrf.mxu0
      %v1320 = vadd.f32 0.0, %v1319
      %v1321 = vpop.f32.mrf.mxu0
      %v1322 = vpop.f32.mrf.mxu0
      %v1323 = vadd.f32 0.0, %v1322
      %v1324 = vpop.f32.mrf.mxu0
      %1325 = vmatprep.mubr.bf16.mxu0 0
      %1326 = vmatmul.mubr.bf16.gmra.mxu0 %v808
      %v1327 = vpop.f32.mrf.mxu0
      %v1328 = vadd.f32 0.0, %v1327
      %v1329 = vpop.f32.mrf.mxu0
      %v1330 = vpop.f32.mrf.mxu0
      %v1331 = vadd.f32 0.0, %v1330
      %v1332 = vpop.f32.mrf.mxu0
      %1333 = vmatprep.mubr.bf16.mxu0 0
      %1334 = vmatmul.mubr.bf16.gmra.mxu0 %v811
      %v1335 = vpop.f32.mrf.mxu0
      %v1336 = vadd.f32 0.0, %v1335
      %v1337 = vpop.f32.mrf.mxu0
      %v1338 = vpop.f32.mrf.mxu0
      %v1339 = vadd.f32 0.0, %v1338
      %v1340 = vpop.f32.mrf.mxu0
      %1341 = vmatprep.mubr.bf16.mxu0 0
      %1342 = vmatmul.mubr.bf16.gmra.mxu0 %v814
      %v1343 = vpop.f32.mrf.mxu0
      %v1344 = vadd.f32 0.0, %v1343
      %v1345 = vpop.f32.mrf.mxu0
      %v1346 = vpop.f32.mrf.mxu0
      %v1347 = vadd.f32 0.0, %v1346
      %v1348 = vpop.f32.mrf.mxu0
      %1349 = vmatprep.mubr.bf16.mxu0 0
      %1350 = vmatmul.mubr.bf16.gmra.mxu0 %v817
      %v1351 = vpop.f32.mrf.mxu0
      %v1352 = vadd.f32 0.0, %v1351
      %v1353 = vpop.f32.mrf.mxu0
      %v1354 = vpop.f32.mrf.mxu0
      %v1355 = vadd.f32 0.0, %v1354
      %v1356 = vpop.f32.mrf.mxu0
      %1357 = vmatprep.mubr.bf16.mxu0 0
      %1358 = vmatmul.mubr.bf16.gmra.mxu0 %v820
      %v1359 = vpop.f32.mrf.mxu0
      %v1360 = vadd.f32 0.0, %v1359
      %v1361 = vpop.f32.mrf.mxu0
      %v1362 = vpop.f32.mrf.mxu0
      %v1363 = vadd.f32 0.0, %v1362
      %v1364 = vpop.f32.mrf.mxu0
      %1365 = vmatprep.mubr.bf16.mxu0 0
      %1366 = vmatmul.mubr.bf16.gmra.mxu0 %v823
      %v1367 = vpop.f32.mrf.mxu0
      %v1368 = vadd.f32 0.0, %v1367
      %v1369 = vpop.f32.mrf.mxu0
      %v1370 = vpop.f32.mrf.mxu0
      %v1371 = vadd.f32 0.0, %v1370
      %v1372 = vpop.f32.mrf.mxu0
      %1373 = vdwg.mxu0
      %v1374 = vtanh.pop %v864
      %v1375 = vtanh.pop %v867
      %v1376 = vtanh.pop %v872
      %v1377 = vtanh.pop %v875
      %v1378 = vtanh.pop %v880
      %v1379 = vtanh.pop %v883
      %v1380 = vtanh.pop %v888
      %v1381 = vtanh.pop %v891
      %v1382 = vtanh.pop %v896
      %v1383 = vtanh.pop %v899
      %v1384 = vtanh.pop %v904
      %v1385 = vtanh.pop %v907
      %v1386 = vtanh.pop %v912
      %v1387 = vtanh.pop %v915
      %v1388 = vtanh.pop %v920
      %v1389 = vtanh.pop %v923
      %v1390 = vtanh.pop %v928
      %v1391 = vtanh.pop %v931
      %v1392 = vtanh.pop %v936
      %v1393 = vtanh.pop %v939
      %v1394 = vtanh.pop %v944
      %v1395 = vtanh.pop %v947
      %v1396 = vtanh.pop %v952
      %v1397 = vtanh.pop %v955
      %v1398 = vtanh.pop %v960
      %v1399 = vtanh.pop %v963
      %v1400 = vtanh.pop %v968
      %v1401 = vtanh.pop %v971
      %v1402 = vtanh.pop %v976
      %v1403 = vtanh.pop %v979
      %v1404 = vtanh.pop %v984
      %v1405 = vtanh.pop %v987
      %v1406 = vtanh.pop %v992
      %v1407 = vtanh.pop %v995
      %v1408 = vtanh.pop %v1000
      %v1409 = vtanh.pop %v1003
      %v1410 = vtanh.pop %v1008
      %v1411 = vtanh.pop %v1011
      %v1412 = vtanh.pop %v1016
      %v1413 = vtanh.pop %v1019
      %v1414 = vtanh.pop %v1024
      %v1415 = vtanh.pop %v1027
      %v1416 = vtanh.pop %v1032
      %v1417 = vtanh.pop %v1035
      %v1418 = vtanh.pop %v1040
      %v1419 = vtanh.pop %v1043
      %v1420 = vtanh.pop %v1048
      %v1421 = vtanh.pop %v1051
      %v1422 = vtanh.pop %v1056
      %v1423 = vtanh.pop %v1059
      %v1424 = vtanh.pop %v1064
      %v1425 = vtanh.pop %v1067
      %v1426 = vtanh.pop %v1072
      %v1427 = vtanh.pop %v1075
      %v1428 = vtanh.pop %v1080
      %v1429 = vtanh.pop %v1083
      %v1430 = vtanh.pop %v1088
      %v1431 = vtanh.pop %v1091
      %v1432 = vtanh.pop %v1096
      %v1433 = vtanh.pop %v1099
      %v1434 = vtanh.pop %v1104
      %v1435 = vtanh.pop %v1107
      %v1436 = vtanh.pop %v1112
      %v1437 = vtanh.pop %v1115
      %v1438 = vtanh.pop %v1120
      %v1439 = vtanh.pop %v1123
      %v1440 = vtanh.pop %v1128
      %v1441 = vtanh.pop %v1131
      %v1442 = vtanh.pop %v1136
      %v1443 = vtanh.pop %v1139
      %v1444 = vtanh.pop %v1144
      %v1445 = vtanh.pop %v1147
      %v1446 = vtanh.pop %v1152
      %v1447 = vtanh.pop %v1155
      %v1448 = vtanh.pop %v1160
      %v1449 = vtanh.pop %v1163
      %v1450 = vtanh.pop %v1168
      %v1451 = vtanh.pop %v1171
      %v1452 = vtanh.pop %v1176
      %v1453 = vtanh.pop %v1179
      %v1454 = vtanh.pop %v1184
      %v1455 = vtanh.pop %v1187
      %v1456 = vtanh.pop %v1192
      %v1457 = vtanh.pop %v1195
      %v1458 = vtanh.pop %v1200
      %v1459 = vtanh.pop %v1203
      %v1460 = vtanh.pop %v1208
      %v1461 = vtanh.pop %v1211
      %v1462 = vtanh.pop %v1216
      %v1463 = vtanh.pop %v1219
      %v1464 = vtanh.pop %v1224
      %v1465 = vtanh.pop %v1227
      %v1466 = vtanh.pop %v1232
      %v1467 = vtanh.pop %v1235
      %v1468 = vtanh.pop %v1240
      %v1469 = vtanh.pop %v1243
      %v1470 = vtanh.pop %v1248
      %v1471 = vtanh.pop %v1251
      %v1472 = vtanh.pop %v1256
      %v1473 = vtanh.pop %v1259
      %v1474 = vtanh.pop %v1264
      %v1475 = vtanh.pop %v1267
      %v1476 = vtanh.pop %v1272
      %v1477 = vtanh.pop %v1275
      %v1478 = vtanh.pop %v1280
      %v1479 = vtanh.pop %v1283
      %v1480 = vtanh.pop %v1288
      %v1481 = vtanh.pop %v1291
      %v1482 = vtanh.pop %v1296
      %v1483 = vtanh.pop %v1299
      %v1484 = vtanh.pop %v1304
      %v1485 = vtanh.pop %v1307
      %v1486 = vtanh.pop %v1312
      %v1487 = vtanh.pop %v1315
      %v1488 = vtanh.pop %v1320
      %v1489 = vtanh.pop %v1323
      %v1490 = vtanh.pop %v1328
      %v1491 = vtanh.pop %v1331
      %v1492 = vtanh.pop %v1336
      %v1493 = vtanh.pop %v1339
      %v1494 = vtanh.pop %v1344
      %v1495 = vtanh.pop %v1347
      %v1496 = vtanh.pop %v1352
      %v1497 = vtanh.pop %v1355
      %v1498 = vtanh.pop %v1360
      %v1499 = vtanh.pop %v1363
      %v1500 = vtanh.pop %v1368
      %v1501 = vtanh.pop %v1371
      %vm1502 = vcmask 97280
      %1503 = vst.msk [vmem:[%s145] sm:$0xff] %vm1502, %v1374
      %1504 = vst.msk [vmem:[%s145 + $0x8] sm:$0xff] %vm1502, %v1375
      %1505 = vst.msk [vmem:[%s145 + $0x10] sm:$0xff] %vm1502, %v1376
      %1506 = vst.msk [vmem:[%s145 + $0x18] sm:$0xff] %vm1502, %v1377
      %1507 = vst.msk [vmem:[%s145 + $0x20] sm:$0xff] %vm1502, %v1378
      %1508 = vst.msk [vmem:[%s145 + $0x28] sm:$0xff] %vm1502, %v1379
      %1509 = vst.msk [vmem:[%s145 + $0x30] sm:$0xff] %vm1502, %v1380
      %1510 = vst.msk [vmem:[%s145 + $0x38] sm:$0xff] %vm1502, %v1381
      %1511 = vst.msk [vmem:[%s145 + $0x40] sm:$0xff] %vm1502, %v1382
      %1512 = vst.msk [vmem:[%s145 + $0x48] sm:$0xff] %vm1502, %v1383
      %1513 = vst.msk [vmem:[%s145 + $0x50] sm:$0xff] %vm1502, %v1384
      %1514 = vst.msk [vmem:[%s145 + $0x58] sm:$0xff] %vm1502, %v1385
      %1515 = vst.msk [vmem:[%s145 + $0x60] sm:$0xff] %vm1502, %v1386
      %1516 = vst.msk [vmem:[%s145 + $0x68] sm:$0xff] %vm1502, %v1387
      %1517 = vst.msk [vmem:[%s145 + $0x70] sm:$0xff] %vm1502, %v1388
      %1518 = vst.msk [vmem:[%s145 + $0x78] sm:$0xff] %vm1502, %v1389
      %1519 = vst.msk [vmem:[%s145 + $0x80] sm:$0xff] %vm1502, %v1390
      %1520 = vst.msk [vmem:[%s145 + $0x88] sm:$0xff] %vm1502, %v1391
      %1521 = vst.msk [vmem:[%s145 + $0x90] sm:$0xff] %vm1502, %v1392
      %1522 = vst.msk [vmem:[%s145 + $0x98] sm:$0xff] %vm1502, %v1393
      %1523 = vst.msk [vmem:[%s145 + $0xa0] sm:$0xff] %vm1502, %v1394
      %1524 = vst.msk [vmem:[%s145 + $0xa8] sm:$0xff] %vm1502, %v1395
      %1525 = vst.msk [vmem:[%s145 + $0xb0] sm:$0xff] %vm1502, %v1396
      %1526 = vst.msk [vmem:[%s145 + $0xb8] sm:$0xff] %vm1502, %v1397
      %1527 = vst.msk [vmem:[%s145 + $0xc0] sm:$0xff] %vm1502, %v1398
      %1528 = vst.msk [vmem:[%s145 + $0xc8] sm:$0xff] %vm1502, %v1399
      %1529 = vst.msk [vmem:[%s145 + $0xd0] sm:$0xff] %vm1502, %v1400
      %1530 = vst.msk [vmem:[%s145 + $0xd8] sm:$0xff] %vm1502, %v1401
      %1531 = vst.msk [vmem:[%s145 + $0xe0] sm:$0xff] %vm1502, %v1402
      %1532 = vst.msk [vmem:[%s145 + $0xe8] sm:$0xff] %vm1502, %v1403
      %1533 = vst.msk [vmem:[%s145 + $0xf0] sm:$0xff] %vm1502, %v1404
      %1534 = vst.msk [vmem:[%s145 + $0xf8] sm:$0xff] %vm1502, %v1405
      %1535 = vst.msk [vmem:[%s145 + $0x100] sm:$0xff] %vm1502, %v1406
      %1536 = vst.msk [vmem:[%s145 + $0x108] sm:$0xff] %vm1502, %v1407
      %1537 = vst.msk [vmem:[%s145 + $0x110] sm:$0xff] %vm1502, %v1408
      %1538 = vst.msk [vmem:[%s145 + $0x118] sm:$0xff] %vm1502, %v1409
      %1539 = vst.msk [vmem:[%s145 + $0x120] sm:$0xff] %vm1502, %v1410
      %1540 = vst.msk [vmem:[%s145 + $0x128] sm:$0xff] %vm1502, %v1411
      %1541 = vst.msk [vmem:[%s145 + $0x130] sm:$0xff] %vm1502, %v1412
      %1542 = vst.msk [vmem:[%s145 + $0x138] sm:$0xff] %vm1502, %v1413
      %1543 = vst.msk [vmem:[%s145 + $0x140] sm:$0xff] %vm1502, %v1414
      %1544 = vst.msk [vmem:[%s145 + $0x148] sm:$0xff] %vm1502, %v1415
      %1545 = vst.msk [vmem:[%s145 + $0x150] sm:$0xff] %vm1502, %v1416
      %1546 = vst.msk [vmem:[%s145 + $0x158] sm:$0xff] %vm1502, %v1417
      %1547 = vst.msk [vmem:[%s145 + $0x160] sm:$0xff] %vm1502, %v1418
      %1548 = vst.msk [vmem:[%s145 + $0x168] sm:$0xff] %vm1502, %v1419
      %1549 = vst.msk [vmem:[%s145 + $0x170] sm:$0xff] %vm1502, %v1420
      %1550 = vst.msk [vmem:[%s145 + $0x178] sm:$0xff] %vm1502, %v1421
      %1551 = vst.msk [vmem:[%s145 + $0x180] sm:$0xff] %vm1502, %v1422
      %1552 = vst.msk [vmem:[%s145 + $0x188] sm:$0xff] %vm1502, %v1423
      %1553 = vst.msk [vmem:[%s145 + $0x190] sm:$0xff] %vm1502, %v1424
      %1554 = vst.msk [vmem:[%s145 + $0x198] sm:$0xff] %vm1502, %v1425
      %1555 = vst.msk [vmem:[%s145 + $0x1a0] sm:$0xff] %vm1502, %v1426
      %1556 = vst.msk [vmem:[%s145 + $0x1a8] sm:$0xff] %vm1502, %v1427
      %1557 = vst.msk [vmem:[%s145 + $0x1b0] sm:$0xff] %vm1502, %v1428
      %1558 = vst.msk [vmem:[%s145 + $0x1b8] sm:$0xff] %vm1502, %v1429
      %1559 = vst.msk [vmem:[%s145 + $0x1c0] sm:$0xff] %vm1502, %v1430
      %1560 = vst.msk [vmem:[%s145 + $0x1c8] sm:$0xff] %vm1502, %v1431
      %1561 = vst.msk [vmem:[%s145 + $0x1d0] sm:$0xff] %vm1502, %v1432
      %1562 = vst.msk [vmem:[%s145 + $0x1d8] sm:$0xff] %vm1502, %v1433
      %1563 = vst.msk [vmem:[%s145 + $0x1e0] sm:$0xff] %vm1502, %v1434
      %1564 = vst.msk [vmem:[%s145 + $0x1e8] sm:$0xff] %vm1502, %v1435
      %1565 = vst.msk [vmem:[%s145 + $0x1f0] sm:$0xff] %vm1502, %v1436
      %1566 = vst.msk [vmem:[%s145 + $0x1f8] sm:$0xff] %vm1502, %v1437
      %1567 = vst.msk [vmem:[%s145 + $0x200] sm:$0xff] %vm1502, %v1438
      %1568 = vst.msk [vmem:[%s145 + $0x208] sm:$0xff] %vm1502, %v1439
      %1569 = vst.msk [vmem:[%s145 + $0x210] sm:$0xff] %vm1502, %v1440
      %1570 = vst.msk [vmem:[%s145 + $0x218] sm:$0xff] %vm1502, %v1441
      %1571 = vst.msk [vmem:[%s145 + $0x220] sm:$0xff] %vm1502, %v1442
      %1572 = vst.msk [vmem:[%s145 + $0x228] sm:$0xff] %vm1502, %v1443
      %1573 = vst.msk [vmem:[%s145 + $0x230] sm:$0xff] %vm1502, %v1444
      %1574 = vst.msk [vmem:[%s145 + $0x238] sm:$0xff] %vm1502, %v1445
      %1575 = vst.msk [vmem:[%s145 + $0x240] sm:$0xff] %vm1502, %v1446
      %1576 = vst.msk [vmem:[%s145 + $0x248] sm:$0xff] %vm1502, %v1447
      %1577 = vst.msk [vmem:[%s145 + $0x250] sm:$0xff] %vm1502, %v1448
      %1578 = vst.msk [vmem:[%s145 + $0x258] sm:$0xff] %vm1502, %v1449
      %1579 = vst.msk [vmem:[%s145 + $0x260] sm:$0xff] %vm1502, %v1450
      %1580 = vst.msk [vmem:[%s145 + $0x268] sm:$0xff] %vm1502, %v1451
      %1581 = vst.msk [vmem:[%s145 + $0x270] sm:$0xff] %vm1502, %v1452
      %1582 = vst.msk [vmem:[%s145 + $0x278] sm:$0xff] %vm1502, %v1453
      %1583 = vst.msk [vmem:[%s145 + $0x280] sm:$0xff] %vm1502, %v1454
      %1584 = vst.msk [vmem:[%s145 + $0x288] sm:$0xff] %vm1502, %v1455
      %1585 = vst.msk [vmem:[%s145 + $0x290] sm:$0xff] %vm1502, %v1456
      %1586 = vst.msk [vmem:[%s145 + $0x298] sm:$0xff] %vm1502, %v1457
      %1587 = vst.msk [vmem:[%s145 + $0x2a0] sm:$0xff] %vm1502, %v1458
      %1588 = vst.msk [vmem:[%s145 + $0x2a8] sm:$0xff] %vm1502, %v1459
      %1589 = vst.msk [vmem:[%s145 + $0x2b0] sm:$0xff] %vm1502, %v1460
      %1590 = vst.msk [vmem:[%s145 + $0x2b8] sm:$0xff] %vm1502, %v1461
      %1591 = vst.msk [vmem:[%s145 + $0x2c0] sm:$0xff] %vm1502, %v1462
      %1592 = vst.msk [vmem:[%s145 + $0x2c8] sm:$0xff] %vm1502, %v1463
      %1593 = vst.msk [vmem:[%s145 + $0x2d0] sm:$0xff] %vm1502, %v1464
      %1594 = vst.msk [vmem:[%s145 + $0x2d8] sm:$0xff] %vm1502, %v1465
      %1595 = vst.msk [vmem:[%s145 + $0x2e0] sm:$0xff] %vm1502, %v1466
      %1596 = vst.msk [vmem:[%s145 + $0x2e8] sm:$0xff] %vm1502, %v1467
      %1597 = vst.msk [vmem:[%s145 + $0x2f0] sm:$0xff] %vm1502, %v1468
      %1598 = vst.msk [vmem:[%s145 + $0x2f8] sm:$0xff] %vm1502, %v1469
      %1599 = vst.msk [vmem:[%s145 + $0x300] sm:$0xff] %vm1502, %v1470
      %1600 = vst.msk [vmem:[%s145 + $0x308] sm:$0xff] %vm1502, %v1471
      %1601 = vst.msk [vmem:[%s145 + $0x310] sm:$0xff] %vm1502, %v1472
      %1602 = vst.msk [vmem:[%s145 + $0x318] sm:$0xff] %vm1502, %v1473
      %1603 = vst.msk [vmem:[%s145 + $0x320] sm:$0xff] %vm1502, %v1474
      %1604 = vst.msk [vmem:[%s145 + $0x328] sm:$0xff] %vm1502, %v1475
      %1605 = vst.msk [vmem:[%s145 + $0x330] sm:$0xff] %vm1502, %v1476
      %1606 = vst.msk [vmem:[%s145 + $0x338] sm:$0xff] %vm1502, %v1477
      %1607 = vst.msk [vmem:[%s145 + $0x340] sm:$0xff] %vm1502, %v1478
      %1608 = vst.msk [vmem:[%s145 + $0x348] sm:$0xff] %vm1502, %v1479
      %1609 = vst.msk [vmem:[%s145 + $0x350] sm:$0xff] %vm1502, %v1480
      %1610 = vst.msk [vmem:[%s145 + $0x358] sm:$0xff] %vm1502, %v1481
      %1611 = vst.msk [vmem:[%s145 + $0x360] sm:$0xff] %vm1502, %v1482
      %1612 = vst.msk [vmem:[%s145 + $0x368] sm:$0xff] %vm1502, %v1483
      %1613 = vst.msk [vmem:[%s145 + $0x370] sm:$0xff] %vm1502, %v1484
      %1614 = vst.msk [vmem:[%s145 + $0x378] sm:$0xff] %vm1502, %v1485
      %1615 = vst.msk [vmem:[%s145 + $0x380] sm:$0xff] %vm1502, %v1486
      %1616 = vst.msk [vmem:[%s145 + $0x388] sm:$0xff] %vm1502, %v1487
      %1617 = vst.msk [vmem:[%s145 + $0x390] sm:$0xff] %vm1502, %v1488
      %1618 = vst.msk [vmem:[%s145 + $0x398] sm:$0xff] %vm1502, %v1489
      %1619 = vst.msk [vmem:[%s145 + $0x3a0] sm:$0xff] %vm1502, %v1490
      %1620 = vst.msk [vmem:[%s145 + $0x3a8] sm:$0xff] %vm1502, %v1491
      %1621 = vst.msk [vmem:[%s145 + $0x3b0] sm:$0xff] %vm1502, %v1492
      %1622 = vst.msk [vmem:[%s145 + $0x3b8] sm:$0xff] %vm1502, %v1493
      %1623 = vst.msk [vmem:[%s145 + $0x3c0] sm:$0xff] %vm1502, %v1494
      %1624 = vst.msk [vmem:[%s145 + $0x3c8] sm:$0xff] %vm1502, %v1495
      %1625 = vst.msk [vmem:[%s145 + $0x3d0] sm:$0xff] %vm1502, %v1496
      %1626 = vst.msk [vmem:[%s145 + $0x3d8] sm:$0xff] %vm1502, %v1497
      %1627 = vst.msk [vmem:[%s145 + $0x3e0] sm:$0xff] %vm1502, %v1498
      %1628 = vst.msk [vmem:[%s145 + $0x3e8] sm:$0xff] %vm1502, %v1499
      %1629 = vst.msk [vmem:[%s145 + $0x3f0] sm:$0xff] %vm1502, %v1500
      %1630 = vst.msk [vmem:[%s145 + $0x3f8] sm:$0xff] %vm1502, %v1501
      %s1631 = smul.u32 128, %s13
      %p1632 = scmp.lt.s32.totalorder %s1631, 255
      %s1633 = scalar_select %p1632, %s1631, 255
      %s1634 = smul.addr %s1633, 8
      %s1635 = scalar_lea.vmem %s2, %s1634
      // Predicated region
      $region29: #{generator_forward.17} parent=27 // pred_check
        %p1636 = pneg %p78
      $region30: #{generator_forward.17} parent=27 // pred_check_branch
        %1638 = sbr.rel (%p1636) target = $region32
      $region31: #{generator_forward.17} parent=27 // pred_region
        %s1639 = smul.u32 128, %s13
      $region32: #{generator_forward.17} parent=27 // pred_fallthru
        _
    $region28: #{generator_forward.17} parent=5 // pred_fallthru
      _
    %p1640 = scmp.le.s32.totalorder 2, %s8
    // Predicated region
    $region33: #{generator_forward.17} parent=5 // pred_check
      %p1641 = pneg %p1640
    $region34: #{generator_forward.17} parent=5 // pred_check_branch
      %1643 = sbr.rel (%p1641) target = $region36
    $region35: #{generator_forward.17} parent=5 // pred_region
      %s1644 = ssub.s32 %s8, 2
      // Predicated region
      $region37: #{generator_forward.17} parent=35 // pred_check
        %p1645 = pneg %p84
      $region38: #{generator_forward.17} parent=35 // pred_check_branch
        %1647 = sbr.rel (%p1645) target = $region40
      $region39: #{generator_forward.17} parent=35 // pred_region
        %s1648 = smul.u32 128, %s14
        %p1649 = scmp.lt.s32.totalorder %s1648, 255
        %s1650 = scalar_select %p1649, %s1648, 255
        %s1651 = smul.addr %s1650, 8
        %s1652 = scalar_lea.vmem %s2, %s1651
      $region40: #{generator_forward.17} parent=35 // pred_fallthru
        _
    $region36: #{generator_forward.17} parent=5 // pred_fallthru
      _
  $region6: #{generator_forward.17} parent=0 // loop_footer
    %s12 = sadd.s32 1, %s8
  $region7: #{generator_forward.17} parent=0 // loop_footer_branch
    %7 = sbr.rel target = $region3
  $region8: #{generator_forward.17} parent=0 // loop_exit
    _

</llo_original>
